<compile_context>
chip_gen: v6e
topology: v6e:2x2x1
jax: 0.10.0
libtpu: 0.0.40
codegen_flags: <defaults>
</compile_context>

<pallas_src>
import jax
import jax.numpy as jnp
from jax.experimental import pallas as pl
from jax.experimental.pallas import tpu as pltpu

# ---------------- problem sizes (small, consistent with the module) -----------
B = 2          # batch
N = 8          # decoder sequence length
M = 8          # memory sequence length
DIM = 32       # decoder embedding dim
ENC_DIM = 16   # encoder embedding dim
HEADS = 4
HD = DIM // HEADS
SCALE = HD ** -0.5
EPS = 1e-5                       # nn.LayerNorm default
INV_SQRT2 = 0.7071067811865476


def _layer_norm(x, g, b):
    mu = jnp.mean(x, axis=-1, keepdims=True)
    var = jnp.mean((x - mu) ** 2, axis=-1, keepdims=True)
    return (x - mu) * jax.lax.rsqrt(var + EPS) * g + b


# ----------------------------- fused kernel ------------------------------------
def _fused_kernel(x_ref, mem_ref, g1_ref, b1_ref, wqkv_ref, wproj_ref, bproj_ref,
                  wp_ref, bp_ref, g3_ref, b3_ref, w1_ref, b1m_ref, w2_ref, b2m_ref,
                  xmask_ref, attn_ref):
    x = x_ref[...]                                              # (B*N, DIM)

    # ---- stage 1: pre-LN multi-head self-attention + residual ----
    xn = _layer_norm(x, g1_ref[...], b1_ref[...])
    # wqkv has the attention scale pre-folded into its q columns (see init_params),
    # so s = q_scaled @ k^T equals (q * scale) @ k^T of the reference module.
    qkv = jnp.dot(xn, wqkv_ref[...], preferred_element_type=jnp.float32)   # (B*N, 3*DIM)

    attn_rows = []   # per batch: (N, HEADS*N)
    out_rows = []    # per batch: (N, DIM)
    for b in range(B):
        r0 = b * N
        score_cols = []
        out_cols = []
        for h in range(HEADS):
            qh = qkv[r0:r0 + N, h * HD:(h + 1) * HD]
            kh = qkv[r0:r0 + N, DIM + h * HD:DIM + (h + 1) * HD]
            vh = qkv[r0:r0 + N, 2 * DIM + h * HD:2 * DIM + (h + 1) * HD]
            s = jax.lax.dot_general(qh, kh, (((1,), (1,)), ((), ())),
                                    preferred_element_type=jnp.float32)    # (N, N)
            score_cols.append(s)
            mx = jnp.max(s, axis=-1, keepdims=True)
            e = jnp.exp(s - mx)
            inv = pl.reciprocal(jnp.sum(e, axis=-1, keepdims=True), approx=True)
            p = e * inv
            out_cols.append(jnp.dot(p, vh, preferred_element_type=jnp.float32))
        attn_rows.append(jnp.concatenate(score_cols, axis=-1))             # (N, HEADS*N)
        out_rows.append(jnp.concatenate(out_cols, axis=-1))                # (N, DIM)

    attn_ref[...] = jnp.concatenate(attn_rows, axis=0)                     # (B*N, HEADS*N)
    o = jnp.concatenate(out_rows, axis=0)                                  # (B*N, DIM)
    y = jnp.dot(o, wproj_ref[...], preferred_element_type=jnp.float32) + bproj_ref[...]
    h_tok = x + y                                                          # (B*N, DIM)

    # ---- stage 2: proj(memory) + broadcast-add expansion + LN3 + MLP ----
    pm = jnp.dot(mem_ref[...], wp_ref[...],
                 preferred_element_type=jnp.float32) + bp_ref[...]         # (B*M, DIM)

    # Rows ordered (m, b, n): xm[m*(B*N) + b*N + n, :] = h_tok[b*N+n] + pm[b*M+m]
    pm_rows = []
    for m in range(M):
        for b in range(B):
            pm_rows.append(jnp.broadcast_to(pm[b * M + m:b * M + m + 1, :], (N, DIM)))
    pm_full = jnp.concatenate(pm_rows, axis=0)                             # (M*B*N, DIM)
    h_full = jnp.concatenate([h_tok] * M, axis=0)                          # (M*B*N, DIM)
    xm = h_full + pm_full

    xn3 = _layer_norm(xm, g3_ref[...], b3_ref[...])
    t = jnp.dot(xn3, w1_ref[...], preferred_element_type=jnp.float32) + b1m_ref[...]
    t = 0.5 * t * (1.0 + jax.lax.erf(t * INV_SQRT2))                       # exact GELU
    ym = jnp.dot(t, w2_ref[...], preferred_element_type=jnp.float32) + b2m_ref[...]

    # Lane-dense output slab: column block m holds rows m*(B*N):(m+1)*(B*N) of ym.
    xmask_ref[...] = jnp.concatenate(
        [ym[m * (B * N):(m + 1) * (B * N), :] for m in range(M)], axis=-1)  # (B*N, M*DIM)


# ------------------------------- wrapper ----------------------------------------
def _full_spec(shape):
    return pl.BlockSpec(shape, lambda i, _s=shape: (0,) * len(_s))


def _fused_call(x2, mem2, p):
    return pl.pallas_call(
        _fused_kernel,
        out_shape=(jax.ShapeDtypeStruct((B * N, M * DIM), jnp.float32),
                   jax.ShapeDtypeStruct((B * N, HEADS * N), jnp.float32)),
        grid=(1,),
        in_specs=[
            _full_spec((B * N, DIM)),          # x (tokens)
            _full_spec((B * M, ENC_DIM)),      # memory
            _full_spec((1, DIM)), _full_spec((1, DIM)),        # g1, b1
            _full_spec((DIM, 3 * DIM)),                        # wqkv (q cols pre-scaled)
            _full_spec((DIM, DIM)), _full_spec((1, DIM)),      # wproj, bproj
            _full_spec((ENC_DIM, DIM)), _full_spec((1, DIM)),  # wp, bp
            _full_spec((1, DIM)), _full_spec((1, DIM)),        # g3, b3
            _full_spec((DIM, DIM)), _full_spec((1, DIM)),      # w1, b1m
            _full_spec((DIM, DIM)), _full_spec((1, DIM)),      # w2, b2m
        ],
        out_specs=(_full_spec((B * N, M * DIM)),
                   _full_spec((B * N, HEADS * N))),
        compiler_params=pltpu.CompilerParams(dimension_semantics=("arbitrary",)),
    )(x2, mem2, p["g1"], p["b1"], p["wqkv"], p["wproj"], p["bproj"],
      p["wp"], p["bp"], p["g3"], p["b3"], p["w1"], p["b1m"], p["w2"], p["b2m"])


def decoder_block_with_expansion(x, memory, params):
    """Full forward: returns (x_mask (B,N,M,DIM), attn_wo_softmax (B,HEADS,N,N))."""
    x2 = x.reshape(B * N, DIM)
    mem2 = memory.reshape(B * M, ENC_DIM)
    xmask_flat, attn_flat = _fused_call(x2, mem2, params)
    x_mask = xmask_flat.reshape(B, N, M, DIM)
    attn = attn_flat.reshape(B, N, HEADS, N).transpose(0, 2, 1, 3)
    return x_mask, attn


# ------------------------------ parameter init ----------------------------------
def init_params(key):
    ks = jax.random.split(key, 12)
    sc = 0.02
    # Attention weights are stored as (in, out). The per-head scale (HD**-0.5) is folded
    # into the q columns of wqkv at init time (mathematically identical to multiplying q
    # by `scale` in the forward pass, and the returned attn scores keep the scale, as in
    # the reference module).
    wqkv = sc * jax.random.normal(ks[2], (DIM, 3 * DIM), jnp.float32)
    wqkv = wqkv.at[:, :DIM].multiply(SCALE)
    return {
        # norm1
        "g1": 1.0 + sc * jax.random.normal(ks[0], (1, DIM), jnp.float32),
        "b1": sc * jax.random.normal(ks[1], (1, DIM), jnp.float32),
        # attention (qkv_bias=False)
        "wqkv": wqkv,
        "wproj": sc * jax.random.normal(ks[3], (DIM, DIM), jnp.float32),
        "bproj": sc * jax.random.normal(ks[4], (1, DIM), jnp.float32),
        # proj: enc_dim -> dim
        "wp": sc * jax.random.normal(ks[5], (ENC_DIM, DIM), jnp.float32),
        "bp": sc * jax.random.normal(ks[6], (1, DIM), jnp.float32),
        # norm3
        "g3": 1.0 + sc * jax.random.normal(ks[7], (1, DIM), jnp.float32),
        "b3": sc * jax.random.normal(ks[8], (1, DIM), jnp.float32),
        # mlp (hidden_features = dim)
        "w1": sc * jax.random.normal(ks[9], (DIM, DIM), jnp.float32),
        "b1m": sc * jax.random.normal(ks[10], (1, DIM), jnp.float32),
        "w2": sc * jax.random.normal(ks[11], (DIM, DIM), jnp.float32),
        "b2m": jnp.zeros((1, DIM), jnp.float32),
    }


if __name__ == "__main__":
    key = jax.random.PRNGKey(0)
    kx, km, kp = jax.random.split(key, 3)
    x = jax.random.normal(kx, (B, N, DIM), jnp.float32)
    memory = jax.random.normal(km, (B, M, ENC_DIM), jnp.float32)
    params = init_params(kp)

    x_mask, attn = jax.jit(decoder_block_with_expansion)(x, memory, params)
    jax.block_until_ready((x_mask, attn))

    assert x_mask.shape == (B, N, M, DIM)
    assert attn.shape == (B, HEADS, N, N)
    print("KERNEL_OK")
</pallas_src>

<mosaic_0001>
module attributes {stable_mosaic.version = 11 : i64} {
  func.func @_fused_kernel(%arg0: i32, %arg1: memref<16x32xf32, #tpu.memory_space<vmem>>, %arg2: memref<16x16xf32, #tpu.memory_space<vmem>>, %arg3: memref<1x32xf32, #tpu.memory_space<vmem>>, %arg4: memref<1x32xf32, #tpu.memory_space<vmem>>, %arg5: memref<32x96xf32, #tpu.memory_space<vmem>>, %arg6: memref<32x32xf32, #tpu.memory_space<vmem>>, %arg7: memref<1x32xf32, #tpu.memory_space<vmem>>, %arg8: memref<16x32xf32, #tpu.memory_space<vmem>>, %arg9: memref<1x32xf32, #tpu.memory_space<vmem>>, %arg10: memref<1x32xf32, #tpu.memory_space<vmem>>, %arg11: memref<1x32xf32, #tpu.memory_space<vmem>>, %arg12: memref<32x32xf32, #tpu.memory_space<vmem>>, %arg13: memref<1x32xf32, #tpu.memory_space<vmem>>, %arg14: memref<32x32xf32, #tpu.memory_space<vmem>>, %arg15: memref<1x32xf32, #tpu.memory_space<vmem>>, %arg16: memref<16x256xf32, #tpu.memory_space<vmem>>, %arg17: memref<16x32xf32, #tpu.memory_space<vmem>>) attributes {dimension_semantics = [#tpu.dimension_semantics<arbitrary>], iteration_bounds = array<i64: 1>, scalar_prefetch = 0 : i64, scratch_operands = 0 : i64, tpu.core_type = #tpu.core_type<tc>, window_params = [{pipeline_mode = #tpu.pipeline_mode<synchronous>, transform_indices = @transform_0, window_bounds = array<i64: 16, 32>}, {pipeline_mode = #tpu.pipeline_mode<synchronous>, transform_indices = @transform_1, window_bounds = array<i64: 16, 16>}, {pipeline_mode = #tpu.pipeline_mode<synchronous>, transform_indices = @transform_2, window_bounds = array<i64: 1, 32>}, {pipeline_mode = #tpu.pipeline_mode<synchronous>, transform_indices = @transform_3, window_bounds = array<i64: 1, 32>}, {pipeline_mode = #tpu.pipeline_mode<synchronous>, transform_indices = @transform_4, window_bounds = array<i64: 32, 96>}, {pipeline_mode = #tpu.pipeline_mode<synchronous>, transform_indices = @transform_5, window_bounds = array<i64: 32, 32>}, {pipeline_mode = #tpu.pipeline_mode<synchronous>, transform_indices = @transform_6, window_bounds = array<i64: 1, 32>}, {pipeline_mode = #tpu.pipeline_mode<synchronous>, transform_indices = @transform_7, window_bounds = array<i64: 16, 32>}, {pipeline_mode = #tpu.pipeline_mode<synchronous>, transform_indices = @transform_8, window_bounds = array<i64: 1, 32>}, {pipeline_mode = #tpu.pipeline_mode<synchronous>, transform_indices = @transform_9, window_bounds = array<i64: 1, 32>}, {pipeline_mode = #tpu.pipeline_mode<synchronous>, transform_indices = @transform_10, window_bounds = array<i64: 1, 32>}, {pipeline_mode = #tpu.pipeline_mode<synchronous>, transform_indices = @transform_11, window_bounds = array<i64: 32, 32>}, {pipeline_mode = #tpu.pipeline_mode<synchronous>, transform_indices = @transform_12, window_bounds = array<i64: 1, 32>}, {pipeline_mode = #tpu.pipeline_mode<synchronous>, transform_indices = @transform_13, window_bounds = array<i64: 32, 32>}, {pipeline_mode = #tpu.pipeline_mode<synchronous>, transform_indices = @transform_14, window_bounds = array<i64: 1, 32>}, {pipeline_mode = #tpu.pipeline_mode<synchronous>, transform_indices = @transform_15, window_bounds = array<i64: 16, 256>}, {pipeline_mode = #tpu.pipeline_mode<synchronous>, transform_indices = @transform_16, window_bounds = array<i64: 16, 32>}]} {
    %c0 = arith.constant 0 : index
    %c0_0 = arith.constant 0 : index
    %0 = vector.load %arg1[%c0, %c0_0] : memref<16x32xf32, #tpu.memory_space<vmem>>, vector<16x32xf32>
    %c0_1 = arith.constant 0 : index
    %c0_2 = arith.constant 0 : index
    %1 = vector.load %arg3[%c0_1, %c0_2] : memref<1x32xf32, #tpu.memory_space<vmem>>, vector<1x32xf32>
    %c0_3 = arith.constant 0 : index
    %c0_4 = arith.constant 0 : index
    %2 = vector.load %arg4[%c0_3, %c0_4] : memref<1x32xf32, #tpu.memory_space<vmem>>, vector<1x32xf32>
    %cst = arith.constant dense<0.000000e+00> : vector<16xf32>
    %3 = vector.multi_reduction <add>, %0, %cst [1] : vector<16x32xf32> to vector<16xf32>
    %4 = vector.shape_cast %3 : vector<16xf32> to vector<16x1xf32>
    %cst_5 = arith.constant 3.200000e+01 : f32
    %5 = vector.broadcast %cst_5 : f32 to vector<16x1xf32>
    %6 = arith.divf %4, %5 : vector<16x1xf32>
    %7 = vector.broadcast %6 : vector<16x1xf32> to vector<16x32xf32>
    %8 = arith.subf %0, %7 : vector<16x32xf32>
    %9 = arith.mulf %8, %8 : vector<16x32xf32>
    %cst_6 = arith.constant dense<0.000000e+00> : vector<16xf32>
    %10 = vector.multi_reduction <add>, %9, %cst_6 [1] : vector<16x32xf32> to vector<16xf32>
    %11 = vector.shape_cast %10 : vector<16xf32> to vector<16x1xf32>
    %cst_7 = arith.constant 3.200000e+01 : f32
    %12 = vector.broadcast %cst_7 : f32 to vector<16x1xf32>
    %13 = arith.divf %11, %12 : vector<16x1xf32>
    %14 = vector.broadcast %6 : vector<16x1xf32> to vector<16x32xf32>
    %15 = arith.subf %0, %14 : vector<16x32xf32>
    %cst_8 = arith.constant 9.99999974E-6 : f32
    %16 = vector.broadcast %cst_8 : f32 to vector<16x1xf32>
    %17 = arith.addf %13, %16 : vector<16x1xf32>
    %18 = math.rsqrt %17 : vector<16x1xf32>
    %19 = vector.broadcast %18 : vector<16x1xf32> to vector<16x32xf32>
    %20 = arith.mulf %15, %19 : vector<16x32xf32>
    %21 = vector.broadcast %1 : vector<1x32xf32> to vector<16x32xf32>
    %22 = arith.mulf %20, %21 : vector<16x32xf32>
    %23 = vector.broadcast %2 : vector<1x32xf32> to vector<16x32xf32>
    %24 = arith.addf %22, %23 : vector<16x32xf32>
    %c0_9 = arith.constant 0 : index
    %c0_10 = arith.constant 0 : index
    %25 = vector.load %arg5[%c0_9, %c0_10] : memref<32x96xf32, #tpu.memory_space<vmem>>, vector<32x96xf32>
    %cst_11 = arith.constant dense<0.000000e+00> : vector<16x96xf32>
    %26 = tpu.matmul %24, %25, %cst_11 {dimension_numbers = #tpu.dot_dimension_numbers<[1], [0], [0], [1], [0, 0, 1, 1], [], []>} : vector<16x32xf32>, vector<32x96xf32>, vector<16x96xf32> -> vector<16x96xf32>
    %27 = vector.extract_strided_slice %26 {offsets = [0, 0], sizes = [8, 8], strides = [1, 1]} : vector<16x96xf32> to vector<8x8xf32>
    %28 = vector.extract_strided_slice %26 {offsets = [0, 32], sizes = [8, 8], strides = [1, 1]} : vector<16x96xf32> to vector<8x8xf32>
    %29 = vector.extract_strided_slice %26 {offsets = [0, 64], sizes = [8, 8], strides = [1, 1]} : vector<16x96xf32> to vector<8x8xf32>
    %cst_12 = arith.constant dense<0.000000e+00> : vector<8x8xf32>
    %30 = tpu.matmul %27, %28, %cst_12 {dimension_numbers = #tpu.dot_dimension_numbers<[1], [1], [0], [0], [0, 0, 1, 0], [], []>} : vector<8x8xf32>, vector<8x8xf32>, vector<8x8xf32> -> vector<8x8xf32>
    %cst_13 = arith.constant dense<0xFF800000> : vector<8xf32>
    %31 = vector.multi_reduction <maximumf>, %30, %cst_13 [1] : vector<8x8xf32> to vector<8xf32>
    %32 = vector.shape_cast %31 : vector<8xf32> to vector<8x1xf32>
    %33 = vector.broadcast %32 : vector<8x1xf32> to vector<8x8xf32>
    %34 = arith.subf %30, %33 : vector<8x8xf32>
    %35 = math.exp %34 : vector<8x8xf32>
    %cst_14 = arith.constant dense<0.000000e+00> : vector<8xf32>
    %36 = vector.multi_reduction <add>, %35, %cst_14 [1] : vector<8x8xf32> to vector<8xf32>
    %37 = vector.shape_cast %36 : vector<8xf32> to vector<8x1xf32>
    %38 = tpu.reciprocal %37 {approx = true} : vector<8x1xf32> -> vector<8x1xf32>
    %39 = vector.broadcast %38 : vector<8x1xf32> to vector<8x8xf32>
    %40 = arith.mulf %35, %39 : vector<8x8xf32>
    %cst_15 = arith.constant dense<0.000000e+00> : vector<8x8xf32>
    %41 = tpu.matmul %40, %29, %cst_15 {dimension_numbers = #tpu.dot_dimension_numbers<[1], [0], [0], [1], [0, 0, 1, 1], [], []>} : vector<8x8xf32>, vector<8x8xf32>, vector<8x8xf32> -> vector<8x8xf32>
    %42 = vector.extract_strided_slice %26 {offsets = [0, 8], sizes = [8, 8], strides = [1, 1]} : vector<16x96xf32> to vector<8x8xf32>
    %43 = vector.extract_strided_slice %26 {offsets = [0, 40], sizes = [8, 8], strides = [1, 1]} : vector<16x96xf32> to vector<8x8xf32>
    %44 = vector.extract_strided_slice %26 {offsets = [0, 72], sizes = [8, 8], strides = [1, 1]} : vector<16x96xf32> to vector<8x8xf32>
    %cst_16 = arith.constant dense<0.000000e+00> : vector<8x8xf32>
    %45 = tpu.matmul %42, %43, %cst_16 {dimension_numbers = #tpu.dot_dimension_numbers<[1], [1], [0], [0], [0, 0, 1, 0], [], []>} : vector<8x8xf32>, vector<8x8xf32>, vector<8x8xf32> -> vector<8x8xf32>
    %cst_17 = arith.constant dense<0xFF800000> : vector<8xf32>
    %46 = vector.multi_reduction <maximumf>, %45, %cst_17 [1] : vector<8x8xf32> to vector<8xf32>
    %47 = vector.shape_cast %46 : vector<8xf32> to vector<8x1xf32>
    %48 = vector.broadcast %47 : vector<8x1xf32> to vector<8x8xf32>
    %49 = arith.subf %45, %48 : vector<8x8xf32>
    %50 = math.exp %49 : vector<8x8xf32>
    %cst_18 = arith.constant dense<0.000000e+00> : vector<8xf32>
    %51 = vector.multi_reduction <add>, %50, %cst_18 [1] : vector<8x8xf32> to vector<8xf32>
    %52 = vector.shape_cast %51 : vector<8xf32> to vector<8x1xf32>
    %53 = tpu.reciprocal %52 {approx = true} : vector<8x1xf32> -> vector<8x1xf32>
    %54 = vector.broadcast %53 : vector<8x1xf32> to vector<8x8xf32>
    %55 = arith.mulf %50, %54 : vector<8x8xf32>
    %cst_19 = arith.constant dense<0.000000e+00> : vector<8x8xf32>
    %56 = tpu.matmul %55, %44, %cst_19 {dimension_numbers = #tpu.dot_dimension_numbers<[1], [0], [0], [1], [0, 0, 1, 1], [], []>} : vector<8x8xf32>, vector<8x8xf32>, vector<8x8xf32> -> vector<8x8xf32>
    %57 = vector.extract_strided_slice %26 {offsets = [0, 16], sizes = [8, 8], strides = [1, 1]} : vector<16x96xf32> to vector<8x8xf32>
    %58 = vector.extract_strided_slice %26 {offsets = [0, 48], sizes = [8, 8], strides = [1, 1]} : vector<16x96xf32> to vector<8x8xf32>
    %59 = vector.extract_strided_slice %26 {offsets = [0, 80], sizes = [8, 8], strides = [1, 1]} : vector<16x96xf32> to vector<8x8xf32>
    %cst_20 = arith.constant dense<0.000000e+00> : vector<8x8xf32>
    %60 = tpu.matmul %57, %58, %cst_20 {dimension_numbers = #tpu.dot_dimension_numbers<[1], [1], [0], [0], [0, 0, 1, 0], [], []>} : vector<8x8xf32>, vector<8x8xf32>, vector<8x8xf32> -> vector<8x8xf32>
    %cst_21 = arith.constant dense<0xFF800000> : vector<8xf32>
    %61 = vector.multi_reduction <maximumf>, %60, %cst_21 [1] : vector<8x8xf32> to vector<8xf32>
    %62 = vector.shape_cast %61 : vector<8xf32> to vector<8x1xf32>
    %63 = vector.broadcast %62 : vector<8x1xf32> to vector<8x8xf32>
    %64 = arith.subf %60, %63 : vector<8x8xf32>
    %65 = math.exp %64 : vector<8x8xf32>
    %cst_22 = arith.constant dense<0.000000e+00> : vector<8xf32>
    %66 = vector.multi_reduction <add>, %65, %cst_22 [1] : vector<8x8xf32> to vector<8xf32>
    %67 = vector.shape_cast %66 : vector<8xf32> to vector<8x1xf32>
    %68 = tpu.reciprocal %67 {approx = true} : vector<8x1xf32> -> vector<8x1xf32>
    %69 = vector.broadcast %68 : vector<8x1xf32> to vector<8x8xf32>
    %70 = arith.mulf %65, %69 : vector<8x8xf32>
    %cst_23 = arith.constant dense<0.000000e+00> : vector<8x8xf32>
    %71 = tpu.matmul %70, %59, %cst_23 {dimension_numbers = #tpu.dot_dimension_numbers<[1], [0], [0], [1], [0, 0, 1, 1], [], []>} : vector<8x8xf32>, vector<8x8xf32>, vector<8x8xf32> -> vector<8x8xf32>
    %72 = vector.extract_strided_slice %26 {offsets = [0, 24], sizes = [8, 8], strides = [1, 1]} : vector<16x96xf32> to vector<8x8xf32>
    %73 = vector.extract_strided_slice %26 {offsets = [0, 56], sizes = [8, 8], strides = [1, 1]} : vector<16x96xf32> to vector<8x8xf32>
    %74 = vector.extract_strided_slice %26 {offsets = [0, 88], sizes = [8, 8], strides = [1, 1]} : vector<16x96xf32> to vector<8x8xf32>
    %cst_24 = arith.constant dense<0.000000e+00> : vector<8x8xf32>
    %75 = tpu.matmul %72, %73, %cst_24 {dimension_numbers = #tpu.dot_dimension_numbers<[1], [1], [0], [0], [0, 0, 1, 0], [], []>} : vector<8x8xf32>, vector<8x8xf32>, vector<8x8xf32> -> vector<8x8xf32>
    %cst_25 = arith.constant dense<0xFF800000> : vector<8xf32>
    %76 = vector.multi_reduction <maximumf>, %75, %cst_25 [1] : vector<8x8xf32> to vector<8xf32>
    %77 = vector.shape_cast %76 : vector<8xf32> to vector<8x1xf32>
    %78 = vector.broadcast %77 : vector<8x1xf32> to vector<8x8xf32>
    %79 = arith.subf %75, %78 : vector<8x8xf32>
    %80 = math.exp %79 : vector<8x8xf32>
    %cst_26 = arith.constant dense<0.000000e+00> : vector<8xf32>
    %81 = vector.multi_reduction <add>, %80, %cst_26 [1] : vector<8x8xf32> to vector<8xf32>
    %82 = vector.shape_cast %81 : vector<8xf32> to vector<8x1xf32>
    %83 = tpu.reciprocal %82 {approx = true} : vector<8x1xf32> -> vector<8x1xf32>
    %84 = vector.broadcast %83 : vector<8x1xf32> to vector<8x8xf32>
    %85 = arith.mulf %80, %84 : vector<8x8xf32>
    %cst_27 = arith.constant dense<0.000000e+00> : vector<8x8xf32>
    %86 = tpu.matmul %85, %74, %cst_27 {dimension_numbers = #tpu.dot_dimension_numbers<[1], [0], [0], [1], [0, 0, 1, 1], [], []>} : vector<8x8xf32>, vector<8x8xf32>, vector<8x8xf32> -> vector<8x8xf32>
    %87 = tpu.concatenate %30, %45, %60, %75 in 1 : vector<8x8xf32>, vector<8x8xf32>, vector<8x8xf32>, vector<8x8xf32> -> vector<8x32xf32>
    %88 = tpu.concatenate %41, %56, %71, %86 in 1 : vector<8x8xf32>, vector<8x8xf32>, vector<8x8xf32>, vector<8x8xf32> -> vector<8x32xf32>
    %89 = vector.extract_strided_slice %26 {offsets = [8, 0], sizes = [8, 8], strides = [1, 1]} : vector<16x96xf32> to vector<8x8xf32>
    %90 = vector.extract_strided_slice %26 {offsets = [8, 32], sizes = [8, 8], strides = [1, 1]} : vector<16x96xf32> to vector<8x8xf32>
    %91 = vector.extract_strided_slice %26 {offsets = [8, 64], sizes = [8, 8], strides = [1, 1]} : vector<16x96xf32> to vector<8x8xf32>
    %cst_28 = arith.constant dense<0.000000e+00> : vector<8x8xf32>
    %92 = tpu.matmul %89, %90, %cst_28 {dimension_numbers = #tpu.dot_dimension_numbers<[1], [1], [0], [0], [0, 0, 1, 0], [], []>} : vector<8x8xf32>, vector<8x8xf32>, vector<8x8xf32> -> vector<8x8xf32>
    %cst_29 = arith.constant dense<0xFF800000> : vector<8xf32>
    %93 = vector.multi_reduction <maximumf>, %92, %cst_29 [1] : vector<8x8xf32> to vector<8xf32>
    %94 = vector.shape_cast %93 : vector<8xf32> to vector<8x1xf32>
    %95 = vector.broadcast %94 : vector<8x1xf32> to vector<8x8xf32>
    %96 = arith.subf %92, %95 : vector<8x8xf32>
    %97 = math.exp %96 : vector<8x8xf32>
    %cst_30 = arith.constant dense<0.000000e+00> : vector<8xf32>
    %98 = vector.multi_reduction <add>, %97, %cst_30 [1] : vector<8x8xf32> to vector<8xf32>
    %99 = vector.shape_cast %98 : vector<8xf32> to vector<8x1xf32>
    %100 = tpu.reciprocal %99 {approx = true} : vector<8x1xf32> -> vector<8x1xf32>
    %101 = vector.broadcast %100 : vector<8x1xf32> to vector<8x8xf32>
    %102 = arith.mulf %97, %101 : vector<8x8xf32>
    %cst_31 = arith.constant dense<0.000000e+00> : vector<8x8xf32>
    %103 = tpu.matmul %102, %91, %cst_31 {dimension_numbers = #tpu.dot_dimension_numbers<[1], [0], [0], [1], [0, 0, 1, 1], [], []>} : vector<8x8xf32>, vector<8x8xf32>, vector<8x8xf32> -> vector<8x8xf32>
    %104 = vector.extract_strided_slice %26 {offsets = [8, 8], sizes = [8, 8], strides = [1, 1]} : vector<16x96xf32> to vector<8x8xf32>
    %105 = vector.extract_strided_slice %26 {offsets = [8, 40], sizes = [8, 8], strides = [1, 1]} : vector<16x96xf32> to vector<8x8xf32>
    %106 = vector.extract_strided_slice %26 {offsets = [8, 72], sizes = [8, 8], strides = [1, 1]} : vector<16x96xf32> to vector<8x8xf32>
    %cst_32 = arith.constant dense<0.000000e+00> : vector<8x8xf32>
    %107 = tpu.matmul %104, %105, %cst_32 {dimension_numbers = #tpu.dot_dimension_numbers<[1], [1], [0], [0], [0, 0, 1, 0], [], []>} : vector<8x8xf32>, vector<8x8xf32>, vector<8x8xf32> -> vector<8x8xf32>
    %cst_33 = arith.constant dense<0xFF800000> : vector<8xf32>
    %108 = vector.multi_reduction <maximumf>, %107, %cst_33 [1] : vector<8x8xf32> to vector<8xf32>
    %109 = vector.shape_cast %108 : vector<8xf32> to vector<8x1xf32>
    %110 = vector.broadcast %109 : vector<8x1xf32> to vector<8x8xf32>
    %111 = arith.subf %107, %110 : vector<8x8xf32>
    %112 = math.exp %111 : vector<8x8xf32>
    %cst_34 = arith.constant dense<0.000000e+00> : vector<8xf32>
    %113 = vector.multi_reduction <add>, %112, %cst_34 [1] : vector<8x8xf32> to vector<8xf32>
    %114 = vector.shape_cast %113 : vector<8xf32> to vector<8x1xf32>
    %115 = tpu.reciprocal %114 {approx = true} : vector<8x1xf32> -> vector<8x1xf32>
    %116 = vector.broadcast %115 : vector<8x1xf32> to vector<8x8xf32>
    %117 = arith.mulf %112, %116 : vector<8x8xf32>
    %cst_35 = arith.constant dense<0.000000e+00> : vector<8x8xf32>
    %118 = tpu.matmul %117, %106, %cst_35 {dimension_numbers = #tpu.dot_dimension_numbers<[1], [0], [0], [1], [0, 0, 1, 1], [], []>} : vector<8x8xf32>, vector<8x8xf32>, vector<8x8xf32> -> vector<8x8xf32>
    %119 = vector.extract_strided_slice %26 {offsets = [8, 16], sizes = [8, 8], strides = [1, 1]} : vector<16x96xf32> to vector<8x8xf32>
    %120 = vector.extract_strided_slice %26 {offsets = [8, 48], sizes = [8, 8], strides = [1, 1]} : vector<16x96xf32> to vector<8x8xf32>
    %121 = vector.extract_strided_slice %26 {offsets = [8, 80], sizes = [8, 8], strides = [1, 1]} : vector<16x96xf32> to vector<8x8xf32>
    %cst_36 = arith.constant dense<0.000000e+00> : vector<8x8xf32>
    %122 = tpu.matmul %119, %120, %cst_36 {dimension_numbers = #tpu.dot_dimension_numbers<[1], [1], [0], [0], [0, 0, 1, 0], [], []>} : vector<8x8xf32>, vector<8x8xf32>, vector<8x8xf32> -> vector<8x8xf32>
    %cst_37 = arith.constant dense<0xFF800000> : vector<8xf32>
    %123 = vector.multi_reduction <maximumf>, %122, %cst_37 [1] : vector<8x8xf32> to vector<8xf32>
    %124 = vector.shape_cast %123 : vector<8xf32> to vector<8x1xf32>
    %125 = vector.broadcast %124 : vector<8x1xf32> to vector<8x8xf32>
    %126 = arith.subf %122, %125 : vector<8x8xf32>
    %127 = math.exp %126 : vector<8x8xf32>
    %cst_38 = arith.constant dense<0.000000e+00> : vector<8xf32>
    %128 = vector.multi_reduction <add>, %127, %cst_38 [1] : vector<8x8xf32> to vector<8xf32>
    %129 = vector.shape_cast %128 : vector<8xf32> to vector<8x1xf32>
    %130 = tpu.reciprocal %129 {approx = true} : vector<8x1xf32> -> vector<8x1xf32>
    %131 = vector.broadcast %130 : vector<8x1xf32> to vector<8x8xf32>
    %132 = arith.mulf %127, %131 : vector<8x8xf32>
    %cst_39 = arith.constant dense<0.000000e+00> : vector<8x8xf32>
    %133 = tpu.matmul %132, %121, %cst_39 {dimension_numbers = #tpu.dot_dimension_numbers<[1], [0], [0], [1], [0, 0, 1, 1], [], []>} : vector<8x8xf32>, vector<8x8xf32>, vector<8x8xf32> -> vector<8x8xf32>
    %134 = vector.extract_strided_slice %26 {offsets = [8, 24], sizes = [8, 8], strides = [1, 1]} : vector<16x96xf32> to vector<8x8xf32>
    %135 = vector.extract_strided_slice %26 {offsets = [8, 56], sizes = [8, 8], strides = [1, 1]} : vector<16x96xf32> to vector<8x8xf32>
    %136 = vector.extract_strided_slice %26 {offsets = [8, 88], sizes = [8, 8], strides = [1, 1]} : vector<16x96xf32> to vector<8x8xf32>
    %cst_40 = arith.constant dense<0.000000e+00> : vector<8x8xf32>
    %137 = tpu.matmul %134, %135, %cst_40 {dimension_numbers = #tpu.dot_dimension_numbers<[1], [1], [0], [0], [0, 0, 1, 0], [], []>} : vector<8x8xf32>, vector<8x8xf32>, vector<8x8xf32> -> vector<8x8xf32>
    %cst_41 = arith.constant dense<0xFF800000> : vector<8xf32>
    %138 = vector.multi_reduction <maximumf>, %137, %cst_41 [1] : vector<8x8xf32> to vector<8xf32>
    %139 = vector.shape_cast %138 : vector<8xf32> to vector<8x1xf32>
    %140 = vector.broadcast %139 : vector<8x1xf32> to vector<8x8xf32>
    %141 = arith.subf %137, %140 : vector<8x8xf32>
    %142 = math.exp %141 : vector<8x8xf32>
    %cst_42 = arith.constant dense<0.000000e+00> : vector<8xf32>
    %143 = vector.multi_reduction <add>, %142, %cst_42 [1] : vector<8x8xf32> to vector<8xf32>
    %144 = vector.shape_cast %143 : vector<8xf32> to vector<8x1xf32>
    %145 = tpu.reciprocal %144 {approx = true} : vector<8x1xf32> -> vector<8x1xf32>
    %146 = vector.broadcast %145 : vector<8x1xf32> to vector<8x8xf32>
    %147 = arith.mulf %142, %146 : vector<8x8xf32>
    %cst_43 = arith.constant dense<0.000000e+00> : vector<8x8xf32>
    %148 = tpu.matmul %147, %136, %cst_43 {dimension_numbers = #tpu.dot_dimension_numbers<[1], [0], [0], [1], [0, 0, 1, 1], [], []>} : vector<8x8xf32>, vector<8x8xf32>, vector<8x8xf32> -> vector<8x8xf32>
    %149 = tpu.concatenate %92, %107, %122, %137 in 1 : vector<8x8xf32>, vector<8x8xf32>, vector<8x8xf32>, vector<8x8xf32> -> vector<8x32xf32>
    %150 = tpu.concatenate %103, %118, %133, %148 in 1 : vector<8x8xf32>, vector<8x8xf32>, vector<8x8xf32>, vector<8x8xf32> -> vector<8x32xf32>
    %151 = tpu.concatenate %87, %149 in 0 : vector<8x32xf32>, vector<8x32xf32> -> vector<16x32xf32>
    %c0_44 = arith.constant 0 : index
    %c0_45 = arith.constant 0 : index
    %152 = vector.load %arg17[%c0_44, %c0_45] : memref<16x32xf32, #tpu.memory_space<vmem>>, vector<16x32xf32>
    tpu.vector_store %arg17[%c0_44, %c0_45], %151 {strides = array<i32>} : memref<16x32xf32, #tpu.memory_space<vmem>>, vector<16x32xf32>,
    %153 = tpu.concatenate %88, %150 in 0 : vector<8x32xf32>, vector<8x32xf32> -> vector<16x32xf32>
    %c0_46 = arith.constant 0 : index
    %c0_47 = arith.constant 0 : index
    %154 = vector.load %arg6[%c0_46, %c0_47] : memref<32x32xf32, #tpu.memory_space<vmem>>, vector<32x32xf32>
    %cst_48 = arith.constant dense<0.000000e+00> : vector<16x32xf32>
    %155 = tpu.matmul %153, %154, %cst_48 {dimension_numbers = #tpu.dot_dimension_numbers<[1], [0], [0], [1], [0, 0, 1, 1], [], []>} : vector<16x32xf32>, vector<32x32xf32>, vector<16x32xf32> -> vector<16x32xf32>
    %c0_49 = arith.constant 0 : index
    %c0_50 = arith.constant 0 : index
    %156 = vector.load %arg7[%c0_49, %c0_50] : memref<1x32xf32, #tpu.memory_space<vmem>>, vector<1x32xf32>
    %157 = vector.broadcast %156 : vector<1x32xf32> to vector<16x32xf32>
    %158 = arith.addf %155, %157 : vector<16x32xf32>
    %159 = arith.addf %0, %158 : vector<16x32xf32>
    %c0_51 = arith.constant 0 : index
    %c0_52 = arith.constant 0 : index
    %160 = vector.load %arg2[%c0_51, %c0_52] : memref<16x16xf32, #tpu.memory_space<vmem>>, vector<16x16xf32>
    %c0_53 = arith.constant 0 : index
    %c0_54 = arith.constant 0 : index
    %161 = vector.load %arg8[%c0_53, %c0_54] : memref<16x32xf32, #tpu.memory_space<vmem>>, vector<16x32xf32>
    %cst_55 = arith.constant dense<0.000000e+00> : vector<16x32xf32>
    %162 = tpu.matmul %160, %161, %cst_55 {dimension_numbers = #tpu.dot_dimension_numbers<[1], [0], [0], [1], [0, 0, 1, 1], [], []>} : vector<16x16xf32>, vector<16x32xf32>, vector<16x32xf32> -> vector<16x32xf32>
    %c0_56 = arith.constant 0 : index
    %c0_57 = arith.constant 0 : index
    %163 = vector.load %arg9[%c0_56, %c0_57] : memref<1x32xf32, #tpu.memory_space<vmem>>, vector<1x32xf32>
    %164 = vector.broadcast %163 : vector<1x32xf32> to vector<16x32xf32>
    %165 = arith.addf %162, %164 : vector<16x32xf32>
    %166 = vector.extract_strided_slice %165 {offsets = [0, 0], sizes = [1, 32], strides = [1, 1]} : vector<16x32xf32> to vector<1x32xf32>
    %167 = vector.shape_cast %166 : vector<1x32xf32> to vector<1x32xf32>
    %168 = vector.broadcast %167 : vector<1x32xf32> to vector<8x32xf32>
    %169 = vector.extract_strided_slice %165 {offsets = [8, 0], sizes = [1, 32], strides = [1, 1]} : vector<16x32xf32> to vector<1x32xf32>
    %170 = vector.shape_cast %169 : vector<1x32xf32> to vector<1x32xf32>
    %171 = vector.broadcast %170 : vector<1x32xf32> to vector<8x32xf32>
    %172 = vector.extract_strided_slice %165 {offsets = [1, 0], sizes = [1, 32], strides = [1, 1]} : vector<16x32xf32> to vector<1x32xf32>
    %173 = vector.shape_cast %172 : vector<1x32xf32> to vector<1x32xf32>
    %174 = vector.broadcast %173 : vector<1x32xf32> to vector<8x32xf32>
    %175 = vector.extract_strided_slice %165 {offsets = [9, 0], sizes = [1, 32], strides = [1, 1]} : vector<16x32xf32> to vector<1x32xf32>
    %176 = vector.shape_cast %175 : vector<1x32xf32> to vector<1x32xf32>
    %177 = vector.broadcast %176 : vector<1x32xf32> to vector<8x32xf32>
    %178 = vector.extract_strided_slice %165 {offsets = [2, 0], sizes = [1, 32], strides = [1, 1]} : vector<16x32xf32> to vector<1x32xf32>
    %179 = vector.shape_cast %178 : vector<1x32xf32> to vector<1x32xf32>
    %180 = vector.broadcast %179 : vector<1x32xf32> to vector<8x32xf32>
    %181 = vector.extract_strided_slice %165 {offsets = [10, 0], sizes = [1, 32], strides = [1, 1]} : vector<16x32xf32> to vector<1x32xf32>
    %182 = vector.shape_cast %181 : vector<1x32xf32> to vector<1x32xf32>
    %183 = vector.broadcast %182 : vector<1x32xf32> to vector<8x32xf32>
    %184 = vector.extract_strided_slice %165 {offsets = [3, 0], sizes = [1, 32], strides = [1, 1]} : vector<16x32xf32> to vector<1x32xf32>
    %185 = vector.shape_cast %184 : vector<1x32xf32> to vector<1x32xf32>
    %186 = vector.broadcast %185 : vector<1x32xf32> to vector<8x32xf32>
    %187 = vector.extract_strided_slice %165 {offsets = [11, 0], sizes = [1, 32], strides = [1, 1]} : vector<16x32xf32> to vector<1x32xf32>
    %188 = vector.shape_cast %187 : vector<1x32xf32> to vector<1x32xf32>
    %189 = vector.broadcast %188 : vector<1x32xf32> to vector<8x32xf32>
    %190 = vector.extract_strided_slice %165 {offsets = [4, 0], sizes = [1, 32], strides = [1, 1]} : vector<16x32xf32> to vector<1x32xf32>
    %191 = vector.shape_cast %190 : vector<1x32xf32> to vector<1x32xf32>
    %192 = vector.broadcast %191 : vector<1x32xf32> to vector<8x32xf32>
    %193 = vector.extract_strided_slice %165 {offsets = [12, 0], sizes = [1, 32], strides = [1, 1]} : vector<16x32xf32> to vector<1x32xf32>
    %194 = vector.shape_cast %193 : vector<1x32xf32> to vector<1x32xf32>
    %195 = vector.broadcast %194 : vector<1x32xf32> to vector<8x32xf32>
    %196 = vector.extract_strided_slice %165 {offsets = [5, 0], sizes = [1, 32], strides = [1, 1]} : vector<16x32xf32> to vector<1x32xf32>
    %197 = vector.shape_cast %196 : vector<1x32xf32> to vector<1x32xf32>
    %198 = vector.broadcast %197 : vector<1x32xf32> to vector<8x32xf32>
    %199 = vector.extract_strided_slice %165 {offsets = [13, 0], sizes = [1, 32], strides = [1, 1]} : vector<16x32xf32> to vector<1x32xf32>
    %200 = vector.shape_cast %199 : vector<1x32xf32> to vector<1x32xf32>
    %201 = vector.broadcast %200 : vector<1x32xf32> to vector<8x32xf32>
    %202 = vector.extract_strided_slice %165 {offsets = [6, 0], sizes = [1, 32], strides = [1, 1]} : vector<16x32xf32> to vector<1x32xf32>
    %203 = vector.shape_cast %202 : vector<1x32xf32> to vector<1x32xf32>
    %204 = vector.broadcast %203 : vector<1x32xf32> to vector<8x32xf32>
    %205 = vector.extract_strided_slice %165 {offsets = [14, 0], sizes = [1, 32], strides = [1, 1]} : vector<16x32xf32> to vector<1x32xf32>
    %206 = vector.shape_cast %205 : vector<1x32xf32> to vector<1x32xf32>
    %207 = vector.broadcast %206 : vector<1x32xf32> to vector<8x32xf32>
    %208 = vector.extract_strided_slice %165 {offsets = [7, 0], sizes = [1, 32], strides = [1, 1]} : vector<16x32xf32> to vector<1x32xf32>
    %209 = vector.shape_cast %208 : vector<1x32xf32> to vector<1x32xf32>
    %210 = vector.broadcast %209 : vector<1x32xf32> to vector<8x32xf32>
    %211 = vector.extract_strided_slice %165 {offsets = [15, 0], sizes = [1, 32], strides = [1, 1]} : vector<16x32xf32> to vector<1x32xf32>
    %212 = vector.shape_cast %211 : vector<1x32xf32> to vector<1x32xf32>
    %213 = vector.broadcast %212 : vector<1x32xf32> to vector<8x32xf32>
    %214 = tpu.concatenate %168, %171, %174, %177, %180, %183, %186, %189, %192, %195, %198, %201, %204, %207, %210, %213 in 0 : vector<8x32xf32>, vector<8x32xf32>, vector<8x32xf32>, vector<8x32xf32>, vector<8x32xf32>, vector<8x32xf32>, vector<8x32xf32>, vector<8x32xf32>, vector<8x32xf32>, vector<8x32xf32>, vector<8x32xf32>, vector<8x32xf32>, vector<8x32xf32>, vector<8x32xf32>, vector<8x32xf32>, vector<8x32xf32> -> vector<128x32xf32>
    %215 = tpu.concatenate %159, %159, %159, %159, %159, %159, %159, %159 in 0 : vector<16x32xf32>, vector<16x32xf32>, vector<16x32xf32>, vector<16x32xf32>, vector<16x32xf32>, vector<16x32xf32>, vector<16x32xf32>, vector<16x32xf32> -> vector<128x32xf32>
    %216 = arith.addf %215, %214 : vector<128x32xf32>
    %c0_58 = arith.constant 0 : index
    %c0_59 = arith.constant 0 : index
    %217 = vector.load %arg10[%c0_58, %c0_59] : memref<1x32xf32, #tpu.memory_space<vmem>>, vector<1x32xf32>
    %c0_60 = arith.constant 0 : index
    %c0_61 = arith.constant 0 : index
    %218 = vector.load %arg11[%c0_60, %c0_61] : memref<1x32xf32, #tpu.memory_space<vmem>>, vector<1x32xf32>
    %cst_62 = arith.constant dense<0.000000e+00> : vector<128xf32>
    %219 = vector.multi_reduction <add>, %216, %cst_62 [1] : vector<128x32xf32> to vector<128xf32>
    %220 = vector.shape_cast %219 : vector<128xf32> to vector<128x1xf32>
    %cst_63 = arith.constant 3.200000e+01 : f32
    %221 = vector.broadcast %cst_63 : f32 to vector<128x1xf32>
    %222 = arith.divf %220, %221 : vector<128x1xf32>
    %223 = vector.broadcast %222 : vector<128x1xf32> to vector<128x32xf32>
    %224 = arith.subf %216, %223 : vector<128x32xf32>
    %225 = arith.mulf %224, %224 : vector<128x32xf32>
    %cst_64 = arith.constant dense<0.000000e+00> : vector<128xf32>
    %226 = vector.multi_reduction <add>, %225, %cst_64 [1] : vector<128x32xf32> to vector<128xf32>
    %227 = vector.shape_cast %226 : vector<128xf32> to vector<128x1xf32>
    %cst_65 = arith.constant 3.200000e+01 : f32
    %228 = vector.broadcast %cst_65 : f32 to vector<128x1xf32>
    %229 = arith.divf %227, %228 : vector<128x1xf32>
    %230 = vector.broadcast %222 : vector<128x1xf32> to vector<128x32xf32>
    %231 = arith.subf %216, %230 : vector<128x32xf32>
    %cst_66 = arith.constant 9.99999974E-6 : f32
    %232 = vector.broadcast %cst_66 : f32 to vector<128x1xf32>
    %233 = arith.addf %229, %232 : vector<128x1xf32>
    %234 = math.rsqrt %233 : vector<128x1xf32>
    %235 = vector.broadcast %234 : vector<128x1xf32> to vector<128x32xf32>
    %236 = arith.mulf %231, %235 : vector<128x32xf32>
    %237 = vector.broadcast %217 : vector<1x32xf32> to vector<128x32xf32>
    %238 = arith.mulf %236, %237 : vector<128x32xf32>
    %239 = vector.broadcast %218 : vector<1x32xf32> to vector<128x32xf32>
    %240 = arith.addf %238, %239 : vector<128x32xf32>
    %c0_67 = arith.constant 0 : index
    %c0_68 = arith.constant 0 : index
    %241 = vector.load %arg12[%c0_67, %c0_68] : memref<32x32xf32, #tpu.memory_space<vmem>>, vector<32x32xf32>
    %cst_69 = arith.constant dense<0.000000e+00> : vector<128x32xf32>
    %242 = tpu.matmul %240, %241, %cst_69 {dimension_numbers = #tpu.dot_dimension_numbers<[1], [0], [0], [1], [0, 0, 1, 1], [], []>} : vector<128x32xf32>, vector<32x32xf32>, vector<128x32xf32> -> vector<128x32xf32>
    %c0_70 = arith.constant 0 : index
    %c0_71 = arith.constant 0 : index
    %243 = vector.load %arg13[%c0_70, %c0_71] : memref<1x32xf32, #tpu.memory_space<vmem>>, vector<1x32xf32>
    %244 = vector.broadcast %243 : vector<1x32xf32> to vector<128x32xf32>
    %245 = arith.addf %242, %244 : vector<128x32xf32>
    %cst_72 = arith.constant 5.000000e-01 : f32
    %246 = vector.broadcast %cst_72 : f32 to vector<128x32xf32>
    %247 = arith.mulf %246, %245 : vector<128x32xf32>
    %cst_73 = arith.constant 0.707106769 : f32
    %248 = vector.broadcast %cst_73 : f32 to vector<128x32xf32>
    %249 = arith.mulf %245, %248 : vector<128x32xf32>
    %250 = math.erf %249 : vector<128x32xf32>
    %cst_74 = arith.constant 1.000000e+00 : f32
    %251 = vector.broadcast %cst_74 : f32 to vector<128x32xf32>
    %252 = arith.addf %251, %250 : vector<128x32xf32>
    %253 = arith.mulf %247, %252 : vector<128x32xf32>
    %c0_75 = arith.constant 0 : index
    %c0_76 = arith.constant 0 : index
    %254 = vector.load %arg14[%c0_75, %c0_76] : memref<32x32xf32, #tpu.memory_space<vmem>>, vector<32x32xf32>
    %cst_77 = arith.constant dense<0.000000e+00> : vector<128x32xf32>
    %255 = tpu.matmul %253, %254, %cst_77 {dimension_numbers = #tpu.dot_dimension_numbers<[1], [0], [0], [1], [0, 0, 1, 1], [], []>} : vector<128x32xf32>, vector<32x32xf32>, vector<128x32xf32> -> vector<128x32xf32>
    %c0_78 = arith.constant 0 : index
    %c0_79 = arith.constant 0 : index
    %256 = vector.load %arg15[%c0_78, %c0_79] : memref<1x32xf32, #tpu.memory_space<vmem>>, vector<1x32xf32>
    %257 = vector.broadcast %256 : vector<1x32xf32> to vector<128x32xf32>
    %258 = arith.addf %255, %257 : vector<128x32xf32>
    %259 = vector.extract_strided_slice %258 {offsets = [0, 0], sizes = [16, 32], strides = [1, 1]} : vector<128x32xf32> to vector<16x32xf32>
    %260 = vector.extract_strided_slice %258 {offsets = [16, 0], sizes = [16, 32], strides = [1, 1]} : vector<128x32xf32> to vector<16x32xf32>
    %261 = vector.extract_strided_slice %258 {offsets = [32, 0], sizes = [16, 32], strides = [1, 1]} : vector<128x32xf32> to vector<16x32xf32>
    %262 = vector.extract_strided_slice %258 {offsets = [48, 0], sizes = [16, 32], strides = [1, 1]} : vector<128x32xf32> to vector<16x32xf32>
    %263 = vector.extract_strided_slice %258 {offsets = [64, 0], sizes = [16, 32], strides = [1, 1]} : vector<128x32xf32> to vector<16x32xf32>
    %264 = vector.extract_strided_slice %258 {offsets = [80, 0], sizes = [16, 32], strides = [1, 1]} : vector<128x32xf32> to vector<16x32xf32>
    %265 = vector.extract_strided_slice %258 {offsets = [96, 0], sizes = [16, 32], strides = [1, 1]} : vector<128x32xf32> to vector<16x32xf32>
    %266 = vector.extract_strided_slice %258 {offsets = [112, 0], sizes = [16, 32], strides = [1, 1]} : vector<128x32xf32> to vector<16x32xf32>
    %267 = tpu.concatenate %259, %260, %261, %262, %263, %264, %265, %266 in 1 : vector<16x32xf32>, vector<16x32xf32>, vector<16x32xf32>, vector<16x32xf32>, vector<16x32xf32>, vector<16x32xf32>, vector<16x32xf32>, vector<16x32xf32> -> vector<16x256xf32>
    %c0_80 = arith.constant 0 : index
    %c0_81 = arith.constant 0 : index
    %268 = vector.load %arg16[%c0_80, %c0_81] : memref<16x256xf32, #tpu.memory_space<vmem>>, vector<16x256xf32>
    tpu.vector_store %arg16[%c0_80, %c0_81], %267 {strides = array<i32>} : memref<16x256xf32, #tpu.memory_space<vmem>>, vector<16x256xf32>,
    return
  }
  func.func @transform_0(%arg0: i32) -> (i32, i32) {
    %c0_i32 = arith.constant 0 : i32
    %c0_i32_0 = arith.constant 0 : i32
    %c0_i32_1 = arith.constant 0 : i32
    return %c0_i32, %c0_i32_0 : i32, i32
  }
  func.func @transform_1(%arg0: i32) -> (i32, i32) {
    %c0_i32 = arith.constant 0 : i32
    %c0_i32_0 = arith.constant 0 : i32
    %c0_i32_1 = arith.constant 0 : i32
    return %c0_i32, %c0_i32_0 : i32, i32
  }
  func.func @transform_2(%arg0: i32) -> (i32, i32) {
    %c0_i32 = arith.constant 0 : i32
    %c0_i32_0 = arith.constant 0 : i32
    %c0_i32_1 = arith.constant 0 : i32
    return %c0_i32, %c0_i32_0 : i32, i32
  }
  func.func @transform_3(%arg0: i32) -> (i32, i32) {
    %c0_i32 = arith.constant 0 : i32
    %c0_i32_0 = arith.constant 0 : i32
    %c0_i32_1 = arith.constant 0 : i32
    return %c0_i32, %c0_i32_0 : i32, i32
  }
  func.func @transform_4(%arg0: i32) -> (i32, i32) {
    %c0_i32 = arith.constant 0 : i32
    %c0_i32_0 = arith.constant 0 : i32
    %c0_i32_1 = arith.constant 0 : i32
    return %c0_i32, %c0_i32_0 : i32, i32
  }
  func.func @transform_5(%arg0: i32) -> (i32, i32) {
    %c0_i32 = arith.constant 0 : i32
    %c0_i32_0 = arith.constant 0 : i32
    %c0_i32_1 = arith.constant 0 : i32
    return %c0_i32, %c0_i32_0 : i32, i32
  }
  func.func @transform_6(%arg0: i32) -> (i32, i32) {
    %c0_i32 = arith.constant 0 : i32
    %c0_i32_0 = arith.constant 0 : i32
    %c0_i32_1 = arith.constant 0 : i32
    return %c0_i32, %c0_i32_0 : i32, i32
  }
  func.func @transform_7(%arg0: i32) -> (i32, i32) {
    %c0_i32 = arith.constant 0 : i32
    %c0_i32_0 = arith.constant 0 : i32
    %c0_i32_1 = arith.constant 0 : i32
    return %c0_i32, %c0_i32_0 : i32, i32
  }
  func.func @transform_8(%arg0: i32) -> (i32, i32) {
    %c0_i32 = arith.constant 0 : i32
    %c0_i32_0 = arith.constant 0 : i32
    %c0_i32_1 = arith.constant 0 : i32
    return %c0_i32, %c0_i32_0 : i32, i32
  }
  func.func @transform_9(%arg0: i32) -> (i32, i32) {
    %c0_i32 = arith.constant 0 : i32
    %c0_i32_0 = arith.constant 0 : i32
    %c0_i32_1 = arith.constant 0 : i32
    return %c0_i32, %c0_i32_0 : i32, i32
  }
  func.func @transform_10(%arg0: i32) -> (i32, i32) {
    %c0_i32 = arith.constant 0 : i32
    %c0_i32_0 = arith.constant 0 : i32
    %c0_i32_1 = arith.constant 0 : i32
    return %c0_i32, %c0_i32_0 : i32, i32
  }
  func.func @transform_11(%arg0: i32) -> (i32, i32) {
    %c0_i32 = arith.constant 0 : i32
    %c0_i32_0 = arith.constant 0 : i32
    %c0_i32_1 = arith.constant 0 : i32
    return %c0_i32, %c0_i32_0 : i32, i32
  }
  func.func @transform_12(%arg0: i32) -> (i32, i32) {
    %c0_i32 = arith.constant 0 : i32
    %c0_i32_0 = arith.constant 0 : i32
    %c0_i32_1 = arith.constant 0 : i32
    return %c0_i32, %c0_i32_0 : i32, i32
  }
  func.func @transform_13(%arg0: i32) -> (i32, i32) {
    %c0_i32 = arith.constant 0 : i32
    %c0_i32_0 = arith.constant 0 : i32
    %c0_i32_1 = arith.constant 0 : i32
    return %c0_i32, %c0_i32_0 : i32, i32
  }
  func.func @transform_14(%arg0: i32) -> (i32, i32) {
    %c0_i32 = arith.constant 0 : i32
    %c0_i32_0 = arith.constant 0 : i32
    %c0_i32_1 = arith.constant 0 : i32
    return %c0_i32, %c0_i32_0 : i32, i32
  }
  func.func @transform_15(%arg0: i32) -> (i32, i32) {
    %c0_i32 = arith.constant 0 : i32
    %c0_i32_0 = arith.constant 0 : i32
    %c0_i32_1 = arith.constant 0 : i32
    return %c0_i32, %c0_i32_0 : i32, i32
  }
  func.func @transform_16(%arg0: i32) -> (i32, i32) {
    %c0_i32 = arith.constant 0 : i32
    %c0_i32_0 = arith.constant 0 : i32
    %c0_i32_1 = arith.constant 0 : i32
    return %c0_i32, %c0_i32_0 : i32, i32
  }
}

</mosaic_0001>

<llo_original>
// kernel: decoder_block_with_expansion.1
$region0: #{decoder_block_with_expansion.1}
  #allocation0 [shape = 'u32[]', space=smem, size = 0x4, offset = 0x4, fixed_abs, tag = 'smem constant byte address 0x4 - core index']
  #allocation1 [shape = 'u32[144,128]{1,0:T(1,128)}', space=vmem, size = 0x12000, scoped, tag = 'internal scratch']
  %s0 = inlined_call_operand.hbm [shape: f32[16,32], index: 0, kind: input, shape index: {}]
  %s1 = inlined_call_operand.hbm [shape: f32[16,16], index: 1, kind: input, shape index: {}]
  %s2 = inlined_call_operand.vmem [shape: f32[1,32], index: 2, kind: input, shape index: {}]
  %s3 = inlined_call_operand.vmem [shape: f32[1,32], index: 3, kind: input, shape index: {}]
  %s4 = inlined_call_operand.hbm [shape: f32[32,96], index: 4, kind: input, shape index: {}]
  %s5 = inlined_call_operand.hbm [shape: f32[32,32], index: 5, kind: input, shape index: {}]
  %s6 = inlined_call_operand.vmem [shape: f32[1,32], index: 6, kind: input, shape index: {}]
  %s7 = inlined_call_operand.vmem [shape: f32[16,32], index: 7, kind: input, shape index: {}]
  %s8 = inlined_call_operand.vmem [shape: f32[1,32], index: 8, kind: input, shape index: {}]
  %s9 = inlined_call_operand.vmem [shape: f32[1,32], index: 9, kind: input, shape index: {}]
  %s10 = inlined_call_operand.vmem [shape: f32[1,32], index: 10, kind: input, shape index: {}]
  %s11 = inlined_call_operand.hbm [shape: f32[32,32], index: 11, kind: input, shape index: {}]
  %s12 = inlined_call_operand.vmem [shape: f32[1,32], index: 12, kind: input, shape index: {}]
  %s13 = inlined_call_operand.hbm [shape: f32[32,32], index: 13, kind: input, shape index: {}]
  %s14 = inlined_call_operand.vmem [shape: f32[1,32], index: 14, kind: input, shape index: {}]
  %s15 = inlined_call_operand.vmem [shape: f32[16,256], index: 15, kind: output, shape index: {0}]
  %s16 = inlined_call_operand.vmem [shape: f32[16,32], index: 16, kind: output, shape index: {1}]
  %17 = xla_tuple %s15, %s16
  %s18 = sld [smem:[#allocation0]]
  $region102: #{decoder_block_with_expansion.1} parent=0
    _
  %s20 = ssub.s32 1, %s18
  %s21 = scalar_select 0, %s20, %s18
  $region1: #{decoder_block_with_expansion.1} parent=0
    #allocation2 [shape = 'u8[8192]{0}', space=vmem, size = 0x2000, scoped, tag = 'input window, operand 0, single buffered']
    #allocation3 [shape = 's32[1]{0}', space=sflag, size = 0x4, scoped, tag = 'scoped memory for decoder_block_with_expansion.1']
    #allocation4 [shape = 'u8[8192]{0}', space=vmem, size = 0x2000, scoped, tag = 'input window, operand 1, single buffered']
    #allocation5 [shape = 's32[1]{0}', space=sflag, size = 0x4, scoped, tag = 'scoped memory for decoder_block_with_expansion.1']
    #allocation6 [shape = 'u8[16384]{0}', space=vmem, size = 0x4000, scoped, tag = 'input window, operand 4, single buffered']
    #allocation7 [shape = 'u8[16384]{0}', space=vmem, size = 0x4000, scoped, tag = 'input window, operand 5, single buffered']
    #allocation8 [shape = 's32[1]{0}', space=sflag, size = 0x4, scoped, tag = 'scoped memory for decoder_block_with_expansion.1']
    #allocation9 [shape = 'u8[16384]{0}', space=vmem, size = 0x4000, scoped, tag = 'input window, operand 11, single buffered']
    #allocation10 [shape = 'u8[16384]{0}', space=vmem, size = 0x4000, scoped, tag = 'input window, operand 13, single buffered']
    #allocation11 [shape = 's32[1]{0}', space=sflag, size = 0x4, scoped, tag = 'scoped memory for decoder_block_with_expansion.1']
    %22 = vsyncpa [#allocation3], 0
    %23 = vsyncpa [#allocation5], 0
    %24 = vsyncpa [#allocation8], 0
    %25 = vsyncpa [#allocation11], 0
    // Predicated region
    $region2: #{decoder_block_with_expansion.1} parent=1 // pred_check
      _
    $region3: #{decoder_block_with_expansion.1} parent=1 // pred_check_branch
      %27 = sbr.rel (0) target = $region5
    $region4: #{decoder_block_with_expansion.1} parent=1 // pred_region
      %s29 = ssub.s32 256, 256
      %30 = vsyncadd [#allocation3], %s29
      %s31 = sshll.u32 [#allocation2], 4
      %s32 = int_to_ptr.vmem [resolvable:$true] %s31
      %37 = dma.hbm_to_vmem [thread:$0]  %s0, 256, %s32, [#allocation3], 128, 128, 8
    $region5: #{decoder_block_with_expansion.1} parent=1 // pred_fallthru
      _
    // Predicated region
    $region6: #{decoder_block_with_expansion.1} parent=1 // pred_check
      _
    $region7: #{decoder_block_with_expansion.1} parent=1 // pred_check_branch
      %39 = sbr.rel (0) target = $region9
    $region8: #{decoder_block_with_expansion.1} parent=1 // pred_region
      %s41 = ssub.s32 256, 256
      %42 = vsyncadd [#allocation5], %s41
      %s43 = sshll.u32 [#allocation4], 4
      %s44 = int_to_ptr.vmem [resolvable:$true] %s43
      %49 = dma.hbm_to_vmem [thread:$0]  %s1, 256, %s44, [#allocation5], 128, 128, 8
    $region9: #{decoder_block_with_expansion.1} parent=1 // pred_fallthru
      _
    // Predicated region
    $region10: #{decoder_block_with_expansion.1} parent=1 // pred_check
      _
    $region11: #{decoder_block_with_expansion.1} parent=1 // pred_check_branch
      %51 = sbr.rel (0) target = $region13
    $region12: #{decoder_block_with_expansion.1} parent=1 // pred_region
      _
    $region13: #{decoder_block_with_expansion.1} parent=1 // pred_fallthru
      _
    // Predicated region
    $region14: #{decoder_block_with_expansion.1} parent=1 // pred_check
      _
    $region15: #{decoder_block_with_expansion.1} parent=1 // pred_check_branch
      %53 = sbr.rel (0) target = $region17
    $region16: #{decoder_block_with_expansion.1} parent=1 // pred_region
      _
    $region17: #{decoder_block_with_expansion.1} parent=1 // pred_fallthru
      _
    // Predicated region
    $region18: #{decoder_block_with_expansion.1} parent=1 // pred_check
      _
    $region19: #{decoder_block_with_expansion.1} parent=1 // pred_check_branch
      %55 = sbr.rel (0) target = $region21
    $region20: #{decoder_block_with_expansion.1} parent=1 // pred_region
      %s57 = ssub.s32 512, 512
      %58 = vsyncadd [#allocation5], %s57
      %s59 = sshll.u32 [#allocation6], 4
      %s60 = int_to_ptr.vmem [resolvable:$true] %s59
      %65 = dma.hbm_to_vmem [thread:$0]  %s4, 512, %s60, [#allocation5], 128, 128, 8
    $region21: #{decoder_block_with_expansion.1} parent=1 // pred_fallthru
      _
    // Predicated region
    $region22: #{decoder_block_with_expansion.1} parent=1 // pred_check
      _
    $region23: #{decoder_block_with_expansion.1} parent=1 // pred_check_branch
      %67 = sbr.rel (0) target = $region25
    $region24: #{decoder_block_with_expansion.1} parent=1 // pred_region
      %s69 = ssub.s32 512, 512
      %70 = vsyncadd [#allocation8], %s69
      %s71 = sshll.u32 [#allocation7], 4
      %s72 = int_to_ptr.vmem [resolvable:$true] %s71
      %77 = dma.hbm_to_vmem [thread:$0]  %s5, 512, %s72, [#allocation8], 128, 128, 8
    $region25: #{decoder_block_with_expansion.1} parent=1 // pred_fallthru
      _
    // Predicated region
    $region26: #{decoder_block_with_expansion.1} parent=1 // pred_check
      _
    $region27: #{decoder_block_with_expansion.1} parent=1 // pred_check_branch
      %79 = sbr.rel (0) target = $region29
    $region28: #{decoder_block_with_expansion.1} parent=1 // pred_region
      _
    $region29: #{decoder_block_with_expansion.1} parent=1 // pred_fallthru
      _
    // Predicated region
    $region30: #{decoder_block_with_expansion.1} parent=1 // pred_check
      _
    $region31: #{decoder_block_with_expansion.1} parent=1 // pred_check_branch
      %81 = sbr.rel (0) target = $region33
    $region32: #{decoder_block_with_expansion.1} parent=1 // pred_region
      _
    $region33: #{decoder_block_with_expansion.1} parent=1 // pred_fallthru
      _
    // Predicated region
    $region34: #{decoder_block_with_expansion.1} parent=1 // pred_check
      _
    $region35: #{decoder_block_with_expansion.1} parent=1 // pred_check_branch
      %83 = sbr.rel (0) target = $region37
    $region36: #{decoder_block_with_expansion.1} parent=1 // pred_region
      _
    $region37: #{decoder_block_with_expansion.1} parent=1 // pred_fallthru
      _
    // Predicated region
    $region38: #{decoder_block_with_expansion.1} parent=1 // pred_check
      _
    $region39: #{decoder_block_with_expansion.1} parent=1 // pred_check_branch
      %85 = sbr.rel (0) target = $region41
    $region40: #{decoder_block_with_expansion.1} parent=1 // pred_region
      _
    $region41: #{decoder_block_with_expansion.1} parent=1 // pred_fallthru
      _
    // Predicated region
    $region42: #{decoder_block_with_expansion.1} parent=1 // pred_check
      _
    $region43: #{decoder_block_with_expansion.1} parent=1 // pred_check_branch
      %87 = sbr.rel (0) target = $region45
    $region44: #{decoder_block_with_expansion.1} parent=1 // pred_region
      _
    $region45: #{decoder_block_with_expansion.1} parent=1 // pred_fallthru
      _
    // Predicated region
    $region46: #{decoder_block_with_expansion.1} parent=1 // pred_check
      _
    $region47: #{decoder_block_with_expansion.1} parent=1 // pred_check_branch
      %89 = sbr.rel (0) target = $region49
    $region48: #{decoder_block_with_expansion.1} parent=1 // pred_region
      %s91 = ssub.s32 512, 512
      %92 = vsyncadd [#allocation8], %s91
      %s93 = sshll.u32 [#allocation9], 4
      %s94 = int_to_ptr.vmem [resolvable:$true] %s93
      %99 = dma.hbm_to_vmem [thread:$0]  %s11, 512, %s94, [#allocation8], 128, 128, 8
    $region49: #{decoder_block_with_expansion.1} parent=1 // pred_fallthru
      _
    // Predicated region
    $region50: #{decoder_block_with_expansion.1} parent=1 // pred_check
      _
    $region51: #{decoder_block_with_expansion.1} parent=1 // pred_check_branch
      %101 = sbr.rel (0) target = $region53
    $region52: #{decoder_block_with_expansion.1} parent=1 // pred_region
      _
    $region53: #{decoder_block_with_expansion.1} parent=1 // pred_fallthru
      _
    // Predicated region
    $region54: #{decoder_block_with_expansion.1} parent=1 // pred_check
      _
    $region55: #{decoder_block_with_expansion.1} parent=1 // pred_check_branch
      %103 = sbr.rel (0) target = $region57
    $region56: #{decoder_block_with_expansion.1} parent=1 // pred_region
      %s105 = ssub.s32 512, 512
      %106 = vsyncadd [#allocation11], %s105
      %s107 = sshll.u32 [#allocation10], 4
      %s108 = int_to_ptr.vmem [resolvable:$true] %s107
      %113 = dma.hbm_to_vmem [thread:$0]  %s13, 512, %s108, [#allocation11], 128, 128, 8
    $region57: #{decoder_block_with_expansion.1} parent=1 // pred_fallthru
      _
    // Predicated region
    $region58: #{decoder_block_with_expansion.1} parent=1 // pred_check
      _
    $region59: #{decoder_block_with_expansion.1} parent=1 // pred_check_branch
      %115 = sbr.rel (0) target = $region61
    $region60: #{decoder_block_with_expansion.1} parent=1 // pred_region
      _
    $region61: #{decoder_block_with_expansion.1} parent=1 // pred_fallthru
      _
    // Predicated region
    $region62: #{decoder_block_with_expansion.1} parent=1 // pred_check
      _
    $region63: #{decoder_block_with_expansion.1} parent=1 // pred_check_branch
      %117 = sbr.rel (0) target = $region65
    $region64: #{decoder_block_with_expansion.1} parent=1 // pred_region
      %118 = dma.done [#allocation3], 256
    $region65: #{decoder_block_with_expansion.1} parent=1 // pred_fallthru
      _
    // Predicated region
    $region66: #{decoder_block_with_expansion.1} parent=1 // pred_check
      _
    $region67: #{decoder_block_with_expansion.1} parent=1 // pred_check_branch
      %120 = sbr.rel (0) target = $region69
    $region68: #{decoder_block_with_expansion.1} parent=1 // pred_region
      %121 = dma.done [#allocation5], 256
    $region69: #{decoder_block_with_expansion.1} parent=1 // pred_fallthru
      _
    // Predicated region
    $region70: #{decoder_block_with_expansion.1} parent=1 // pred_check
      _
    $region71: #{decoder_block_with_expansion.1} parent=1 // pred_check_branch
      %123 = sbr.rel (0) target = $region73
    $region72: #{decoder_block_with_expansion.1} parent=1 // pred_region
      %124 = dma.done [#allocation5], 512
    $region73: #{decoder_block_with_expansion.1} parent=1 // pred_fallthru
      _
    // Predicated region
    $region74: #{decoder_block_with_expansion.1} parent=1 // pred_check
      _
    $region75: #{decoder_block_with_expansion.1} parent=1 // pred_check_branch
      %126 = sbr.rel (0) target = $region77
    $region76: #{decoder_block_with_expansion.1} parent=1 // pred_region
      %127 = dma.done [#allocation8], 512
    $region77: #{decoder_block_with_expansion.1} parent=1 // pred_fallthru
      _
    // Predicated region
    $region78: #{decoder_block_with_expansion.1} parent=1 // pred_check
      _
    $region79: #{decoder_block_with_expansion.1} parent=1 // pred_check_branch
      %129 = sbr.rel (0) target = $region81
    $region80: #{decoder_block_with_expansion.1} parent=1 // pred_region
      %130 = dma.done [#allocation8], 512
    $region81: #{decoder_block_with_expansion.1} parent=1 // pred_fallthru
      _
    // Predicated region
    $region82: #{decoder_block_with_expansion.1} parent=1 // pred_check
      _
    $region83: #{decoder_block_with_expansion.1} parent=1 // pred_check_branch
      %132 = sbr.rel (0) target = $region85
    $region84: #{decoder_block_with_expansion.1} parent=1 // pred_region
      %133 = dma.done [#allocation11], 512
    $region85: #{decoder_block_with_expansion.1} parent=1 // pred_fallthru
      _
    %v134 = vld [vmem:[#allocation2] sm:$0xff]
    %v135 = vld [vmem:[#allocation2 + $0x8] sm:$0xff]
    %v136 = vld [vmem:[%s2] sm:$0x1]
    %v137 = vld [vmem:[%s3] sm:$0x1]
    %vm138 = vcmask 261120
    %v139 = vsel %vm138, %v134, 0.0
    %140 = vadd.xlane.f32.xlu0 %v139
    %v141 = vpop.xlane.xlu0 %140
    %v142 = vsel %vm138, %v135, 0.0
    %143 = vadd.xlane.f32.xlu0 %v142
    %v144 = vpop.xlane.xlu0 %143
    %v145 = vrcp.pop 32.0
    %v146 = vmul.f32 %v141, %v145
    %v147 = vmul.f32 %v144, %v145
    %v148 = vsub.f32 %v134, %v146
    %v149 = vsub.f32 %v135, %v147
    %v150 = vmul.f32 %v148, %v148
    %v151 = vmul.f32 %v149, %v149
    %v152 = vsel %vm138, %v150, 0.0
    %153 = vadd.xlane.f32.xlu0 %v152
    %v154 = vpop.xlane.xlu0 %153
    %v155 = vsel %vm138, %v151, 0.0
    %156 = vadd.xlane.f32.xlu0 %v155
    %v157 = vpop.xlane.xlu0 %156
    %v158 = vmul.f32 %v154, %v145
    %v159 = vmul.f32 %v157, %v145
    %v160 = vadd.f32 %v158, 1e-05
    %v161 = vadd.f32 %v159, 1e-05
    %v162 = vrsqrt.pop %v160
    %v163 = vrsqrt.pop %v161
    %v164 = vmul.f32 %v148, %v162
    %v165 = vmul.f32 %v149, %v163
    %v167 = vlaneseq
    %v168 = vshrl.u32 %v167, 7
    %v169 = vsub.s32 0, %v168
    %v170 = vrot.slane %v136, %v169
    %v172 = vmul.f32 %v164, %v170
    %v173 = vmul.f32 %v165, %v170
    %v175 = vlaneseq
    %v176 = vshrl.u32 %v175, 7
    %v177 = vsub.s32 0, %v176
    %v178 = vrot.slane %v137, %v177
    %v180 = vadd.f32 %v172, %v178
    %v181 = vadd.f32 %v173, %v178
    %v182 = vld [vmem:[#allocation6] sm:$0xff]
    %v183 = vld [vmem:[#allocation6 + $0x8] sm:$0xff]
    %v184 = vld [vmem:[#allocation6 + $0x10] sm:$0xff]
    %v185 = vld [vmem:[#allocation6 + $0x18] sm:$0xff]
    %v187 = vsel %vm138, %v180, 0
    %v190 = vsel %vm138, %v181, 0
    %192 = vmatprep.subr.mxu0 0.0
    %193 = vmatpush1.msra.mxu0 0.0
    %194 = vmatprep.subr.mxu0 0.0
    %195 = vmatpush1.msra.mxu0 0.0
    %196 = vmatprep.subr.mxu0 0.0
    %197 = vmatpush1.msra.mxu0 0.0
    %198 = vmatprep.subr.mxu0 0.0
    %199 = vmatpush1.msra.mxu0 0.0
    %200 = vmatprep.subr.mxu0 0.0
    %201 = vmatpush1.msra.mxu0 0.0
    %202 = vmatprep.subr.mxu0 0.0
    %203 = vmatpush1.msra.mxu0 0.0
    %204 = vmatprep.subr.mxu0 0.0
    %205 = vmatpush1.msra.mxu0 0.0
    %206 = vmatprep.subr.mxu0 0.0
    %207 = vmatpush1.msra.mxu0 0.0
    %208 = vmatprep.subr.mxu0 0.0
    %209 = vmatpush1.msra.mxu0 0.0
    %210 = vmatprep.subr.mxu0 0.0
    %211 = vmatpush1.msra.mxu0 0.0
    %212 = vmatprep.subr.mxu0 0.0
    %213 = vmatpush1.msra.mxu0 0.0
    %214 = vmatprep.subr.mxu0 0.0
    %215 = vmatpush1.msra.mxu0 0.0
    %216 = vmatprep.subr.mxu0 0.0
    %217 = vmatpush1.msra.mxu0 %v185
    %218 = vmatprep.subr.mxu0 0.0
    %219 = vmatpush1.msra.mxu0 %v184
    %220 = vmatprep.subr.mxu0 0.0
    %221 = vmatpush1.msra.mxu0 %v183
    %222 = vmatprep.subr.mxu0 0.0
    %223 = vmatpush1.msra.mxu0 %v182
    %224 = vmatprep.subr.mxu0 0.0
    %225 = vmatpush2.msra.mxu0 0.0
    %226 = vmatprep.subr.mxu0 0.0
    %227 = vmatpush2.msra.mxu0 0.0
    %228 = vmatprep.subr.mxu0 0.0
    %229 = vmatpush2.msra.mxu0 0.0
    %230 = vmatprep.subr.mxu0 0.0
    %231 = vmatpush2.msra.mxu0 0.0
    %232 = vmatprep.subr.mxu0 0.0
    %233 = vmatpush2.msra.mxu0 0.0
    %234 = vmatprep.subr.mxu0 0.0
    %235 = vmatpush2.msra.mxu0 0.0
    %236 = vmatprep.subr.mxu0 0.0
    %237 = vmatpush2.msra.mxu0 0.0
    %238 = vmatprep.subr.mxu0 0.0
    %239 = vmatpush2.msra.mxu0 0.0
    %240 = vmatprep.subr.mxu0 0.0
    %241 = vmatpush2.msra.mxu0 0.0
    %242 = vmatprep.subr.mxu0 0.0
    %243 = vmatpush2.msra.mxu0 0.0
    %244 = vmatprep.subr.mxu0 0.0
    %245 = vmatpush2.msra.mxu0 0.0
    %246 = vmatprep.subr.mxu0 0.0
    %247 = vmatpush2.msra.mxu0 0.0
    %248 = vmatprep.subr.mxu0 0.0
    %249 = vmatpush2.msra.mxu0 0.0
    %250 = vmatprep.subr.mxu0 0.0
    %251 = vmatpush2.msra.mxu0 0.0
    %252 = vmatprep.subr.mxu0 0.0
    %253 = vmatpush2.msra.mxu0 0.0
    %254 = vmatprep.subr.mxu0 0.0
    %255 = vmatpush2.msra.mxu0 0.0
    %256 = vmatprep.mubr.f32.mxu0 0.0
    %257 = vmatmul.mubr.f32.gmra.mxu0 %v187
    %v258 = vpop.f32.mrf.mxu0
    %v259 = vadd.f32 0.0, %v258
    %v260 = vpop.f32.mrf.mxu0
    %261 = vmatprep.mubr.f32.mxu0 0.0
    %262 = vmatmul.mubr.f32.gmra.mxu0 %v190
    %v263 = vpop.f32.mrf.mxu0
    %v264 = vadd.f32 0.0, %v263
    %v265 = vpop.f32.mrf.mxu0
    %266 = vdwg.mxu0
    %268 = vrot.lane.b32.xlu0 %v259, 96
    %v269 = vpop.permute.xlu0 %268
    %vm270 = vcmask 64512
    %v271 = vsel %vm270, %v259, 0
    %v273 = vsel %vm270, %v269, 0
    %275 = vmatprep.subr.mxu0 0.0
    %276 = vmatpush1.xpose.msra.mxu0 0.0
    %277 = vmatprep.subr.mxu0 0.0
    %278 = vmatpush1.xpose.msra.mxu0 0.0
    %279 = vmatprep.subr.mxu0 0.0
    %280 = vmatpush1.xpose.msra.mxu0 0.0
    %281 = vmatprep.subr.mxu0 0.0
    %282 = vmatpush1.xpose.msra.mxu0 0.0
    %283 = vmatprep.subr.mxu0 0.0
    %284 = vmatpush1.xpose.msra.mxu0 0.0
    %285 = vmatprep.subr.mxu0 0.0
    %286 = vmatpush1.xpose.msra.mxu0 0.0
    %287 = vmatprep.subr.mxu0 0.0
    %288 = vmatpush1.xpose.msra.mxu0 0.0
    %289 = vmatprep.subr.mxu0 0.0
    %290 = vmatpush1.xpose.msra.mxu0 0.0
    %291 = vmatprep.subr.mxu0 0.0
    %292 = vmatpush1.xpose.msra.mxu0 0.0
    %293 = vmatprep.subr.mxu0 0.0
    %294 = vmatpush1.xpose.msra.mxu0 0.0
    %295 = vmatprep.subr.mxu0 0.0
    %296 = vmatpush1.xpose.msra.mxu0 0.0
    %297 = vmatprep.subr.mxu0 0.0
    %298 = vmatpush1.xpose.msra.mxu0 0.0
    %299 = vmatprep.subr.mxu0 0.0
    %300 = vmatpush1.xpose.msra.mxu0 0.0
    %301 = vmatprep.subr.mxu0 0.0
    %302 = vmatpush1.xpose.msra.mxu0 0.0
    %303 = vmatprep.subr.mxu0 0.0
    %304 = vmatpush1.xpose.msra.mxu0 0.0
    %305 = vmatprep.subr.mxu0 0.0
    %306 = vmatpush1.xpose.msra.mxu0 %v273
    %307 = vmatprep.subr.mxu0 0.0
    %308 = vmatpush2.xpose.msra.mxu0 0.0
    %309 = vmatprep.subr.mxu0 0.0
    %310 = vmatpush2.xpose.msra.mxu0 0.0
    %311 = vmatprep.subr.mxu0 0.0
    %312 = vmatpush2.xpose.msra.mxu0 0.0
    %313 = vmatprep.subr.mxu0 0.0
    %314 = vmatpush2.xpose.msra.mxu0 0.0
    %315 = vmatprep.subr.mxu0 0.0
    %316 = vmatpush2.xpose.msra.mxu0 0.0
    %317 = vmatprep.subr.mxu0 0.0
    %318 = vmatpush2.xpose.msra.mxu0 0.0
    %319 = vmatprep.subr.mxu0 0.0
    %320 = vmatpush2.xpose.msra.mxu0 0.0
    %321 = vmatprep.subr.mxu0 0.0
    %322 = vmatpush2.xpose.msra.mxu0 0.0
    %323 = vmatprep.subr.mxu0 0.0
    %324 = vmatpush2.xpose.msra.mxu0 0.0
    %325 = vmatprep.subr.mxu0 0.0
    %326 = vmatpush2.xpose.msra.mxu0 0.0
    %327 = vmatprep.subr.mxu0 0.0
    %328 = vmatpush2.xpose.msra.mxu0 0.0
    %329 = vmatprep.subr.mxu0 0.0
    %330 = vmatpush2.xpose.msra.mxu0 0.0
    %331 = vmatprep.subr.mxu0 0.0
    %332 = vmatpush2.xpose.msra.mxu0 0.0
    %333 = vmatprep.subr.mxu0 0.0
    %334 = vmatpush2.xpose.msra.mxu0 0.0
    %335 = vmatprep.subr.mxu0 0.0
    %336 = vmatpush2.xpose.msra.mxu0 0.0
    %337 = vmatprep.subr.mxu0 0.0
    %338 = vmatpush2.xpose.msra.mxu0 0.0
    %339 = vmatprep.mubr.f32.mxu0 0.0
    %340 = vmatmul.mubr.f32.gmra.mxu0 %v271
    %v341 = vpop.f32.mrf.mxu0
    %v342 = vadd.f32 0.0, %v341
    %v343 = vpop.f32.mrf.mxu0
    %344 = vdwg.mxu0
    %v345 = vsel %vm270, %v342, -inf
    %346 = vmax.xlane.f32.xlu0 %v345
    %v347 = vpop.xlane.xlu0 %346
    %v348 = vsub.f32 %v342, %v347
    %v349 = vmul.f32 %v348, 1.442695
    %v350 = vpow.pop %v349
    %v351 = vsel %vm270, %v350, 0.0
    %352 = vadd.xlane.f32.xlu0 %v351
    %v353 = vpop.xlane.xlu0 %352
    %v354 = vrcp.pop %v353
    %v355 = vmul.f32 %v350, %v354
    %356 = vrot.lane.b32.xlu0 %v259, 64
    %v357 = vpop.permute.xlu0 %356
    %v360 = vsel %vm270, %v355, 0
    %362 = vmatprep.subr.mxu0 0.0
    %363 = vmatpush1.msra.mxu0 0.0
    %364 = vmatprep.subr.mxu0 0.0
    %365 = vmatpush1.msra.mxu0 0.0
    %366 = vmatprep.subr.mxu0 0.0
    %367 = vmatpush1.msra.mxu0 0.0
    %368 = vmatprep.subr.mxu0 0.0
    %369 = vmatpush1.msra.mxu0 0.0
    %370 = vmatprep.subr.mxu0 0.0
    %371 = vmatpush1.msra.mxu0 0.0
    %372 = vmatprep.subr.mxu0 0.0
    %373 = vmatpush1.msra.mxu0 0.0
    %374 = vmatprep.subr.mxu0 0.0
    %375 = vmatpush1.msra.mxu0 0.0
    %376 = vmatprep.subr.mxu0 0.0
    %377 = vmatpush1.msra.mxu0 0.0
    %378 = vmatprep.subr.mxu0 0.0
    %379 = vmatpush1.msra.mxu0 0.0
    %380 = vmatprep.subr.mxu0 0.0
    %381 = vmatpush1.msra.mxu0 0.0
    %382 = vmatprep.subr.mxu0 0.0
    %383 = vmatpush1.msra.mxu0 0.0
    %384 = vmatprep.subr.mxu0 0.0
    %385 = vmatpush1.msra.mxu0 0.0
    %386 = vmatprep.subr.mxu0 0.0
    %387 = vmatpush1.msra.mxu0 0.0
    %388 = vmatprep.subr.mxu0 0.0
    %389 = vmatpush1.msra.mxu0 0.0
    %390 = vmatprep.subr.mxu0 0.0
    %391 = vmatpush1.msra.mxu0 0.0
    %392 = vmatprep.subr.mxu0 0.0
    %393 = vmatpush1.msra.mxu0 %v357
    %394 = vmatprep.subr.mxu0 0.0
    %395 = vmatpush2.msra.mxu0 0.0
    %396 = vmatprep.subr.mxu0 0.0
    %397 = vmatpush2.msra.mxu0 0.0
    %398 = vmatprep.subr.mxu0 0.0
    %399 = vmatpush2.msra.mxu0 0.0
    %400 = vmatprep.subr.mxu0 0.0
    %401 = vmatpush2.msra.mxu0 0.0
    %402 = vmatprep.subr.mxu0 0.0
    %403 = vmatpush2.msra.mxu0 0.0
    %404 = vmatprep.subr.mxu0 0.0
    %405 = vmatpush2.msra.mxu0 0.0
    %406 = vmatprep.subr.mxu0 0.0
    %407 = vmatpush2.msra.mxu0 0.0
    %408 = vmatprep.subr.mxu0 0.0
    %409 = vmatpush2.msra.mxu0 0.0
    %410 = vmatprep.subr.mxu0 0.0
    %411 = vmatpush2.msra.mxu0 0.0
    %412 = vmatprep.subr.mxu0 0.0
    %413 = vmatpush2.msra.mxu0 0.0
    %414 = vmatprep.subr.mxu0 0.0
    %415 = vmatpush2.msra.mxu0 0.0
    %416 = vmatprep.subr.mxu0 0.0
    %417 = vmatpush2.msra.mxu0 0.0
    %418 = vmatprep.subr.mxu0 0.0
    %419 = vmatpush2.msra.mxu0 0.0
    %420 = vmatprep.subr.mxu0 0.0
    %421 = vmatpush2.msra.mxu0 0.0
    %422 = vmatprep.subr.mxu0 0.0
    %423 = vmatpush2.msra.mxu0 0.0
    %424 = vmatprep.subr.mxu0 0.0
    %425 = vmatpush2.msra.mxu0 0.0
    %426 = vmatprep.mubr.f32.mxu0 0.0
    %427 = vmatmul.mubr.f32.gmra.mxu0 %v360
    %v428 = vpop.f32.mrf.mxu0
    %v429 = vadd.f32 0.0, %v428
    %v430 = vpop.f32.mrf.mxu0
    %431 = vdwg.mxu0
    %432 = vrot.lane.b32.xlu0 %v259, 120
    %v433 = vpop.permute.xlu0 %432
    %434 = vrot.lane.b32.xlu0 %v259, 88
    %v435 = vpop.permute.xlu0 %434
    %v436 = vsel %vm270, %v433, 0
    %v438 = vsel %vm270, %v435, 0
    %440 = vmatprep.subr.mxu0 0.0
    %441 = vmatpush1.xpose.msra.mxu0 0.0
    %442 = vmatprep.subr.mxu0 0.0
    %443 = vmatpush1.xpose.msra.mxu0 0.0
    %444 = vmatprep.subr.mxu0 0.0
    %445 = vmatpush1.xpose.msra.mxu0 0.0
    %446 = vmatprep.subr.mxu0 0.0
    %447 = vmatpush1.xpose.msra.mxu0 0.0
    %448 = vmatprep.subr.mxu0 0.0
    %449 = vmatpush1.xpose.msra.mxu0 0.0
    %450 = vmatprep.subr.mxu0 0.0
    %451 = vmatpush1.xpose.msra.mxu0 0.0
    %452 = vmatprep.subr.mxu0 0.0
    %453 = vmatpush1.xpose.msra.mxu0 0.0
    %454 = vmatprep.subr.mxu0 0.0
    %455 = vmatpush1.xpose.msra.mxu0 0.0
    %456 = vmatprep.subr.mxu0 0.0
    %457 = vmatpush1.xpose.msra.mxu0 0.0
    %458 = vmatprep.subr.mxu0 0.0
    %459 = vmatpush1.xpose.msra.mxu0 0.0
    %460 = vmatprep.subr.mxu0 0.0
    %461 = vmatpush1.xpose.msra.mxu0 0.0
    %462 = vmatprep.subr.mxu0 0.0
    %463 = vmatpush1.xpose.msra.mxu0 0.0
    %464 = vmatprep.subr.mxu0 0.0
    %465 = vmatpush1.xpose.msra.mxu0 0.0
    %466 = vmatprep.subr.mxu0 0.0
    %467 = vmatpush1.xpose.msra.mxu0 0.0
    %468 = vmatprep.subr.mxu0 0.0
    %469 = vmatpush1.xpose.msra.mxu0 0.0
    %470 = vmatprep.subr.mxu0 0.0
    %471 = vmatpush1.xpose.msra.mxu0 %v438
    %472 = vmatprep.subr.mxu0 0.0
    %473 = vmatpush2.xpose.msra.mxu0 0.0
    %474 = vmatprep.subr.mxu0 0.0
    %475 = vmatpush2.xpose.msra.mxu0 0.0
    %476 = vmatprep.subr.mxu0 0.0
    %477 = vmatpush2.xpose.msra.mxu0 0.0
    %478 = vmatprep.subr.mxu0 0.0
    %479 = vmatpush2.xpose.msra.mxu0 0.0
    %480 = vmatprep.subr.mxu0 0.0
    %481 = vmatpush2.xpose.msra.mxu0 0.0
    %482 = vmatprep.subr.mxu0 0.0
    %483 = vmatpush2.xpose.msra.mxu0 0.0
    %484 = vmatprep.subr.mxu0 0.0
    %485 = vmatpush2.xpose.msra.mxu0 0.0
    %486 = vmatprep.subr.mxu0 0.0
    %487 = vmatpush2.xpose.msra.mxu0 0.0
    %488 = vmatprep.subr.mxu0 0.0
    %489 = vmatpush2.xpose.msra.mxu0 0.0
    %490 = vmatprep.subr.mxu0 0.0
    %491 = vmatpush2.xpose.msra.mxu0 0.0
    %492 = vmatprep.subr.mxu0 0.0
    %493 = vmatpush2.xpose.msra.mxu0 0.0
    %494 = vmatprep.subr.mxu0 0.0
    %495 = vmatpush2.xpose.msra.mxu0 0.0
    %496 = vmatprep.subr.mxu0 0.0
    %497 = vmatpush2.xpose.msra.mxu0 0.0
    %498 = vmatprep.subr.mxu0 0.0
    %499 = vmatpush2.xpose.msra.mxu0 0.0
    %500 = vmatprep.subr.mxu0 0.0
    %501 = vmatpush2.xpose.msra.mxu0 0.0
    %502 = vmatprep.subr.mxu0 0.0
    %503 = vmatpush2.xpose.msra.mxu0 0.0
    %504 = vmatprep.mubr.f32.mxu0 0.0
    %505 = vmatmul.mubr.f32.gmra.mxu0 %v436
    %v506 = vpop.f32.mrf.mxu0
    %v507 = vadd.f32 0.0, %v506
    %v508 = vpop.f32.mrf.mxu0
    %509 = vdwg.mxu0
    %v510 = vsel %vm270, %v507, -inf
    %511 = vmax.xlane.f32.xlu0 %v510
    %v512 = vpop.xlane.xlu0 %511
    %v513 = vsub.f32 %v507, %v512
    %v514 = vmul.f32 %v513, 1.442695
    %v515 = vpow.pop %v514
    %v516 = vsel %vm270, %v515, 0.0
    %517 = vadd.xlane.f32.xlu0 %v516
    %v518 = vpop.xlane.xlu0 %517
    %v519 = vrcp.pop %v518
    %v520 = vmul.f32 %v515, %v519
    %521 = vrot.lane.b32.xlu0 %v259, 56
    %v522 = vpop.permute.xlu0 %521
    %v525 = vsel %vm270, %v520, 0
    %527 = vmatprep.subr.mxu0 0.0
    %528 = vmatpush1.msra.mxu0 0.0
    %529 = vmatprep.subr.mxu0 0.0
    %530 = vmatpush1.msra.mxu0 0.0
    %531 = vmatprep.subr.mxu0 0.0
    %532 = vmatpush1.msra.mxu0 0.0
    %533 = vmatprep.subr.mxu0 0.0
    %534 = vmatpush1.msra.mxu0 0.0
    %535 = vmatprep.subr.mxu0 0.0
    %536 = vmatpush1.msra.mxu0 0.0
    %537 = vmatprep.subr.mxu0 0.0
    %538 = vmatpush1.msra.mxu0 0.0
    %539 = vmatprep.subr.mxu0 0.0
    %540 = vmatpush1.msra.mxu0 0.0
    %541 = vmatprep.subr.mxu0 0.0
    %542 = vmatpush1.msra.mxu0 0.0
    %543 = vmatprep.subr.mxu0 0.0
    %544 = vmatpush1.msra.mxu0 0.0
    %545 = vmatprep.subr.mxu0 0.0
    %546 = vmatpush1.msra.mxu0 0.0
    %547 = vmatprep.subr.mxu0 0.0
    %548 = vmatpush1.msra.mxu0 0.0
    %549 = vmatprep.subr.mxu0 0.0
    %550 = vmatpush1.msra.mxu0 0.0
    %551 = vmatprep.subr.mxu0 0.0
    %552 = vmatpush1.msra.mxu0 0.0
    %553 = vmatprep.subr.mxu0 0.0
    %554 = vmatpush1.msra.mxu0 0.0
    %555 = vmatprep.subr.mxu0 0.0
    %556 = vmatpush1.msra.mxu0 0.0
    %557 = vmatprep.subr.mxu0 0.0
    %558 = vmatpush1.msra.mxu0 %v522
    %559 = vmatprep.subr.mxu0 0.0
    %560 = vmatpush2.msra.mxu0 0.0
    %561 = vmatprep.subr.mxu0 0.0
    %562 = vmatpush2.msra.mxu0 0.0
    %563 = vmatprep.subr.mxu0 0.0
    %564 = vmatpush2.msra.mxu0 0.0
    %565 = vmatprep.subr.mxu0 0.0
    %566 = vmatpush2.msra.mxu0 0.0
    %567 = vmatprep.subr.mxu0 0.0
    %568 = vmatpush2.msra.mxu0 0.0
    %569 = vmatprep.subr.mxu0 0.0
    %570 = vmatpush2.msra.mxu0 0.0
    %571 = vmatprep.subr.mxu0 0.0
    %572 = vmatpush2.msra.mxu0 0.0
    %573 = vmatprep.subr.mxu0 0.0
    %574 = vmatpush2.msra.mxu0 0.0
    %575 = vmatprep.subr.mxu0 0.0
    %576 = vmatpush2.msra.mxu0 0.0
    %577 = vmatprep.subr.mxu0 0.0
    %578 = vmatpush2.msra.mxu0 0.0
    %579 = vmatprep.subr.mxu0 0.0
    %580 = vmatpush2.msra.mxu0 0.0
    %581 = vmatprep.subr.mxu0 0.0
    %582 = vmatpush2.msra.mxu0 0.0
    %583 = vmatprep.subr.mxu0 0.0
    %584 = vmatpush2.msra.mxu0 0.0
    %585 = vmatprep.subr.mxu0 0.0
    %586 = vmatpush2.msra.mxu0 0.0
    %587 = vmatprep.subr.mxu0 0.0
    %588 = vmatpush2.msra.mxu0 0.0
    %589 = vmatprep.subr.mxu0 0.0
    %590 = vmatpush2.msra.mxu0 0.0
    %591 = vmatprep.mubr.f32.mxu0 0.0
    %592 = vmatmul.mubr.f32.gmra.mxu0 %v525
    %v593 = vpop.f32.mrf.mxu0
    %v594 = vadd.f32 0.0, %v593
    %v595 = vpop.f32.mrf.mxu0
    %596 = vdwg.mxu0
    %597 = vrot.lane.b32.xlu0 %v259, 112
    %v598 = vpop.permute.xlu0 %597
    %599 = vrot.lane.b32.xlu0 %v259, 80
    %v600 = vpop.permute.xlu0 %599
    %v601 = vsel %vm270, %v598, 0
    %v603 = vsel %vm270, %v600, 0
    %605 = vmatprep.subr.mxu0 0.0
    %606 = vmatpush1.xpose.msra.mxu0 0.0
    %607 = vmatprep.subr.mxu0 0.0
    %608 = vmatpush1.xpose.msra.mxu0 0.0
    %609 = vmatprep.subr.mxu0 0.0
    %610 = vmatpush1.xpose.msra.mxu0 0.0
    %611 = vmatprep.subr.mxu0 0.0
    %612 = vmatpush1.xpose.msra.mxu0 0.0
    %613 = vmatprep.subr.mxu0 0.0
    %614 = vmatpush1.xpose.msra.mxu0 0.0
    %615 = vmatprep.subr.mxu0 0.0
    %616 = vmatpush1.xpose.msra.mxu0 0.0
    %617 = vmatprep.subr.mxu0 0.0
    %618 = vmatpush1.xpose.msra.mxu0 0.0
    %619 = vmatprep.subr.mxu0 0.0
    %620 = vmatpush1.xpose.msra.mxu0 0.0
    %621 = vmatprep.subr.mxu0 0.0
    %622 = vmatpush1.xpose.msra.mxu0 0.0
    %623 = vmatprep.subr.mxu0 0.0
    %624 = vmatpush1.xpose.msra.mxu0 0.0
    %625 = vmatprep.subr.mxu0 0.0
    %626 = vmatpush1.xpose.msra.mxu0 0.0
    %627 = vmatprep.subr.mxu0 0.0
    %628 = vmatpush1.xpose.msra.mxu0 0.0
    %629 = vmatprep.subr.mxu0 0.0
    %630 = vmatpush1.xpose.msra.mxu0 0.0
    %631 = vmatprep.subr.mxu0 0.0
    %632 = vmatpush1.xpose.msra.mxu0 0.0
    %633 = vmatprep.subr.mxu0 0.0
    %634 = vmatpush1.xpose.msra.mxu0 0.0
    %635 = vmatprep.subr.mxu0 0.0
    %636 = vmatpush1.xpose.msra.mxu0 %v603
    %637 = vmatprep.subr.mxu0 0.0
    %638 = vmatpush2.xpose.msra.mxu0 0.0
    %639 = vmatprep.subr.mxu0 0.0
    %640 = vmatpush2.xpose.msra.mxu0 0.0
    %641 = vmatprep.subr.mxu0 0.0
    %642 = vmatpush2.xpose.msra.mxu0 0.0
    %643 = vmatprep.subr.mxu0 0.0
    %644 = vmatpush2.xpose.msra.mxu0 0.0
    %645 = vmatprep.subr.mxu0 0.0
    %646 = vmatpush2.xpose.msra.mxu0 0.0
    %647 = vmatprep.subr.mxu0 0.0
    %648 = vmatpush2.xpose.msra.mxu0 0.0
    %649 = vmatprep.subr.mxu0 0.0
    %650 = vmatpush2.xpose.msra.mxu0 0.0
    %651 = vmatprep.subr.mxu0 0.0
    %652 = vmatpush2.xpose.msra.mxu0 0.0
    %653 = vmatprep.subr.mxu0 0.0
    %654 = vmatpush2.xpose.msra.mxu0 0.0
    %655 = vmatprep.subr.mxu0 0.0
    %656 = vmatpush2.xpose.msra.mxu0 0.0
    %657 = vmatprep.subr.mxu0 0.0
    %658 = vmatpush2.xpose.msra.mxu0 0.0
    %659 = vmatprep.subr.mxu0 0.0
    %660 = vmatpush2.xpose.msra.mxu0 0.0
    %661 = vmatprep.subr.mxu0 0.0
    %662 = vmatpush2.xpose.msra.mxu0 0.0
    %663 = vmatprep.subr.mxu0 0.0
    %664 = vmatpush2.xpose.msra.mxu0 0.0
    %665 = vmatprep.subr.mxu0 0.0
    %666 = vmatpush2.xpose.msra.mxu0 0.0
    %667 = vmatprep.subr.mxu0 0.0
    %668 = vmatpush2.xpose.msra.mxu0 0.0
    %669 = vmatprep.mubr.f32.mxu0 0.0
    %670 = vmatmul.mubr.f32.gmra.mxu0 %v601
    %v671 = vpop.f32.mrf.mxu0
    %v672 = vadd.f32 0.0, %v671
    %v673 = vpop.f32.mrf.mxu0
    %674 = vdwg.mxu0
    %v675 = vsel %vm270, %v672, -inf
    %676 = vmax.xlane.f32.xlu0 %v675
    %v677 = vpop.xlane.xlu0 %676
    %v678 = vsub.f32 %v672, %v677
    %v679 = vmul.f32 %v678, 1.442695
    %v680 = vpow.pop %v679
    %v681 = vsel %vm270, %v680, 0.0
    %682 = vadd.xlane.f32.xlu0 %v681
    %v683 = vpop.xlane.xlu0 %682
    %v684 = vrcp.pop %v683
    %v685 = vmul.f32 %v680, %v684
    %686 = vrot.lane.b32.xlu0 %v259, 48
    %v687 = vpop.permute.xlu0 %686
    %v690 = vsel %vm270, %v685, 0
    %692 = vmatprep.subr.mxu0 0.0
    %693 = vmatpush1.msra.mxu0 0.0
    %694 = vmatprep.subr.mxu0 0.0
    %695 = vmatpush1.msra.mxu0 0.0
    %696 = vmatprep.subr.mxu0 0.0
    %697 = vmatpush1.msra.mxu0 0.0
    %698 = vmatprep.subr.mxu0 0.0
    %699 = vmatpush1.msra.mxu0 0.0
    %700 = vmatprep.subr.mxu0 0.0
    %701 = vmatpush1.msra.mxu0 0.0
    %702 = vmatprep.subr.mxu0 0.0
    %703 = vmatpush1.msra.mxu0 0.0
    %704 = vmatprep.subr.mxu0 0.0
    %705 = vmatpush1.msra.mxu0 0.0
    %706 = vmatprep.subr.mxu0 0.0
    %707 = vmatpush1.msra.mxu0 0.0
    %708 = vmatprep.subr.mxu0 0.0
    %709 = vmatpush1.msra.mxu0 0.0
    %710 = vmatprep.subr.mxu0 0.0
    %711 = vmatpush1.msra.mxu0 0.0
    %712 = vmatprep.subr.mxu0 0.0
    %713 = vmatpush1.msra.mxu0 0.0
    %714 = vmatprep.subr.mxu0 0.0
    %715 = vmatpush1.msra.mxu0 0.0
    %716 = vmatprep.subr.mxu0 0.0
    %717 = vmatpush1.msra.mxu0 0.0
    %718 = vmatprep.subr.mxu0 0.0
    %719 = vmatpush1.msra.mxu0 0.0
    %720 = vmatprep.subr.mxu0 0.0
    %721 = vmatpush1.msra.mxu0 0.0
    %722 = vmatprep.subr.mxu0 0.0
    %723 = vmatpush1.msra.mxu0 %v687
    %724 = vmatprep.subr.mxu0 0.0
    %725 = vmatpush2.msra.mxu0 0.0
    %726 = vmatprep.subr.mxu0 0.0
    %727 = vmatpush2.msra.mxu0 0.0
    %728 = vmatprep.subr.mxu0 0.0
    %729 = vmatpush2.msra.mxu0 0.0
    %730 = vmatprep.subr.mxu0 0.0
    %731 = vmatpush2.msra.mxu0 0.0
    %732 = vmatprep.subr.mxu0 0.0
    %733 = vmatpush2.msra.mxu0 0.0
    %734 = vmatprep.subr.mxu0 0.0
    %735 = vmatpush2.msra.mxu0 0.0
    %736 = vmatprep.subr.mxu0 0.0
    %737 = vmatpush2.msra.mxu0 0.0
    %738 = vmatprep.subr.mxu0 0.0
    %739 = vmatpush2.msra.mxu0 0.0
    %740 = vmatprep.subr.mxu0 0.0
    %741 = vmatpush2.msra.mxu0 0.0
    %742 = vmatprep.subr.mxu0 0.0
    %743 = vmatpush2.msra.mxu0 0.0
    %744 = vmatprep.subr.mxu0 0.0
    %745 = vmatpush2.msra.mxu0 0.0
    %746 = vmatprep.subr.mxu0 0.0
    %747 = vmatpush2.msra.mxu0 0.0
    %748 = vmatprep.subr.mxu0 0.0
    %749 = vmatpush2.msra.mxu0 0.0
    %750 = vmatprep.subr.mxu0 0.0
    %751 = vmatpush2.msra.mxu0 0.0
    %752 = vmatprep.subr.mxu0 0.0
    %753 = vmatpush2.msra.mxu0 0.0
    %754 = vmatprep.subr.mxu0 0.0
    %755 = vmatpush2.msra.mxu0 0.0
    %756 = vmatprep.mubr.f32.mxu0 0.0
    %757 = vmatmul.mubr.f32.gmra.mxu0 %v690
    %v758 = vpop.f32.mrf.mxu0
    %v759 = vadd.f32 0.0, %v758
    %v760 = vpop.f32.mrf.mxu0
    %761 = vdwg.mxu0
    %762 = vrot.lane.b32.xlu0 %v259, 104
    %v763 = vpop.permute.xlu0 %762
    %764 = vrot.lane.b32.xlu0 %v259, 72
    %v765 = vpop.permute.xlu0 %764
    %v766 = vsel %vm270, %v763, 0
    %v768 = vsel %vm270, %v765, 0
    %770 = vmatprep.subr.mxu0 0.0
    %771 = vmatpush1.xpose.msra.mxu0 0.0
    %772 = vmatprep.subr.mxu0 0.0
    %773 = vmatpush1.xpose.msra.mxu0 0.0
    %774 = vmatprep.subr.mxu0 0.0
    %775 = vmatpush1.xpose.msra.mxu0 0.0
    %776 = vmatprep.subr.mxu0 0.0
    %777 = vmatpush1.xpose.msra.mxu0 0.0
    %778 = vmatprep.subr.mxu0 0.0
    %779 = vmatpush1.xpose.msra.mxu0 0.0
    %780 = vmatprep.subr.mxu0 0.0
    %781 = vmatpush1.xpose.msra.mxu0 0.0
    %782 = vmatprep.subr.mxu0 0.0
    %783 = vmatpush1.xpose.msra.mxu0 0.0
    %784 = vmatprep.subr.mxu0 0.0
    %785 = vmatpush1.xpose.msra.mxu0 0.0
    %786 = vmatprep.subr.mxu0 0.0
    %787 = vmatpush1.xpose.msra.mxu0 0.0
    %788 = vmatprep.subr.mxu0 0.0
    %789 = vmatpush1.xpose.msra.mxu0 0.0
    %790 = vmatprep.subr.mxu0 0.0
    %791 = vmatpush1.xpose.msra.mxu0 0.0
    %792 = vmatprep.subr.mxu0 0.0
    %793 = vmatpush1.xpose.msra.mxu0 0.0
    %794 = vmatprep.subr.mxu0 0.0
    %795 = vmatpush1.xpose.msra.mxu0 0.0
    %796 = vmatprep.subr.mxu0 0.0
    %797 = vmatpush1.xpose.msra.mxu0 0.0
    %798 = vmatprep.subr.mxu0 0.0
    %799 = vmatpush1.xpose.msra.mxu0 0.0
    %800 = vmatprep.subr.mxu0 0.0
    %801 = vmatpush1.xpose.msra.mxu0 %v768
    %802 = vmatprep.subr.mxu0 0.0
    %803 = vmatpush2.xpose.msra.mxu0 0.0
    %804 = vmatprep.subr.mxu0 0.0
    %805 = vmatpush2.xpose.msra.mxu0 0.0
    %806 = vmatprep.subr.mxu0 0.0
    %807 = vmatpush2.xpose.msra.mxu0 0.0
    %808 = vmatprep.subr.mxu0 0.0
    %809 = vmatpush2.xpose.msra.mxu0 0.0
    %810 = vmatprep.subr.mxu0 0.0
    %811 = vmatpush2.xpose.msra.mxu0 0.0
    %812 = vmatprep.subr.mxu0 0.0
    %813 = vmatpush2.xpose.msra.mxu0 0.0
    %814 = vmatprep.subr.mxu0 0.0
    %815 = vmatpush2.xpose.msra.mxu0 0.0
    %816 = vmatprep.subr.mxu0 0.0
    %817 = vmatpush2.xpose.msra.mxu0 0.0
    %818 = vmatprep.subr.mxu0 0.0
    %819 = vmatpush2.xpose.msra.mxu0 0.0
    %820 = vmatprep.subr.mxu0 0.0
    %821 = vmatpush2.xpose.msra.mxu0 0.0
    %822 = vmatprep.subr.mxu0 0.0
    %823 = vmatpush2.xpose.msra.mxu0 0.0
    %824 = vmatprep.subr.mxu0 0.0
    %825 = vmatpush2.xpose.msra.mxu0 0.0
    %826 = vmatprep.subr.mxu0 0.0
    %827 = vmatpush2.xpose.msra.mxu0 0.0
    %828 = vmatprep.subr.mxu0 0.0
    %829 = vmatpush2.xpose.msra.mxu0 0.0
    %830 = vmatprep.subr.mxu0 0.0
    %831 = vmatpush2.xpose.msra.mxu0 0.0
    %832 = vmatprep.subr.mxu0 0.0
    %833 = vmatpush2.xpose.msra.mxu0 0.0
    %834 = vmatprep.mubr.f32.mxu0 0.0
    %835 = vmatmul.mubr.f32.gmra.mxu0 %v766
    %v836 = vpop.f32.mrf.mxu0
    %v837 = vadd.f32 0.0, %v836
    %v838 = vpop.f32.mrf.mxu0
    %839 = vdwg.mxu0
    %v840 = vsel %vm270, %v837, -inf
    %841 = vmax.xlane.f32.xlu0 %v840
    %v842 = vpop.xlane.xlu0 %841
    %v843 = vsub.f32 %v837, %v842
    %v844 = vmul.f32 %v843, 1.442695
    %v845 = vpow.pop %v844
    %v846 = vsel %vm270, %v845, 0.0
    %847 = vadd.xlane.f32.xlu0 %v846
    %v848 = vpop.xlane.xlu0 %847
    %v849 = vrcp.pop %v848
    %v850 = vmul.f32 %v845, %v849
    %851 = vrot.lane.b32.xlu0 %v259, 40
    %v852 = vpop.permute.xlu0 %851
    %v855 = vsel %vm270, %v850, 0
    %857 = vmatprep.subr.mxu0 0.0
    %858 = vmatpush1.msra.mxu0 0.0
    %859 = vmatprep.subr.mxu0 0.0
    %860 = vmatpush1.msra.mxu0 0.0
    %861 = vmatprep.subr.mxu0 0.0
    %862 = vmatpush1.msra.mxu0 0.0
    %863 = vmatprep.subr.mxu0 0.0
    %864 = vmatpush1.msra.mxu0 0.0
    %865 = vmatprep.subr.mxu0 0.0
    %866 = vmatpush1.msra.mxu0 0.0
    %867 = vmatprep.subr.mxu0 0.0
    %868 = vmatpush1.msra.mxu0 0.0
    %869 = vmatprep.subr.mxu0 0.0
    %870 = vmatpush1.msra.mxu0 0.0
    %871 = vmatprep.subr.mxu0 0.0
    %872 = vmatpush1.msra.mxu0 0.0
    %873 = vmatprep.subr.mxu0 0.0
    %874 = vmatpush1.msra.mxu0 0.0
    %875 = vmatprep.subr.mxu0 0.0
    %876 = vmatpush1.msra.mxu0 0.0
    %877 = vmatprep.subr.mxu0 0.0
    %878 = vmatpush1.msra.mxu0 0.0
    %879 = vmatprep.subr.mxu0 0.0
    %880 = vmatpush1.msra.mxu0 0.0
    %881 = vmatprep.subr.mxu0 0.0
    %882 = vmatpush1.msra.mxu0 0.0
    %883 = vmatprep.subr.mxu0 0.0
    %884 = vmatpush1.msra.mxu0 0.0
    %885 = vmatprep.subr.mxu0 0.0
    %886 = vmatpush1.msra.mxu0 0.0
    %887 = vmatprep.subr.mxu0 0.0
    %888 = vmatpush1.msra.mxu0 %v852
    %889 = vmatprep.subr.mxu0 0.0
    %890 = vmatpush2.msra.mxu0 0.0
    %891 = vmatprep.subr.mxu0 0.0
    %892 = vmatpush2.msra.mxu0 0.0
    %893 = vmatprep.subr.mxu0 0.0
    %894 = vmatpush2.msra.mxu0 0.0
    %895 = vmatprep.subr.mxu0 0.0
    %896 = vmatpush2.msra.mxu0 0.0
    %897 = vmatprep.subr.mxu0 0.0
    %898 = vmatpush2.msra.mxu0 0.0
    %899 = vmatprep.subr.mxu0 0.0
    %900 = vmatpush2.msra.mxu0 0.0
    %901 = vmatprep.subr.mxu0 0.0
    %902 = vmatpush2.msra.mxu0 0.0
    %903 = vmatprep.subr.mxu0 0.0
    %904 = vmatpush2.msra.mxu0 0.0
    %905 = vmatprep.subr.mxu0 0.0
    %906 = vmatpush2.msra.mxu0 0.0
    %907 = vmatprep.subr.mxu0 0.0
    %908 = vmatpush2.msra.mxu0 0.0
    %909 = vmatprep.subr.mxu0 0.0
    %910 = vmatpush2.msra.mxu0 0.0
    %911 = vmatprep.subr.mxu0 0.0
    %912 = vmatpush2.msra.mxu0 0.0
    %913 = vmatprep.subr.mxu0 0.0
    %914 = vmatpush2.msra.mxu0 0.0
    %915 = vmatprep.subr.mxu0 0.0
    %916 = vmatpush2.msra.mxu0 0.0
    %917 = vmatprep.subr.mxu0 0.0
    %918 = vmatpush2.msra.mxu0 0.0
    %919 = vmatprep.subr.mxu0 0.0
    %920 = vmatpush2.msra.mxu0 0.0
    %921 = vmatprep.mubr.f32.mxu0 0.0
    %922 = vmatmul.mubr.f32.gmra.mxu0 %v855
    %v923 = vpop.f32.mrf.mxu0
    %v924 = vadd.f32 0.0, %v923
    %v925 = vpop.f32.mrf.mxu0
    %926 = vdwg.mxu0
    %928 = vrot.lane.b32.xlu0 %v507, 8
    %v929 = vpop.permute.xlu0 %928
    %932 = vrot.lane.b32.xlu0 %v672, 16
    %v933 = vpop.permute.xlu0 %932
    %936 = vrot.lane.b32.xlu0 %v837, 24
    %v937 = vpop.permute.xlu0 %936
    %v939 = vsel %vm270, %v342, %v929
    %vm940 = vcmask 130048
    %v941 = vsel %vm940, %v939, %v933
    %vm942 = vcmask 195584
    %v943 = vsel %vm942, %v941, %v937
    %945 = vrot.lane.b32.xlu0 %v594, 8
    %v946 = vpop.permute.xlu0 %945
    %949 = vrot.lane.b32.xlu0 %v759, 16
    %v950 = vpop.permute.xlu0 %949
    %953 = vrot.lane.b32.xlu0 %v924, 24
    %v954 = vpop.permute.xlu0 %953
    %v956 = vsel %vm270, %v429, %v946
    %v957 = vsel %vm940, %v956, %v950
    %v958 = vsel %vm942, %v957, %v954
    %960 = vrot.lane.b32.xlu0 %v264, 96
    %v961 = vpop.permute.xlu0 %960
    %v962 = vsel %vm270, %v264, 0
    %v964 = vsel %vm270, %v961, 0
    %966 = vmatprep.subr.mxu0 0.0
    %967 = vmatpush1.xpose.msra.mxu0 0.0
    %968 = vmatprep.subr.mxu0 0.0
    %969 = vmatpush1.xpose.msra.mxu0 0.0
    %970 = vmatprep.subr.mxu0 0.0
    %971 = vmatpush1.xpose.msra.mxu0 0.0
    %972 = vmatprep.subr.mxu0 0.0
    %973 = vmatpush1.xpose.msra.mxu0 0.0
    %974 = vmatprep.subr.mxu0 0.0
    %975 = vmatpush1.xpose.msra.mxu0 0.0
    %976 = vmatprep.subr.mxu0 0.0
    %977 = vmatpush1.xpose.msra.mxu0 0.0
    %978 = vmatprep.subr.mxu0 0.0
    %979 = vmatpush1.xpose.msra.mxu0 0.0
    %980 = vmatprep.subr.mxu0 0.0
    %981 = vmatpush1.xpose.msra.mxu0 0.0
    %982 = vmatprep.subr.mxu0 0.0
    %983 = vmatpush1.xpose.msra.mxu0 0.0
    %984 = vmatprep.subr.mxu0 0.0
    %985 = vmatpush1.xpose.msra.mxu0 0.0
    %986 = vmatprep.subr.mxu0 0.0
    %987 = vmatpush1.xpose.msra.mxu0 0.0
    %988 = vmatprep.subr.mxu0 0.0
    %989 = vmatpush1.xpose.msra.mxu0 0.0
    %990 = vmatprep.subr.mxu0 0.0
    %991 = vmatpush1.xpose.msra.mxu0 0.0
    %992 = vmatprep.subr.mxu0 0.0
    %993 = vmatpush1.xpose.msra.mxu0 0.0
    %994 = vmatprep.subr.mxu0 0.0
    %995 = vmatpush1.xpose.msra.mxu0 0.0
    %996 = vmatprep.subr.mxu0 0.0
    %997 = vmatpush1.xpose.msra.mxu0 %v964
    %998 = vmatprep.subr.mxu0 0.0
    %999 = vmatpush2.xpose.msra.mxu0 0.0
    %1000 = vmatprep.subr.mxu0 0.0
    %1001 = vmatpush2.xpose.msra.mxu0 0.0
    %1002 = vmatprep.subr.mxu0 0.0
    %1003 = vmatpush2.xpose.msra.mxu0 0.0
    %1004 = vmatprep.subr.mxu0 0.0
    %1005 = vmatpush2.xpose.msra.mxu0 0.0
    %1006 = vmatprep.subr.mxu0 0.0
    %1007 = vmatpush2.xpose.msra.mxu0 0.0
    %1008 = vmatprep.subr.mxu0 0.0
    %1009 = vmatpush2.xpose.msra.mxu0 0.0
    %1010 = vmatprep.subr.mxu0 0.0
    %1011 = vmatpush2.xpose.msra.mxu0 0.0
    %1012 = vmatprep.subr.mxu0 0.0
    %1013 = vmatpush2.xpose.msra.mxu0 0.0
    %1014 = vmatprep.subr.mxu0 0.0
    %1015 = vmatpush2.xpose.msra.mxu0 0.0
    %1016 = vmatprep.subr.mxu0 0.0
    %1017 = vmatpush2.xpose.msra.mxu0 0.0
    %1018 = vmatprep.subr.mxu0 0.0
    %1019 = vmatpush2.xpose.msra.mxu0 0.0
    %1020 = vmatprep.subr.mxu0 0.0
    %1021 = vmatpush2.xpose.msra.mxu0 0.0
    %1022 = vmatprep.subr.mxu0 0.0
    %1023 = vmatpush2.xpose.msra.mxu0 0.0
    %1024 = vmatprep.subr.mxu0 0.0
    %1025 = vmatpush2.xpose.msra.mxu0 0.0
    %1026 = vmatprep.subr.mxu0 0.0
    %1027 = vmatpush2.xpose.msra.mxu0 0.0
    %1028 = vmatprep.subr.mxu0 0.0
    %1029 = vmatpush2.xpose.msra.mxu0 0.0
    %1030 = vmatprep.mubr.f32.mxu0 0.0
    %1031 = vmatmul.mubr.f32.gmra.mxu0 %v962
    %v1032 = vpop.f32.mrf.mxu0
    %v1033 = vadd.f32 0.0, %v1032
    %v1034 = vpop.f32.mrf.mxu0
    %1035 = vdwg.mxu0
    %v1036 = vsel %vm270, %v1033, -inf
    %1037 = vmax.xlane.f32.xlu0 %v1036
    %v1038 = vpop.xlane.xlu0 %1037
    %v1039 = vsub.f32 %v1033, %v1038
    %v1040 = vmul.f32 %v1039, 1.442695
    %v1041 = vpow.pop %v1040
    %v1042 = vsel %vm270, %v1041, 0.0
    %1043 = vadd.xlane.f32.xlu0 %v1042
    %v1044 = vpop.xlane.xlu0 %1043
    %v1045 = vrcp.pop %v1044
    %v1046 = vmul.f32 %v1041, %v1045
    %1047 = vrot.lane.b32.xlu0 %v264, 64
    %v1048 = vpop.permute.xlu0 %1047
    %v1051 = vsel %vm270, %v1046, 0
    %1053 = vmatprep.subr.mxu0 0.0
    %1054 = vmatpush1.msra.mxu0 0.0
    %1055 = vmatprep.subr.mxu0 0.0
    %1056 = vmatpush1.msra.mxu0 0.0
    %1057 = vmatprep.subr.mxu0 0.0
    %1058 = vmatpush1.msra.mxu0 0.0
    %1059 = vmatprep.subr.mxu0 0.0
    %1060 = vmatpush1.msra.mxu0 0.0
    %1061 = vmatprep.subr.mxu0 0.0
    %1062 = vmatpush1.msra.mxu0 0.0
    %1063 = vmatprep.subr.mxu0 0.0
    %1064 = vmatpush1.msra.mxu0 0.0
    %1065 = vmatprep.subr.mxu0 0.0
    %1066 = vmatpush1.msra.mxu0 0.0
    %1067 = vmatprep.subr.mxu0 0.0
    %1068 = vmatpush1.msra.mxu0 0.0
    %1069 = vmatprep.subr.mxu0 0.0
    %1070 = vmatpush1.msra.mxu0 0.0
    %1071 = vmatprep.subr.mxu0 0.0
    %1072 = vmatpush1.msra.mxu0 0.0
    %1073 = vmatprep.subr.mxu0 0.0
    %1074 = vmatpush1.msra.mxu0 0.0
    %1075 = vmatprep.subr.mxu0 0.0
    %1076 = vmatpush1.msra.mxu0 0.0
    %1077 = vmatprep.subr.mxu0 0.0
    %1078 = vmatpush1.msra.mxu0 0.0
    %1079 = vmatprep.subr.mxu0 0.0
    %1080 = vmatpush1.msra.mxu0 0.0
    %1081 = vmatprep.subr.mxu0 0.0
    %1082 = vmatpush1.msra.mxu0 0.0
    %1083 = vmatprep.subr.mxu0 0.0
    %1084 = vmatpush1.msra.mxu0 %v1048
    %1085 = vmatprep.subr.mxu0 0.0
    %1086 = vmatpush2.msra.mxu0 0.0
    %1087 = vmatprep.subr.mxu0 0.0
    %1088 = vmatpush2.msra.mxu0 0.0
    %1089 = vmatprep.subr.mxu0 0.0
    %1090 = vmatpush2.msra.mxu0 0.0
    %1091 = vmatprep.subr.mxu0 0.0
    %1092 = vmatpush2.msra.mxu0 0.0
    %1093 = vmatprep.subr.mxu0 0.0
    %1094 = vmatpush2.msra.mxu0 0.0
    %1095 = vmatprep.subr.mxu0 0.0
    %1096 = vmatpush2.msra.mxu0 0.0
    %1097 = vmatprep.subr.mxu0 0.0
    %1098 = vmatpush2.msra.mxu0 0.0
    %1099 = vmatprep.subr.mxu0 0.0
    %1100 = vmatpush2.msra.mxu0 0.0
    %1101 = vmatprep.subr.mxu0 0.0
    %1102 = vmatpush2.msra.mxu0 0.0
    %1103 = vmatprep.subr.mxu0 0.0
    %1104 = vmatpush2.msra.mxu0 0.0
    %1105 = vmatprep.subr.mxu0 0.0
    %1106 = vmatpush2.msra.mxu0 0.0
    %1107 = vmatprep.subr.mxu0 0.0
    %1108 = vmatpush2.msra.mxu0 0.0
    %1109 = vmatprep.subr.mxu0 0.0
    %1110 = vmatpush2.msra.mxu0 0.0
    %1111 = vmatprep.subr.mxu0 0.0
    %1112 = vmatpush2.msra.mxu0 0.0
    %1113 = vmatprep.subr.mxu0 0.0
    %1114 = vmatpush2.msra.mxu0 0.0
    %1115 = vmatprep.subr.mxu0 0.0
    %1116 = vmatpush2.msra.mxu0 0.0
    %1117 = vmatprep.mubr.f32.mxu0 0.0
    %1118 = vmatmul.mubr.f32.gmra.mxu0 %v1051
    %v1119 = vpop.f32.mrf.mxu0
    %v1120 = vadd.f32 0.0, %v1119
    %v1121 = vpop.f32.mrf.mxu0
    %1122 = vdwg.mxu0
    %1123 = vrot.lane.b32.xlu0 %v264, 120
    %v1124 = vpop.permute.xlu0 %1123
    %1125 = vrot.lane.b32.xlu0 %v264, 88
    %v1126 = vpop.permute.xlu0 %1125
    %v1127 = vsel %vm270, %v1124, 0
    %v1129 = vsel %vm270, %v1126, 0
    %1131 = vmatprep.subr.mxu0 0.0
    %1132 = vmatpush1.xpose.msra.mxu0 0.0
    %1133 = vmatprep.subr.mxu0 0.0
    %1134 = vmatpush1.xpose.msra.mxu0 0.0
    %1135 = vmatprep.subr.mxu0 0.0
    %1136 = vmatpush1.xpose.msra.mxu0 0.0
    %1137 = vmatprep.subr.mxu0 0.0
    %1138 = vmatpush1.xpose.msra.mxu0 0.0
    %1139 = vmatprep.subr.mxu0 0.0
    %1140 = vmatpush1.xpose.msra.mxu0 0.0
    %1141 = vmatprep.subr.mxu0 0.0
    %1142 = vmatpush1.xpose.msra.mxu0 0.0
    %1143 = vmatprep.subr.mxu0 0.0
    %1144 = vmatpush1.xpose.msra.mxu0 0.0
    %1145 = vmatprep.subr.mxu0 0.0
    %1146 = vmatpush1.xpose.msra.mxu0 0.0
    %1147 = vmatprep.subr.mxu0 0.0
    %1148 = vmatpush1.xpose.msra.mxu0 0.0
    %1149 = vmatprep.subr.mxu0 0.0
    %1150 = vmatpush1.xpose.msra.mxu0 0.0
    %1151 = vmatprep.subr.mxu0 0.0
    %1152 = vmatpush1.xpose.msra.mxu0 0.0
    %1153 = vmatprep.subr.mxu0 0.0
    %1154 = vmatpush1.xpose.msra.mxu0 0.0
    %1155 = vmatprep.subr.mxu0 0.0
    %1156 = vmatpush1.xpose.msra.mxu0 0.0
    %1157 = vmatprep.subr.mxu0 0.0
    %1158 = vmatpush1.xpose.msra.mxu0 0.0
    %1159 = vmatprep.subr.mxu0 0.0
    %1160 = vmatpush1.xpose.msra.mxu0 0.0
    %1161 = vmatprep.subr.mxu0 0.0
    %1162 = vmatpush1.xpose.msra.mxu0 %v1129
    %1163 = vmatprep.subr.mxu0 0.0
    %1164 = vmatpush2.xpose.msra.mxu0 0.0
    %1165 = vmatprep.subr.mxu0 0.0
    %1166 = vmatpush2.xpose.msra.mxu0 0.0
    %1167 = vmatprep.subr.mxu0 0.0
    %1168 = vmatpush2.xpose.msra.mxu0 0.0
    %1169 = vmatprep.subr.mxu0 0.0
    %1170 = vmatpush2.xpose.msra.mxu0 0.0
    %1171 = vmatprep.subr.mxu0 0.0
    %1172 = vmatpush2.xpose.msra.mxu0 0.0
    %1173 = vmatprep.subr.mxu0 0.0
    %1174 = vmatpush2.xpose.msra.mxu0 0.0
    %1175 = vmatprep.subr.mxu0 0.0
    %1176 = vmatpush2.xpose.msra.mxu0 0.0
    %1177 = vmatprep.subr.mxu0 0.0
    %1178 = vmatpush2.xpose.msra.mxu0 0.0
    %1179 = vmatprep.subr.mxu0 0.0
    %1180 = vmatpush2.xpose.msra.mxu0 0.0
    %1181 = vmatprep.subr.mxu0 0.0
    %1182 = vmatpush2.xpose.msra.mxu0 0.0
    %1183 = vmatprep.subr.mxu0 0.0
    %1184 = vmatpush2.xpose.msra.mxu0 0.0
    %1185 = vmatprep.subr.mxu0 0.0
    %1186 = vmatpush2.xpose.msra.mxu0 0.0
    %1187 = vmatprep.subr.mxu0 0.0
    %1188 = vmatpush2.xpose.msra.mxu0 0.0
    %1189 = vmatprep.subr.mxu0 0.0
    %1190 = vmatpush2.xpose.msra.mxu0 0.0
    %1191 = vmatprep.subr.mxu0 0.0
    %1192 = vmatpush2.xpose.msra.mxu0 0.0
    %1193 = vmatprep.subr.mxu0 0.0
    %1194 = vmatpush2.xpose.msra.mxu0 0.0
    %1195 = vmatprep.mubr.f32.mxu0 0.0
    %1196 = vmatmul.mubr.f32.gmra.mxu0 %v1127
    %v1197 = vpop.f32.mrf.mxu0
    %v1198 = vadd.f32 0.0, %v1197
    %v1199 = vpop.f32.mrf.mxu0
    %1200 = vdwg.mxu0
    %v1201 = vsel %vm270, %v1198, -inf
    %1202 = vmax.xlane.f32.xlu0 %v1201
    %v1203 = vpop.xlane.xlu0 %1202
    %v1204 = vsub.f32 %v1198, %v1203
    %v1205 = vmul.f32 %v1204, 1.442695
    %v1206 = vpow.pop %v1205
    %v1207 = vsel %vm270, %v1206, 0.0
    %1208 = vadd.xlane.f32.xlu0 %v1207
    %v1209 = vpop.xlane.xlu0 %1208
    %v1210 = vrcp.pop %v1209
    %v1211 = vmul.f32 %v1206, %v1210
    %1212 = vrot.lane.b32.xlu0 %v264, 56
    %v1213 = vpop.permute.xlu0 %1212
    %v1216 = vsel %vm270, %v1211, 0
    %1218 = vmatprep.subr.mxu0 0.0
    %1219 = vmatpush1.msra.mxu0 0.0
    %1220 = vmatprep.subr.mxu0 0.0
    %1221 = vmatpush1.msra.mxu0 0.0
    %1222 = vmatprep.subr.mxu0 0.0
    %1223 = vmatpush1.msra.mxu0 0.0
    %1224 = vmatprep.subr.mxu0 0.0
    %1225 = vmatpush1.msra.mxu0 0.0
    %1226 = vmatprep.subr.mxu0 0.0
    %1227 = vmatpush1.msra.mxu0 0.0
    %1228 = vmatprep.subr.mxu0 0.0
    %1229 = vmatpush1.msra.mxu0 0.0
    %1230 = vmatprep.subr.mxu0 0.0
    %1231 = vmatpush1.msra.mxu0 0.0
    %1232 = vmatprep.subr.mxu0 0.0
    %1233 = vmatpush1.msra.mxu0 0.0
    %1234 = vmatprep.subr.mxu0 0.0
    %1235 = vmatpush1.msra.mxu0 0.0
    %1236 = vmatprep.subr.mxu0 0.0
    %1237 = vmatpush1.msra.mxu0 0.0
    %1238 = vmatprep.subr.mxu0 0.0
    %1239 = vmatpush1.msra.mxu0 0.0
    %1240 = vmatprep.subr.mxu0 0.0
    %1241 = vmatpush1.msra.mxu0 0.0
    %1242 = vmatprep.subr.mxu0 0.0
    %1243 = vmatpush1.msra.mxu0 0.0
    %1244 = vmatprep.subr.mxu0 0.0
    %1245 = vmatpush1.msra.mxu0 0.0
    %1246 = vmatprep.subr.mxu0 0.0
    %1247 = vmatpush1.msra.mxu0 0.0
    %1248 = vmatprep.subr.mxu0 0.0
    %1249 = vmatpush1.msra.mxu0 %v1213
    %1250 = vmatprep.subr.mxu0 0.0
    %1251 = vmatpush2.msra.mxu0 0.0
    %1252 = vmatprep.subr.mxu0 0.0
    %1253 = vmatpush2.msra.mxu0 0.0
    %1254 = vmatprep.subr.mxu0 0.0
    %1255 = vmatpush2.msra.mxu0 0.0
    %1256 = vmatprep.subr.mxu0 0.0
    %1257 = vmatpush2.msra.mxu0 0.0
    %1258 = vmatprep.subr.mxu0 0.0
    %1259 = vmatpush2.msra.mxu0 0.0
    %1260 = vmatprep.subr.mxu0 0.0
    %1261 = vmatpush2.msra.mxu0 0.0
    %1262 = vmatprep.subr.mxu0 0.0
    %1263 = vmatpush2.msra.mxu0 0.0
    %1264 = vmatprep.subr.mxu0 0.0
    %1265 = vmatpush2.msra.mxu0 0.0
    %1266 = vmatprep.subr.mxu0 0.0
    %1267 = vmatpush2.msra.mxu0 0.0
    %1268 = vmatprep.subr.mxu0 0.0
    %1269 = vmatpush2.msra.mxu0 0.0
    %1270 = vmatprep.subr.mxu0 0.0
    %1271 = vmatpush2.msra.mxu0 0.0
    %1272 = vmatprep.subr.mxu0 0.0
    %1273 = vmatpush2.msra.mxu0 0.0
    %1274 = vmatprep.subr.mxu0 0.0
    %1275 = vmatpush2.msra.mxu0 0.0
    %1276 = vmatprep.subr.mxu0 0.0
    %1277 = vmatpush2.msra.mxu0 0.0
    %1278 = vmatprep.subr.mxu0 0.0
    %1279 = vmatpush2.msra.mxu0 0.0
    %1280 = vmatprep.subr.mxu0 0.0
    %1281 = vmatpush2.msra.mxu0 0.0
    %1282 = vmatprep.mubr.f32.mxu0 0.0
    %1283 = vmatmul.mubr.f32.gmra.mxu0 %v1216
    %v1284 = vpop.f32.mrf.mxu0
    %v1285 = vadd.f32 0.0, %v1284
    %v1286 = vpop.f32.mrf.mxu0
    %1287 = vdwg.mxu0
    %1288 = vrot.lane.b32.xlu0 %v264, 112
    %v1289 = vpop.permute.xlu0 %1288
    %1290 = vrot.lane.b32.xlu0 %v264, 80
    %v1291 = vpop.permute.xlu0 %1290
    %v1292 = vsel %vm270, %v1289, 0
    %v1294 = vsel %vm270, %v1291, 0
    %1296 = vmatprep.subr.mxu0 0.0
    %1297 = vmatpush1.xpose.msra.mxu0 0.0
    %1298 = vmatprep.subr.mxu0 0.0
    %1299 = vmatpush1.xpose.msra.mxu0 0.0
    %1300 = vmatprep.subr.mxu0 0.0
    %1301 = vmatpush1.xpose.msra.mxu0 0.0
    %1302 = vmatprep.subr.mxu0 0.0
    %1303 = vmatpush1.xpose.msra.mxu0 0.0
    %1304 = vmatprep.subr.mxu0 0.0
    %1305 = vmatpush1.xpose.msra.mxu0 0.0
    %1306 = vmatprep.subr.mxu0 0.0
    %1307 = vmatpush1.xpose.msra.mxu0 0.0
    %1308 = vmatprep.subr.mxu0 0.0
    %1309 = vmatpush1.xpose.msra.mxu0 0.0
    %1310 = vmatprep.subr.mxu0 0.0
    %1311 = vmatpush1.xpose.msra.mxu0 0.0
    %1312 = vmatprep.subr.mxu0 0.0
    %1313 = vmatpush1.xpose.msra.mxu0 0.0
    %1314 = vmatprep.subr.mxu0 0.0
    %1315 = vmatpush1.xpose.msra.mxu0 0.0
    %1316 = vmatprep.subr.mxu0 0.0
    %1317 = vmatpush1.xpose.msra.mxu0 0.0
    %1318 = vmatprep.subr.mxu0 0.0
    %1319 = vmatpush1.xpose.msra.mxu0 0.0
    %1320 = vmatprep.subr.mxu0 0.0
    %1321 = vmatpush1.xpose.msra.mxu0 0.0
    %1322 = vmatprep.subr.mxu0 0.0
    %1323 = vmatpush1.xpose.msra.mxu0 0.0
    %1324 = vmatprep.subr.mxu0 0.0
    %1325 = vmatpush1.xpose.msra.mxu0 0.0
    %1326 = vmatprep.subr.mxu0 0.0
    %1327 = vmatpush1.xpose.msra.mxu0 %v1294
    %1328 = vmatprep.subr.mxu0 0.0
    %1329 = vmatpush2.xpose.msra.mxu0 0.0
    %1330 = vmatprep.subr.mxu0 0.0
    %1331 = vmatpush2.xpose.msra.mxu0 0.0
    %1332 = vmatprep.subr.mxu0 0.0
    %1333 = vmatpush2.xpose.msra.mxu0 0.0
    %1334 = vmatprep.subr.mxu0 0.0
    %1335 = vmatpush2.xpose.msra.mxu0 0.0
    %1336 = vmatprep.subr.mxu0 0.0
    %1337 = vmatpush2.xpose.msra.mxu0 0.0
    %1338 = vmatprep.subr.mxu0 0.0
    %1339 = vmatpush2.xpose.msra.mxu0 0.0
    %1340 = vmatprep.subr.mxu0 0.0
    %1341 = vmatpush2.xpose.msra.mxu0 0.0
    %1342 = vmatprep.subr.mxu0 0.0
    %1343 = vmatpush2.xpose.msra.mxu0 0.0
    %1344 = vmatprep.subr.mxu0 0.0
    %1345 = vmatpush2.xpose.msra.mxu0 0.0
    %1346 = vmatprep.subr.mxu0 0.0
    %1347 = vmatpush2.xpose.msra.mxu0 0.0
    %1348 = vmatprep.subr.mxu0 0.0
    %1349 = vmatpush2.xpose.msra.mxu0 0.0
    %1350 = vmatprep.subr.mxu0 0.0
    %1351 = vmatpush2.xpose.msra.mxu0 0.0
    %1352 = vmatprep.subr.mxu0 0.0
    %1353 = vmatpush2.xpose.msra.mxu0 0.0
    %1354 = vmatprep.subr.mxu0 0.0
    %1355 = vmatpush2.xpose.msra.mxu0 0.0
    %1356 = vmatprep.subr.mxu0 0.0
    %1357 = vmatpush2.xpose.msra.mxu0 0.0
    %1358 = vmatprep.subr.mxu0 0.0
    %1359 = vmatpush2.xpose.msra.mxu0 0.0
    %1360 = vmatprep.mubr.f32.mxu0 0.0
    %1361 = vmatmul.mubr.f32.gmra.mxu0 %v1292
    %v1362 = vpop.f32.mrf.mxu0
    %v1363 = vadd.f32 0.0, %v1362
    %v1364 = vpop.f32.mrf.mxu0
    %1365 = vdwg.mxu0
    %v1366 = vsel %vm270, %v1363, -inf
    %1367 = vmax.xlane.f32.xlu0 %v1366
    %v1368 = vpop.xlane.xlu0 %1367
    %v1369 = vsub.f32 %v1363, %v1368
    %v1370 = vmul.f32 %v1369, 1.442695
    %v1371 = vpow.pop %v1370
    %v1372 = vsel %vm270, %v1371, 0.0
    %1373 = vadd.xlane.f32.xlu0 %v1372
    %v1374 = vpop.xlane.xlu0 %1373
    %v1375 = vrcp.pop %v1374
    %v1376 = vmul.f32 %v1371, %v1375
    %1377 = vrot.lane.b32.xlu0 %v264, 48
    %v1378 = vpop.permute.xlu0 %1377
    %v1381 = vsel %vm270, %v1376, 0
    %1383 = vmatprep.subr.mxu0 0.0
    %1384 = vmatpush1.msra.mxu0 0.0
    %1385 = vmatprep.subr.mxu0 0.0
    %1386 = vmatpush1.msra.mxu0 0.0
    %1387 = vmatprep.subr.mxu0 0.0
    %1388 = vmatpush1.msra.mxu0 0.0
    %1389 = vmatprep.subr.mxu0 0.0
    %1390 = vmatpush1.msra.mxu0 0.0
    %1391 = vmatprep.subr.mxu0 0.0
    %1392 = vmatpush1.msra.mxu0 0.0
    %1393 = vmatprep.subr.mxu0 0.0
    %1394 = vmatpush1.msra.mxu0 0.0
    %1395 = vmatprep.subr.mxu0 0.0
    %1396 = vmatpush1.msra.mxu0 0.0
    %1397 = vmatprep.subr.mxu0 0.0
    %1398 = vmatpush1.msra.mxu0 0.0
    %1399 = vmatprep.subr.mxu0 0.0
    %1400 = vmatpush1.msra.mxu0 0.0
    %1401 = vmatprep.subr.mxu0 0.0
    %1402 = vmatpush1.msra.mxu0 0.0
    %1403 = vmatprep.subr.mxu0 0.0
    %1404 = vmatpush1.msra.mxu0 0.0
    %1405 = vmatprep.subr.mxu0 0.0
    %1406 = vmatpush1.msra.mxu0 0.0
    %1407 = vmatprep.subr.mxu0 0.0
    %1408 = vmatpush1.msra.mxu0 0.0
    %1409 = vmatprep.subr.mxu0 0.0
    %1410 = vmatpush1.msra.mxu0 0.0
    %1411 = vmatprep.subr.mxu0 0.0
    %1412 = vmatpush1.msra.mxu0 0.0
    %1413 = vmatprep.subr.mxu0 0.0
    %1414 = vmatpush1.msra.mxu0 %v1378
    %1415 = vmatprep.subr.mxu0 0.0
    %1416 = vmatpush2.msra.mxu0 0.0
    %1417 = vmatprep.subr.mxu0 0.0
    %1418 = vmatpush2.msra.mxu0 0.0
    %1419 = vmatprep.subr.mxu0 0.0
    %1420 = vmatpush2.msra.mxu0 0.0
    %1421 = vmatprep.subr.mxu0 0.0
    %1422 = vmatpush2.msra.mxu0 0.0
    %1423 = vmatprep.subr.mxu0 0.0
    %1424 = vmatpush2.msra.mxu0 0.0
    %1425 = vmatprep.subr.mxu0 0.0
    %1426 = vmatpush2.msra.mxu0 0.0
    %1427 = vmatprep.subr.mxu0 0.0
    %1428 = vmatpush2.msra.mxu0 0.0
    %1429 = vmatprep.subr.mxu0 0.0
    %1430 = vmatpush2.msra.mxu0 0.0
    %1431 = vmatprep.subr.mxu0 0.0
    %1432 = vmatpush2.msra.mxu0 0.0
    %1433 = vmatprep.subr.mxu0 0.0
    %1434 = vmatpush2.msra.mxu0 0.0
    %1435 = vmatprep.subr.mxu0 0.0
    %1436 = vmatpush2.msra.mxu0 0.0
    %1437 = vmatprep.subr.mxu0 0.0
    %1438 = vmatpush2.msra.mxu0 0.0
    %1439 = vmatprep.subr.mxu0 0.0
    %1440 = vmatpush2.msra.mxu0 0.0
    %1441 = vmatprep.subr.mxu0 0.0
    %1442 = vmatpush2.msra.mxu0 0.0
    %1443 = vmatprep.subr.mxu0 0.0
    %1444 = vmatpush2.msra.mxu0 0.0
    %1445 = vmatprep.subr.mxu0 0.0
    %1446 = vmatpush2.msra.mxu0 0.0
    %1447 = vmatprep.mubr.f32.mxu0 0.0
    %1448 = vmatmul.mubr.f32.gmra.mxu0 %v1381
    %v1449 = vpop.f32.mrf.mxu0
    %v1450 = vadd.f32 0.0, %v1449
    %v1451 = vpop.f32.mrf.mxu0
    %1452 = vdwg.mxu0
    %1453 = vrot.lane.b32.xlu0 %v264, 104
    %v1454 = vpop.permute.xlu0 %1453
    %1455 = vrot.lane.b32.xlu0 %v264, 72
    %v1456 = vpop.permute.xlu0 %1455
    %v1457 = vsel %vm270, %v1454, 0
    %v1459 = vsel %vm270, %v1456, 0
    %1461 = vmatprep.subr.mxu0 0.0
    %1462 = vmatpush1.xpose.msra.mxu0 0.0
    %1463 = vmatprep.subr.mxu0 0.0
    %1464 = vmatpush1.xpose.msra.mxu0 0.0
    %1465 = vmatprep.subr.mxu0 0.0
    %1466 = vmatpush1.xpose.msra.mxu0 0.0
    %1467 = vmatprep.subr.mxu0 0.0
    %1468 = vmatpush1.xpose.msra.mxu0 0.0
    %1469 = vmatprep.subr.mxu0 0.0
    %1470 = vmatpush1.xpose.msra.mxu0 0.0
    %1471 = vmatprep.subr.mxu0 0.0
    %1472 = vmatpush1.xpose.msra.mxu0 0.0
    %1473 = vmatprep.subr.mxu0 0.0
    %1474 = vmatpush1.xpose.msra.mxu0 0.0
    %1475 = vmatprep.subr.mxu0 0.0
    %1476 = vmatpush1.xpose.msra.mxu0 0.0
    %1477 = vmatprep.subr.mxu0 0.0
    %1478 = vmatpush1.xpose.msra.mxu0 0.0
    %1479 = vmatprep.subr.mxu0 0.0
    %1480 = vmatpush1.xpose.msra.mxu0 0.0
    %1481 = vmatprep.subr.mxu0 0.0
    %1482 = vmatpush1.xpose.msra.mxu0 0.0
    %1483 = vmatprep.subr.mxu0 0.0
    %1484 = vmatpush1.xpose.msra.mxu0 0.0
    %1485 = vmatprep.subr.mxu0 0.0
    %1486 = vmatpush1.xpose.msra.mxu0 0.0
    %1487 = vmatprep.subr.mxu0 0.0
    %1488 = vmatpush1.xpose.msra.mxu0 0.0
    %1489 = vmatprep.subr.mxu0 0.0
    %1490 = vmatpush1.xpose.msra.mxu0 0.0
    %1491 = vmatprep.subr.mxu0 0.0
    %1492 = vmatpush1.xpose.msra.mxu0 %v1459
    %1493 = vmatprep.subr.mxu0 0.0
    %1494 = vmatpush2.xpose.msra.mxu0 0.0
    %1495 = vmatprep.subr.mxu0 0.0
    %1496 = vmatpush2.xpose.msra.mxu0 0.0
    %1497 = vmatprep.subr.mxu0 0.0
    %1498 = vmatpush2.xpose.msra.mxu0 0.0
    %1499 = vmatprep.subr.mxu0 0.0
    %1500 = vmatpush2.xpose.msra.mxu0 0.0
    %1501 = vmatprep.subr.mxu0 0.0
    %1502 = vmatpush2.xpose.msra.mxu0 0.0
    %1503 = vmatprep.subr.mxu0 0.0
    %1504 = vmatpush2.xpose.msra.mxu0 0.0
    %1505 = vmatprep.subr.mxu0 0.0
    %1506 = vmatpush2.xpose.msra.mxu0 0.0
    %1507 = vmatprep.subr.mxu0 0.0
    %1508 = vmatpush2.xpose.msra.mxu0 0.0
    %1509 = vmatprep.subr.mxu0 0.0
    %1510 = vmatpush2.xpose.msra.mxu0 0.0
    %1511 = vmatprep.subr.mxu0 0.0
    %1512 = vmatpush2.xpose.msra.mxu0 0.0
    %1513 = vmatprep.subr.mxu0 0.0
    %1514 = vmatpush2.xpose.msra.mxu0 0.0
    %1515 = vmatprep.subr.mxu0 0.0
    %1516 = vmatpush2.xpose.msra.mxu0 0.0
    %1517 = vmatprep.subr.mxu0 0.0
    %1518 = vmatpush2.xpose.msra.mxu0 0.0
    %1519 = vmatprep.subr.mxu0 0.0
    %1520 = vmatpush2.xpose.msra.mxu0 0.0
    %1521 = vmatprep.subr.mxu0 0.0
    %1522 = vmatpush2.xpose.msra.mxu0 0.0
    %1523 = vmatprep.subr.mxu0 0.0
    %1524 = vmatpush2.xpose.msra.mxu0 0.0
    %1525 = vmatprep.mubr.f32.mxu0 0.0
    %1526 = vmatmul.mubr.f32.gmra.mxu0 %v1457
    %v1527 = vpop.f32.mrf.mxu0
    %v1528 = vadd.f32 0.0, %v1527
    %v1529 = vpop.f32.mrf.mxu0
    %1530 = vdwg.mxu0
    %v1531 = vsel %vm270, %v1528, -inf
    %1532 = vmax.xlane.f32.xlu0 %v1531
    %v1533 = vpop.xlane.xlu0 %1532
    %v1534 = vsub.f32 %v1528, %v1533
    %v1535 = vmul.f32 %v1534, 1.442695
    %v1536 = vpow.pop %v1535
    %v1537 = vsel %vm270, %v1536, 0.0
    %1538 = vadd.xlane.f32.xlu0 %v1537
    %v1539 = vpop.xlane.xlu0 %1538
    %v1540 = vrcp.pop %v1539
    %v1541 = vmul.f32 %v1536, %v1540
    %1542 = vrot.lane.b32.xlu0 %v264, 40
    %v1543 = vpop.permute.xlu0 %1542
    %v1546 = vsel %vm270, %v1541, 0
    %1548 = vmatprep.subr.mxu0 0.0
    %1549 = vmatpush1.msra.mxu0 0.0
    %1550 = vmatprep.subr.mxu0 0.0
    %1551 = vmatpush1.msra.mxu0 0.0
    %1552 = vmatprep.subr.mxu0 0.0
    %1553 = vmatpush1.msra.mxu0 0.0
    %1554 = vmatprep.subr.mxu0 0.0
    %1555 = vmatpush1.msra.mxu0 0.0
    %1556 = vmatprep.subr.mxu0 0.0
    %1557 = vmatpush1.msra.mxu0 0.0
    %1558 = vmatprep.subr.mxu0 0.0
    %1559 = vmatpush1.msra.mxu0 0.0
    %1560 = vmatprep.subr.mxu0 0.0
    %1561 = vmatpush1.msra.mxu0 0.0
    %1562 = vmatprep.subr.mxu0 0.0
    %1563 = vmatpush1.msra.mxu0 0.0
    %1564 = vmatprep.subr.mxu0 0.0
    %1565 = vmatpush1.msra.mxu0 0.0
    %1566 = vmatprep.subr.mxu0 0.0
    %1567 = vmatpush1.msra.mxu0 0.0
    %1568 = vmatprep.subr.mxu0 0.0
    %1569 = vmatpush1.msra.mxu0 0.0
    %1570 = vmatprep.subr.mxu0 0.0
    %1571 = vmatpush1.msra.mxu0 0.0
    %1572 = vmatprep.subr.mxu0 0.0
    %1573 = vmatpush1.msra.mxu0 0.0
    %1574 = vmatprep.subr.mxu0 0.0
    %1575 = vmatpush1.msra.mxu0 0.0
    %1576 = vmatprep.subr.mxu0 0.0
    %1577 = vmatpush1.msra.mxu0 0.0
    %1578 = vmatprep.subr.mxu0 0.0
    %1579 = vmatpush1.msra.mxu0 %v1543
    %1580 = vmatprep.subr.mxu0 0.0
    %1581 = vmatpush2.msra.mxu0 0.0
    %1582 = vmatprep.subr.mxu0 0.0
    %1583 = vmatpush2.msra.mxu0 0.0
    %1584 = vmatprep.subr.mxu0 0.0
    %1585 = vmatpush2.msra.mxu0 0.0
    %1586 = vmatprep.subr.mxu0 0.0
    %1587 = vmatpush2.msra.mxu0 0.0
    %1588 = vmatprep.subr.mxu0 0.0
    %1589 = vmatpush2.msra.mxu0 0.0
    %1590 = vmatprep.subr.mxu0 0.0
    %1591 = vmatpush2.msra.mxu0 0.0
    %1592 = vmatprep.subr.mxu0 0.0
    %1593 = vmatpush2.msra.mxu0 0.0
    %1594 = vmatprep.subr.mxu0 0.0
    %1595 = vmatpush2.msra.mxu0 0.0
    %1596 = vmatprep.subr.mxu0 0.0
    %1597 = vmatpush2.msra.mxu0 0.0
    %1598 = vmatprep.subr.mxu0 0.0
    %1599 = vmatpush2.msra.mxu0 0.0
    %1600 = vmatprep.subr.mxu0 0.0
    %1601 = vmatpush2.msra.mxu0 0.0
    %1602 = vmatprep.subr.mxu0 0.0
    %1603 = vmatpush2.msra.mxu0 0.0
    %1604 = vmatprep.subr.mxu0 0.0
    %1605 = vmatpush2.msra.mxu0 0.0
    %1606 = vmatprep.subr.mxu0 0.0
    %1607 = vmatpush2.msra.mxu0 0.0
    %1608 = vmatprep.subr.mxu0 0.0
    %1609 = vmatpush2.msra.mxu0 0.0
    %1610 = vmatprep.subr.mxu0 0.0
    %1611 = vmatpush2.msra.mxu0 0.0
    %1612 = vmatprep.mubr.f32.mxu0 0.0
    %1613 = vmatmul.mubr.f32.gmra.mxu0 %v1546
    %v1614 = vpop.f32.mrf.mxu0
    %v1615 = vadd.f32 0.0, %v1614
    %v1616 = vpop.f32.mrf.mxu0
    %1617 = vdwg.mxu0
    %1619 = vrot.lane.b32.xlu0 %v1198, 8
    %v1620 = vpop.permute.xlu0 %1619
    %1623 = vrot.lane.b32.xlu0 %v1363, 16
    %v1624 = vpop.permute.xlu0 %1623
    %1627 = vrot.lane.b32.xlu0 %v1528, 24
    %v1628 = vpop.permute.xlu0 %1627
    %v1630 = vsel %vm270, %v1033, %v1620
    %v1631 = vsel %vm940, %v1630, %v1624
    %v1632 = vsel %vm942, %v1631, %v1628
    %1634 = vrot.lane.b32.xlu0 %v1285, 8
    %v1635 = vpop.permute.xlu0 %1634
    %1638 = vrot.lane.b32.xlu0 %v1450, 16
    %v1639 = vpop.permute.xlu0 %1638
    %1642 = vrot.lane.b32.xlu0 %v1615, 24
    %v1643 = vpop.permute.xlu0 %1642
    %v1645 = vsel %vm270, %v1120, %v1635
    %v1646 = vsel %vm940, %v1645, %v1639
    %v1647 = vsel %vm942, %v1646, %v1643
    %1648 = vst.msk [vmem:[%s16] sm:$0xff] %vm138, %v943
    %1649 = vst.msk [vmem:[%s16 + $0x8] sm:$0xff] %vm138, %v1632
    %v1650 = vld [vmem:[#allocation7] sm:$0xff]
    %v1651 = vld [vmem:[#allocation7 + $0x8] sm:$0xff]
    %v1652 = vld [vmem:[#allocation7 + $0x10] sm:$0xff]
    %v1653 = vld [vmem:[#allocation7 + $0x18] sm:$0xff]
    %v1654 = vld [vmem:[%s6] sm:$0x1]
    %v1656 = vlaneseq
    %v1657 = vshrl.u32 %v1656, 7
    %v1658 = vsub.s32 0, %v1657
    %v1659 = vrot.slane %v1654, %v1658
    %v1662 = vsel %vm138, %v958, 0
    %v1665 = vsel %vm138, %v1647, 0
    %1667 = vmatprep.subr.mxu0 0.0
    %1668 = vmatpush1.msra.mxu0 0.0
    %1669 = vmatprep.subr.mxu0 0.0
    %1670 = vmatpush1.msra.mxu0 0.0
    %1671 = vmatprep.subr.mxu0 0.0
    %1672 = vmatpush1.msra.mxu0 0.0
    %1673 = vmatprep.subr.mxu0 0.0
    %1674 = vmatpush1.msra.mxu0 0.0
    %1675 = vmatprep.subr.mxu0 0.0
    %1676 = vmatpush1.msra.mxu0 0.0
    %1677 = vmatprep.subr.mxu0 0.0
    %1678 = vmatpush1.msra.mxu0 0.0
    %1679 = vmatprep.subr.mxu0 0.0
    %1680 = vmatpush1.msra.mxu0 0.0
    %1681 = vmatprep.subr.mxu0 0.0
    %1682 = vmatpush1.msra.mxu0 0.0
    %1683 = vmatprep.subr.mxu0 0.0
    %1684 = vmatpush1.msra.mxu0 0.0
    %1685 = vmatprep.subr.mxu0 0.0
    %1686 = vmatpush1.msra.mxu0 0.0
    %1687 = vmatprep.subr.mxu0 0.0
    %1688 = vmatpush1.msra.mxu0 0.0
    %1689 = vmatprep.subr.mxu0 0.0
    %1690 = vmatpush1.msra.mxu0 0.0
    %1691 = vmatprep.subr.mxu0 0.0
    %1692 = vmatpush1.msra.mxu0 %v1653
    %1693 = vmatprep.subr.mxu0 0.0
    %1694 = vmatpush1.msra.mxu0 %v1652
    %1695 = vmatprep.subr.mxu0 0.0
    %1696 = vmatpush1.msra.mxu0 %v1651
    %1697 = vmatprep.subr.mxu0 0.0
    %1698 = vmatpush1.msra.mxu0 %v1650
    %1699 = vmatprep.subr.mxu0 0.0
    %1700 = vmatpush2.msra.mxu0 0.0
    %1701 = vmatprep.subr.mxu0 0.0
    %1702 = vmatpush2.msra.mxu0 0.0
    %1703 = vmatprep.subr.mxu0 0.0
    %1704 = vmatpush2.msra.mxu0 0.0
    %1705 = vmatprep.subr.mxu0 0.0
    %1706 = vmatpush2.msra.mxu0 0.0
    %1707 = vmatprep.subr.mxu0 0.0
    %1708 = vmatpush2.msra.mxu0 0.0
    %1709 = vmatprep.subr.mxu0 0.0
    %1710 = vmatpush2.msra.mxu0 0.0
    %1711 = vmatprep.subr.mxu0 0.0
    %1712 = vmatpush2.msra.mxu0 0.0
    %1713 = vmatprep.subr.mxu0 0.0
    %1714 = vmatpush2.msra.mxu0 0.0
    %1715 = vmatprep.subr.mxu0 0.0
    %1716 = vmatpush2.msra.mxu0 0.0
    %1717 = vmatprep.subr.mxu0 0.0
    %1718 = vmatpush2.msra.mxu0 0.0
    %1719 = vmatprep.subr.mxu0 0.0
    %1720 = vmatpush2.msra.mxu0 0.0
    %1721 = vmatprep.subr.mxu0 0.0
    %1722 = vmatpush2.msra.mxu0 0.0
    %1723 = vmatprep.subr.mxu0 0.0
    %1724 = vmatpush2.msra.mxu0 0.0
    %1725 = vmatprep.subr.mxu0 0.0
    %1726 = vmatpush2.msra.mxu0 0.0
    %1727 = vmatprep.subr.mxu0 0.0
    %1728 = vmatpush2.msra.mxu0 0.0
    %1729 = vmatprep.subr.mxu0 0.0
    %1730 = vmatpush2.msra.mxu0 0.0
    %1731 = vmatprep.mubr.f32.mxu0 0.0
    %1732 = vmatmul.mubr.f32.gmra.mxu0 %v1662
    %v1733 = vpop.f32.mrf.mxu0
    %v1734 = vadd.f32 %v1659, %v1733
    %v1735 = vpop.f32.mrf.mxu0
    %1736 = vmatprep.mubr.f32.mxu0 0.0
    %1737 = vmatmul.mubr.f32.gmra.mxu0 %v1665
    %v1738 = vpop.f32.mrf.mxu0
    %v1739 = vadd.f32 %v1659, %v1738
    %v1740 = vpop.f32.mrf.mxu0
    %1741 = vdwg.mxu0
    %v1742 = vadd.f32 %v134, %v1734
    %v1743 = vadd.f32 %v135, %v1739
    %v1744 = vld [vmem:[#allocation4] sm:$0xff]
    %v1745 = vld [vmem:[#allocation4 + $0x8] sm:$0xff]
    %v1746 = vld [vmem:[%s7] sm:$0xff]
    %v1747 = vld [vmem:[%s7 + $0x8] sm:$0xff]
    %v1748 = vld [vmem:[%s8] sm:$0x1]
    %v1750 = vlaneseq
    %v1751 = vshrl.u32 %v1750, 7
    %v1752 = vsub.s32 0, %v1751
    %v1753 = vrot.slane %v1748, %v1752
    %v1756 = vsel %vm940, %v1744, 0
    %v1759 = vsel %vm940, %v1745, 0
    %1761 = vmatprep.subr.mxu0 0.0
    %1762 = vmatpush1.msra.mxu0 0.0
    %1763 = vmatprep.subr.mxu0 0.0
    %1764 = vmatpush1.msra.mxu0 0.0
    %1765 = vmatprep.subr.mxu0 0.0
    %1766 = vmatpush1.msra.mxu0 0.0
    %1767 = vmatprep.subr.mxu0 0.0
    %1768 = vmatpush1.msra.mxu0 0.0
    %1769 = vmatprep.subr.mxu0 0.0
    %1770 = vmatpush1.msra.mxu0 0.0
    %1771 = vmatprep.subr.mxu0 0.0
    %1772 = vmatpush1.msra.mxu0 0.0
    %1773 = vmatprep.subr.mxu0 0.0
    %1774 = vmatpush1.msra.mxu0 0.0
    %1775 = vmatprep.subr.mxu0 0.0
    %1776 = vmatpush1.msra.mxu0 0.0
    %1777 = vmatprep.subr.mxu0 0.0
    %1778 = vmatpush1.msra.mxu0 0.0
    %1779 = vmatprep.subr.mxu0 0.0
    %1780 = vmatpush1.msra.mxu0 0.0
    %1781 = vmatprep.subr.mxu0 0.0
    %1782 = vmatpush1.msra.mxu0 0.0
    %1783 = vmatprep.subr.mxu0 0.0
    %1784 = vmatpush1.msra.mxu0 0.0
    %1785 = vmatprep.subr.mxu0 0.0
    %1786 = vmatpush1.msra.mxu0 0.0
    %1787 = vmatprep.subr.mxu0 0.0
    %1788 = vmatpush1.msra.mxu0 0.0
    %1789 = vmatprep.subr.mxu0 0.0
    %1790 = vmatpush1.msra.mxu0 %v1747
    %1791 = vmatprep.subr.mxu0 0.0
    %1792 = vmatpush1.msra.mxu0 %v1746
    %1793 = vmatprep.subr.mxu0 0.0
    %1794 = vmatpush2.msra.mxu0 0.0
    %1795 = vmatprep.subr.mxu0 0.0
    %1796 = vmatpush2.msra.mxu0 0.0
    %1797 = vmatprep.subr.mxu0 0.0
    %1798 = vmatpush2.msra.mxu0 0.0
    %1799 = vmatprep.subr.mxu0 0.0
    %1800 = vmatpush2.msra.mxu0 0.0
    %1801 = vmatprep.subr.mxu0 0.0
    %1802 = vmatpush2.msra.mxu0 0.0
    %1803 = vmatprep.subr.mxu0 0.0
    %1804 = vmatpush2.msra.mxu0 0.0
    %1805 = vmatprep.subr.mxu0 0.0
    %1806 = vmatpush2.msra.mxu0 0.0
    %1807 = vmatprep.subr.mxu0 0.0
    %1808 = vmatpush2.msra.mxu0 0.0
    %1809 = vmatprep.subr.mxu0 0.0
    %1810 = vmatpush2.msra.mxu0 0.0
    %1811 = vmatprep.subr.mxu0 0.0
    %1812 = vmatpush2.msra.mxu0 0.0
    %1813 = vmatprep.subr.mxu0 0.0
    %1814 = vmatpush2.msra.mxu0 0.0
    %1815 = vmatprep.subr.mxu0 0.0
    %1816 = vmatpush2.msra.mxu0 0.0
    %1817 = vmatprep.subr.mxu0 0.0
    %1818 = vmatpush2.msra.mxu0 0.0
    %1819 = vmatprep.subr.mxu0 0.0
    %1820 = vmatpush2.msra.mxu0 0.0
    %1821 = vmatprep.subr.mxu0 0.0
    %1822 = vmatpush2.msra.mxu0 0.0
    %1823 = vmatprep.subr.mxu0 0.0
    %1824 = vmatpush2.msra.mxu0 0.0
    %1825 = vmatprep.mubr.f32.mxu0 0.0
    %1826 = vmatmul.mubr.f32.gmra.mxu0 %v1756
    %v1827 = vpop.f32.mrf.mxu0
    %v1828 = vadd.f32 %v1753, %v1827
    %v1829 = vpop.f32.mrf.mxu0
    %1830 = vmatprep.mubr.f32.mxu0 0.0
    %1831 = vmatmul.mubr.f32.gmra.mxu0 %v1759
    %v1832 = vpop.f32.mrf.mxu0
    %v1833 = vadd.f32 %v1753, %v1832
    %v1834 = vpop.f32.mrf.mxu0
    %1835 = vdwg.mxu0
    %v1836 = vlaneseq
    %v1837 = vshrl.u32 %v1836, 7
    %v1838 = vsub.s32 0, %v1837
    %v1839 = vrot.slane %v1828, %v1838
    %v1840 = vlaneseq
    %v1841 = vshrl.u32 %v1840, 7
    %v1842 = vsub.s32 0, %v1841
    %v1843 = vrot.slane %v1833, %v1842
    %v1844 = vlaneseq
    %v1845 = vshrl.u32 %v1844, 7
    %v1846 = vsub.s32 1, %v1845
    %v1847 = vrot.slane %v1828, %v1846
    %v1848 = vlaneseq
    %v1849 = vshrl.u32 %v1848, 7
    %v1850 = vsub.s32 1, %v1849
    %v1851 = vrot.slane %v1833, %v1850
    %v1852 = vlaneseq
    %v1853 = vshrl.u32 %v1852, 7
    %v1854 = vsub.s32 2, %v1853
    %v1855 = vrot.slane %v1828, %v1854
    %v1856 = vlaneseq
    %v1857 = vshrl.u32 %v1856, 7
    %v1858 = vsub.s32 2, %v1857
    %v1859 = vrot.slane %v1833, %v1858
    %v1860 = vlaneseq
    %v1861 = vshrl.u32 %v1860, 7
    %v1862 = vsub.s32 3, %v1861
    %v1863 = vrot.slane %v1828, %v1862
    %v1864 = vlaneseq
    %v1865 = vshrl.u32 %v1864, 7
    %v1866 = vsub.s32 3, %v1865
    %v1867 = vrot.slane %v1833, %v1866
    %v1868 = vlaneseq
    %v1869 = vshrl.u32 %v1868, 7
    %v1870 = vsub.s32 4, %v1869
    %v1871 = vrot.slane %v1828, %v1870
    %v1872 = vlaneseq
    %v1873 = vshrl.u32 %v1872, 7
    %v1874 = vsub.s32 4, %v1873
    %v1875 = vrot.slane %v1833, %v1874
    %v1876 = vlaneseq
    %v1877 = vshrl.u32 %v1876, 7
    %v1878 = vsub.s32 5, %v1877
    %v1879 = vrot.slane %v1828, %v1878
    %v1880 = vlaneseq
    %v1881 = vshrl.u32 %v1880, 7
    %v1882 = vsub.s32 5, %v1881
    %v1883 = vrot.slane %v1833, %v1882
    %v1884 = vlaneseq
    %v1885 = vshrl.u32 %v1884, 7
    %v1886 = vsub.s32 6, %v1885
    %v1887 = vrot.slane %v1828, %v1886
    %v1888 = vlaneseq
    %v1889 = vshrl.u32 %v1888, 7
    %v1890 = vsub.s32 6, %v1889
    %v1891 = vrot.slane %v1833, %v1890
    %v1892 = vlaneseq
    %v1893 = vshrl.u32 %v1892, 7
    %v1894 = vsub.s32 7, %v1893
    %v1895 = vrot.slane %v1828, %v1894
    %v1896 = vlaneseq
    %v1897 = vshrl.u32 %v1896, 7
    %v1898 = vsub.s32 7, %v1897
    %v1899 = vrot.slane %v1833, %v1898
    %v1900 = vadd.f32 %v1742, %v1839
    %v1901 = vadd.f32 %v1743, %v1843
    %v1902 = vadd.f32 %v1742, %v1847
    %v1903 = vadd.f32 %v1743, %v1851
    %v1904 = vadd.f32 %v1742, %v1855
    %v1905 = vadd.f32 %v1743, %v1859
    %v1906 = vadd.f32 %v1742, %v1863
    %v1907 = vadd.f32 %v1743, %v1867
    %v1908 = vadd.f32 %v1742, %v1871
    %v1909 = vadd.f32 %v1743, %v1875
    %v1910 = vadd.f32 %v1742, %v1879
    %v1911 = vadd.f32 %v1743, %v1883
    %v1912 = vadd.f32 %v1742, %v1887
    %v1913 = vadd.f32 %v1743, %v1891
    %v1914 = vadd.f32 %v1742, %v1895
    %v1915 = vadd.f32 %v1743, %v1899
    %v1916 = vld [vmem:[%s9] sm:$0x1]
    %v1917 = vld [vmem:[%s10] sm:$0x1]
    %v1918 = vsel %vm138, %v1900, 0.0
    %1919 = vadd.xlane.f32.xlu0 %v1918
    %v1920 = vpop.xlane.xlu0 %1919
    %v1921 = vsel %vm138, %v1901, 0.0
    %1922 = vadd.xlane.f32.xlu0 %v1921
    %v1923 = vpop.xlane.xlu0 %1922
    %v1924 = vsel %vm138, %v1902, 0.0
    %1925 = vadd.xlane.f32.xlu0 %v1924
    %v1926 = vpop.xlane.xlu0 %1925
    %v1927 = vsel %vm138, %v1903, 0.0
    %1928 = vadd.xlane.f32.xlu0 %v1927
    %v1929 = vpop.xlane.xlu0 %1928
    %v1930 = vsel %vm138, %v1904, 0.0
    %1931 = vadd.xlane.f32.xlu0 %v1930
    %v1932 = vpop.xlane.xlu0 %1931
    %v1933 = vsel %vm138, %v1905, 0.0
    %1934 = vadd.xlane.f32.xlu0 %v1933
    %v1935 = vpop.xlane.xlu0 %1934
    %v1936 = vsel %vm138, %v1906, 0.0
    %1937 = vadd.xlane.f32.xlu0 %v1936
    %v1938 = vpop.xlane.xlu0 %1937
    %v1939 = vsel %vm138, %v1907, 0.0
    %1940 = vadd.xlane.f32.xlu0 %v1939
    %v1941 = vpop.xlane.xlu0 %1940
    %v1942 = vsel %vm138, %v1908, 0.0
    %1943 = vadd.xlane.f32.xlu0 %v1942
    %v1944 = vpop.xlane.xlu0 %1943
    %v1945 = vsel %vm138, %v1909, 0.0
    %1946 = vadd.xlane.f32.xlu0 %v1945
    %v1947 = vpop.xlane.xlu0 %1946
    %v1948 = vsel %vm138, %v1910, 0.0
    %1949 = vadd.xlane.f32.xlu0 %v1948
    %v1950 = vpop.xlane.xlu0 %1949
    %v1951 = vsel %vm138, %v1911, 0.0
    %1952 = vadd.xlane.f32.xlu0 %v1951
    %v1953 = vpop.xlane.xlu0 %1952
    %v1954 = vsel %vm138, %v1912, 0.0
    %1955 = vadd.xlane.f32.xlu0 %v1954
    %v1956 = vpop.xlane.xlu0 %1955
    %v1957 = vsel %vm138, %v1913, 0.0
    %1958 = vadd.xlane.f32.xlu0 %v1957
    %v1959 = vpop.xlane.xlu0 %1958
    %v1960 = vsel %vm138, %v1914, 0.0
    %1961 = vadd.xlane.f32.xlu0 %v1960
    %v1962 = vpop.xlane.xlu0 %1961
    %v1963 = vsel %vm138, %v1915, 0.0
    %1964 = vadd.xlane.f32.xlu0 %v1963
    %v1965 = vpop.xlane.xlu0 %1964
    %v1966 = vmul.f32 %v1920, %v145
    %v1967 = vmul.f32 %v1923, %v145
    %v1968 = vmul.f32 %v1926, %v145
    %v1969 = vmul.f32 %v1929, %v145
    %v1970 = vmul.f32 %v1932, %v145
    %v1971 = vmul.f32 %v1935, %v145
    %v1972 = vmul.f32 %v1938, %v145
    %v1973 = vmul.f32 %v1941, %v145
    %v1974 = vmul.f32 %v1944, %v145
    %v1975 = vmul.f32 %v1947, %v145
    %v1976 = vmul.f32 %v1950, %v145
    %v1977 = vmul.f32 %v1953, %v145
    %v1978 = vmul.f32 %v1956, %v145
    %v1979 = vmul.f32 %v1959, %v145
    %v1980 = vmul.f32 %v1962, %v145
    %v1981 = vmul.f32 %v1965, %v145
    %v1982 = vsub.f32 %v1900, %v1966
    %v1983 = vsub.f32 %v1901, %v1967
    %v1984 = vsub.f32 %v1902, %v1968
    %v1985 = vsub.f32 %v1903, %v1969
    %v1986 = vsub.f32 %v1904, %v1970
    %v1987 = vsub.f32 %v1905, %v1971
    %v1988 = vsub.f32 %v1906, %v1972
    %v1989 = vsub.f32 %v1907, %v1973
    %v1990 = vsub.f32 %v1908, %v1974
    %v1991 = vsub.f32 %v1909, %v1975
    %v1992 = vsub.f32 %v1910, %v1976
    %v1993 = vsub.f32 %v1911, %v1977
    %v1994 = vsub.f32 %v1912, %v1978
    %v1995 = vsub.f32 %v1913, %v1979
    %v1996 = vsub.f32 %v1914, %v1980
    %v1997 = vsub.f32 %v1915, %v1981
    %v1998 = vmul.f32 %v1982, %v1982
    %v1999 = vmul.f32 %v1983, %v1983
    %v2000 = vmul.f32 %v1984, %v1984
    %v2001 = vmul.f32 %v1985, %v1985
    %v2002 = vmul.f32 %v1986, %v1986
    %v2003 = vmul.f32 %v1987, %v1987
    %v2004 = vmul.f32 %v1988, %v1988
    %v2005 = vmul.f32 %v1989, %v1989
    %v2006 = vmul.f32 %v1990, %v1990
    %v2007 = vmul.f32 %v1991, %v1991
    %v2008 = vmul.f32 %v1992, %v1992
    %v2009 = vmul.f32 %v1993, %v1993
    %v2010 = vmul.f32 %v1994, %v1994
    %v2011 = vmul.f32 %v1995, %v1995
    %v2012 = vmul.f32 %v1996, %v1996
    %v2013 = vmul.f32 %v1997, %v1997
    %v2014 = vsel %vm138, %v1998, 0.0
    %2015 = vadd.xlane.f32.xlu0 %v2014
    %v2016 = vpop.xlane.xlu0 %2015
    %v2017 = vsel %vm138, %v1999, 0.0
    %2018 = vadd.xlane.f32.xlu0 %v2017
    %v2019 = vpop.xlane.xlu0 %2018
    %v2020 = vsel %vm138, %v2000, 0.0
    %2021 = vadd.xlane.f32.xlu0 %v2020
    %v2022 = vpop.xlane.xlu0 %2021
    %v2023 = vsel %vm138, %v2001, 0.0
    %2024 = vadd.xlane.f32.xlu0 %v2023
    %v2025 = vpop.xlane.xlu0 %2024
    %v2026 = vsel %vm138, %v2002, 0.0
    %2027 = vadd.xlane.f32.xlu0 %v2026
    %v2028 = vpop.xlane.xlu0 %2027
    %v2029 = vsel %vm138, %v2003, 0.0
    %2030 = vadd.xlane.f32.xlu0 %v2029
    %v2031 = vpop.xlane.xlu0 %2030
    %v2032 = vsel %vm138, %v2004, 0.0
    %2033 = vadd.xlane.f32.xlu0 %v2032
    %v2034 = vpop.xlane.xlu0 %2033
    %v2035 = vsel %vm138, %v2005, 0.0
    %2036 = vadd.xlane.f32.xlu0 %v2035
    %v2037 = vpop.xlane.xlu0 %2036
    %v2038 = vsel %vm138, %v2006, 0.0
    %2039 = vadd.xlane.f32.xlu0 %v2038
    %v2040 = vpop.xlane.xlu0 %2039
    %v2041 = vsel %vm138, %v2007, 0.0
    %2042 = vadd.xlane.f32.xlu0 %v2041
    %v2043 = vpop.xlane.xlu0 %2042
    %v2044 = vsel %vm138, %v2008, 0.0
    %2045 = vadd.xlane.f32.xlu0 %v2044
    %v2046 = vpop.xlane.xlu0 %2045
    %v2047 = vsel %vm138, %v2009, 0.0
    %2048 = vadd.xlane.f32.xlu0 %v2047
    %v2049 = vpop.xlane.xlu0 %2048
    %v2050 = vsel %vm138, %v2010, 0.0
    %2051 = vadd.xlane.f32.xlu0 %v2050
    %v2052 = vpop.xlane.xlu0 %2051
    %v2053 = vsel %vm138, %v2011, 0.0
    %2054 = vadd.xlane.f32.xlu0 %v2053
    %v2055 = vpop.xlane.xlu0 %2054
    %v2056 = vsel %vm138, %v2012, 0.0
    %2057 = vadd.xlane.f32.xlu0 %v2056
    %v2058 = vpop.xlane.xlu0 %2057
    %v2059 = vsel %vm138, %v2013, 0.0
    %2060 = vadd.xlane.f32.xlu0 %v2059
    %v2061 = vpop.xlane.xlu0 %2060
    %v2062 = vmul.f32 %v2016, %v145
    %v2063 = vmul.f32 %v2019, %v145
    %v2064 = vmul.f32 %v2022, %v145
    %v2065 = vmul.f32 %v2025, %v145
    %v2066 = vmul.f32 %v2028, %v145
    %v2067 = vmul.f32 %v2031, %v145
    %v2068 = vmul.f32 %v2034, %v145
    %v2069 = vmul.f32 %v2037, %v145
    %v2070 = vmul.f32 %v2040, %v145
    %v2071 = vmul.f32 %v2043, %v145
    %v2072 = vmul.f32 %v2046, %v145
    %v2073 = vmul.f32 %v2049, %v145
    %v2074 = vmul.f32 %v2052, %v145
    %v2075 = vmul.f32 %v2055, %v145
    %v2076 = vmul.f32 %v2058, %v145
    %v2077 = vmul.f32 %v2061, %v145
    %v2078 = vadd.f32 %v2062, 1e-05
    %v2079 = vadd.f32 %v2063, 1e-05
    %v2080 = vadd.f32 %v2064, 1e-05
    %v2081 = vadd.f32 %v2065, 1e-05
    %v2082 = vadd.f32 %v2066, 1e-05
    %v2083 = vadd.f32 %v2067, 1e-05
    %v2084 = vadd.f32 %v2068, 1e-05
    %v2085 = vadd.f32 %v2069, 1e-05
    %v2086 = vadd.f32 %v2070, 1e-05
    %v2087 = vadd.f32 %v2071, 1e-05
    %v2088 = vadd.f32 %v2072, 1e-05
    %v2089 = vadd.f32 %v2073, 1e-05
    %v2090 = vadd.f32 %v2074, 1e-05
    %v2091 = vadd.f32 %v2075, 1e-05
    %v2092 = vadd.f32 %v2076, 1e-05
    %v2093 = vadd.f32 %v2077, 1e-05
    %v2094 = vrsqrt.pop %v2078
    %v2095 = vrsqrt.pop %v2079
    %v2096 = vrsqrt.pop %v2080
    %v2097 = vrsqrt.pop %v2081
    %v2098 = vrsqrt.pop %v2082
    %v2099 = vrsqrt.pop %v2083
    %v2100 = vrsqrt.pop %v2084
    %v2101 = vrsqrt.pop %v2085
    %v2102 = vrsqrt.pop %v2086
    %v2103 = vrsqrt.pop %v2087
    %v2104 = vrsqrt.pop %v2088
    %v2105 = vrsqrt.pop %v2089
    %v2106 = vrsqrt.pop %v2090
    %v2107 = vrsqrt.pop %v2091
    %v2108 = vrsqrt.pop %v2092
    %v2109 = vrsqrt.pop %v2093
    %v2110 = vmul.f32 %v1982, %v2094
    %v2111 = vmul.f32 %v1983, %v2095
    %v2112 = vmul.f32 %v1984, %v2096
    %v2113 = vmul.f32 %v1985, %v2097
    %v2114 = vmul.f32 %v1986, %v2098
    %v2115 = vmul.f32 %v1987, %v2099
    %v2116 = vmul.f32 %v1988, %v2100
    %v2117 = vmul.f32 %v1989, %v2101
    %v2118 = vmul.f32 %v1990, %v2102
    %v2119 = vmul.f32 %v1991, %v2103
    %v2120 = vmul.f32 %v1992, %v2104
    %v2121 = vmul.f32 %v1993, %v2105
    %v2122 = vmul.f32 %v1994, %v2106
    %v2123 = vmul.f32 %v1995, %v2107
    %v2124 = vmul.f32 %v1996, %v2108
    %v2125 = vmul.f32 %v1997, %v2109
    %v2127 = vlaneseq
    %v2128 = vshrl.u32 %v2127, 7
    %v2129 = vsub.s32 0, %v2128
    %v2130 = vrot.slane %v1916, %v2129
    %v2132 = vmul.f32 %v2110, %v2130
    %v2133 = vmul.f32 %v2111, %v2130
    %v2134 = vmul.f32 %v2112, %v2130
    %v2135 = vmul.f32 %v2113, %v2130
    %v2136 = vmul.f32 %v2114, %v2130
    %v2137 = vmul.f32 %v2115, %v2130
    %v2138 = vmul.f32 %v2116, %v2130
    %v2139 = vmul.f32 %v2117, %v2130
    %v2140 = vmul.f32 %v2118, %v2130
    %v2141 = vmul.f32 %v2119, %v2130
    %v2142 = vmul.f32 %v2120, %v2130
    %v2143 = vmul.f32 %v2121, %v2130
    %v2144 = vmul.f32 %v2122, %v2130
    %v2145 = vmul.f32 %v2123, %v2130
    %v2146 = vmul.f32 %v2124, %v2130
    %v2147 = vmul.f32 %v2125, %v2130
    %v2149 = vlaneseq
    %v2150 = vshrl.u32 %v2149, 7
    %v2151 = vsub.s32 0, %v2150
    %v2152 = vrot.slane %v1917, %v2151
    %v2154 = vadd.f32 %v2132, %v2152
    %v2155 = vadd.f32 %v2133, %v2152
    %v2156 = vadd.f32 %v2134, %v2152
    %v2157 = vadd.f32 %v2135, %v2152
    %v2158 = vadd.f32 %v2136, %v2152
    %v2159 = vadd.f32 %v2137, %v2152
    %v2160 = vadd.f32 %v2138, %v2152
    %v2161 = vadd.f32 %v2139, %v2152
    %v2162 = vadd.f32 %v2140, %v2152
    %v2163 = vadd.f32 %v2141, %v2152
    %v2164 = vadd.f32 %v2142, %v2152
    %v2165 = vadd.f32 %v2143, %v2152
    %v2166 = vadd.f32 %v2144, %v2152
    %v2167 = vadd.f32 %v2145, %v2152
    %v2168 = vadd.f32 %v2146, %v2152
    %v2169 = vadd.f32 %v2147, %v2152
    %v2170 = vld [vmem:[#allocation9] sm:$0xff]
    %v2171 = vld [vmem:[#allocation9 + $0x8] sm:$0xff]
    %v2172 = vld [vmem:[#allocation9 + $0x10] sm:$0xff]
    %v2173 = vld [vmem:[#allocation9 + $0x18] sm:$0xff]
    %v2174 = vld [vmem:[%s12] sm:$0x1]
    %v2176 = vlaneseq
    %v2177 = vshrl.u32 %v2176, 7
    %v2178 = vsub.s32 0, %v2177
    %v2179 = vrot.slane %v2174, %v2178
    %v2182 = vsel %vm138, %v2154, 0
    %v2185 = vsel %vm138, %v2155, 0
    %v2188 = vsel %vm138, %v2156, 0
    %v2191 = vsel %vm138, %v2157, 0
    %v2194 = vsel %vm138, %v2158, 0
    %v2197 = vsel %vm138, %v2159, 0
    %v2200 = vsel %vm138, %v2160, 0
    %v2203 = vsel %vm138, %v2161, 0
    %v2206 = vsel %vm138, %v2162, 0
    %v2209 = vsel %vm138, %v2163, 0
    %v2212 = vsel %vm138, %v2164, 0
    %v2215 = vsel %vm138, %v2165, 0
    %v2218 = vsel %vm138, %v2166, 0
    %v2221 = vsel %vm138, %v2167, 0
    %v2224 = vsel %vm138, %v2168, 0
    %v2227 = vsel %vm138, %v2169, 0
    %2229 = vmatprep.subr.mxu0 0.0
    %2230 = vmatpush1.msra.mxu0 0.0
    %2231 = vmatprep.subr.mxu0 0.0
    %2232 = vmatpush1.msra.mxu0 0.0
    %2233 = vmatprep.subr.mxu0 0.0
    %2234 = vmatpush1.msra.mxu0 0.0
    %2235 = vmatprep.subr.mxu0 0.0
    %2236 = vmatpush1.msra.mxu0 0.0
    %2237 = vmatprep.subr.mxu0 0.0
    %2238 = vmatpush1.msra.mxu0 0.0
    %2239 = vmatprep.subr.mxu0 0.0
    %2240 = vmatpush1.msra.mxu0 0.0
    %2241 = vmatprep.subr.mxu0 0.0
    %2242 = vmatpush1.msra.mxu0 0.0
    %2243 = vmatprep.subr.mxu0 0.0
    %2244 = vmatpush1.msra.mxu0 0.0
    %2245 = vmatprep.subr.mxu0 0.0
    %2246 = vmatpush1.msra.mxu0 0.0
    %2247 = vmatprep.subr.mxu0 0.0
    %2248 = vmatpush1.msra.mxu0 0.0
    %2249 = vmatprep.subr.mxu0 0.0
    %2250 = vmatpush1.msra.mxu0 0.0
    %2251 = vmatprep.subr.mxu0 0.0
    %2252 = vmatpush1.msra.mxu0 0.0
    %2253 = vmatprep.subr.mxu0 0.0
    %2254 = vmatpush1.msra.mxu0 %v2173
    %2255 = vmatprep.subr.mxu0 0.0
    %2256 = vmatpush1.msra.mxu0 %v2172
    %2257 = vmatprep.subr.mxu0 0.0
    %2258 = vmatpush1.msra.mxu0 %v2171
    %2259 = vmatprep.subr.mxu0 0.0
    %2260 = vmatpush1.msra.mxu0 %v2170
    %2261 = vmatprep.subr.mxu0 0.0
    %2262 = vmatpush2.msra.mxu0 0.0
    %2263 = vmatprep.subr.mxu0 0.0
    %2264 = vmatpush2.msra.mxu0 0.0
    %2265 = vmatprep.subr.mxu0 0.0
    %2266 = vmatpush2.msra.mxu0 0.0
    %2267 = vmatprep.subr.mxu0 0.0
    %2268 = vmatpush2.msra.mxu0 0.0
    %2269 = vmatprep.subr.mxu0 0.0
    %2270 = vmatpush2.msra.mxu0 0.0
    %2271 = vmatprep.subr.mxu0 0.0
    %2272 = vmatpush2.msra.mxu0 0.0
    %2273 = vmatprep.subr.mxu0 0.0
    %2274 = vmatpush2.msra.mxu0 0.0
    %2275 = vmatprep.subr.mxu0 0.0
    %2276 = vmatpush2.msra.mxu0 0.0
    %2277 = vmatprep.subr.mxu0 0.0
    %2278 = vmatpush2.msra.mxu0 0.0
    %2279 = vmatprep.subr.mxu0 0.0
    %2280 = vmatpush2.msra.mxu0 0.0
    %2281 = vmatprep.subr.mxu0 0.0
    %2282 = vmatpush2.msra.mxu0 0.0
    %2283 = vmatprep.subr.mxu0 0.0
    %2284 = vmatpush2.msra.mxu0 0.0
    %2285 = vmatprep.subr.mxu0 0.0
    %2286 = vmatpush2.msra.mxu0 0.0
    %2287 = vmatprep.subr.mxu0 0.0
    %2288 = vmatpush2.msra.mxu0 0.0
    %2289 = vmatprep.subr.mxu0 0.0
    %2290 = vmatpush2.msra.mxu0 0.0
    %2291 = vmatprep.subr.mxu0 0.0
    %2292 = vmatpush2.msra.mxu0 0.0
    %2293 = vmatprep.mubr.f32.mxu0 0.0
    %2294 = vmatmul.mubr.f32.gmra.mxu0 %v2182
    %v2295 = vpop.f32.mrf.mxu0
    %v2296 = vadd.f32 %v2179, %v2295
    %v2297 = vpop.f32.mrf.mxu0
    %2298 = vmatprep.mubr.f32.mxu0 0.0
    %2299 = vmatmul.mubr.f32.gmra.mxu0 %v2185
    %v2300 = vpop.f32.mrf.mxu0
    %v2301 = vadd.f32 %v2179, %v2300
    %v2302 = vpop.f32.mrf.mxu0
    %2303 = vmatprep.mubr.f32.mxu0 0.0
    %2304 = vmatmul.mubr.f32.gmra.mxu0 %v2188
    %v2305 = vpop.f32.mrf.mxu0
    %v2306 = vadd.f32 %v2179, %v2305
    %v2307 = vpop.f32.mrf.mxu0
    %2308 = vmatprep.mubr.f32.mxu0 0.0
    %2309 = vmatmul.mubr.f32.gmra.mxu0 %v2191
    %v2310 = vpop.f32.mrf.mxu0
    %v2311 = vadd.f32 %v2179, %v2310
    %v2312 = vpop.f32.mrf.mxu0
    %2313 = vmatprep.mubr.f32.mxu0 0.0
    %2314 = vmatmul.mubr.f32.gmra.mxu0 %v2194
    %v2315 = vpop.f32.mrf.mxu0
    %v2316 = vadd.f32 %v2179, %v2315
    %v2317 = vpop.f32.mrf.mxu0
    %2318 = vmatprep.mubr.f32.mxu0 0.0
    %2319 = vmatmul.mubr.f32.gmra.mxu0 %v2197
    %v2320 = vpop.f32.mrf.mxu0
    %v2321 = vadd.f32 %v2179, %v2320
    %v2322 = vpop.f32.mrf.mxu0
    %2323 = vmatprep.mubr.f32.mxu0 0.0
    %2324 = vmatmul.mubr.f32.gmra.mxu0 %v2200
    %v2325 = vpop.f32.mrf.mxu0
    %v2326 = vadd.f32 %v2179, %v2325
    %v2327 = vpop.f32.mrf.mxu0
    %2328 = vmatprep.mubr.f32.mxu0 0.0
    %2329 = vmatmul.mubr.f32.gmra.mxu0 %v2203
    %v2330 = vpop.f32.mrf.mxu0
    %v2331 = vadd.f32 %v2179, %v2330
    %v2332 = vpop.f32.mrf.mxu0
    %2333 = vmatprep.mubr.f32.mxu0 0.0
    %2334 = vmatmul.mubr.f32.gmra.mxu0 %v2206
    %v2335 = vpop.f32.mrf.mxu0
    %v2336 = vadd.f32 %v2179, %v2335
    %v2337 = vpop.f32.mrf.mxu0
    %2338 = vmatprep.mubr.f32.mxu0 0.0
    %2339 = vmatmul.mubr.f32.gmra.mxu0 %v2209
    %v2340 = vpop.f32.mrf.mxu0
    %v2341 = vadd.f32 %v2179, %v2340
    %v2342 = vpop.f32.mrf.mxu0
    %2343 = vmatprep.mubr.f32.mxu0 0.0
    %2344 = vmatmul.mubr.f32.gmra.mxu0 %v2212
    %v2345 = vpop.f32.mrf.mxu0
    %v2346 = vadd.f32 %v2179, %v2345
    %v2347 = vpop.f32.mrf.mxu0
    %2348 = vmatprep.mubr.f32.mxu0 0.0
    %2349 = vmatmul.mubr.f32.gmra.mxu0 %v2215
    %v2350 = vpop.f32.mrf.mxu0
    %v2351 = vadd.f32 %v2179, %v2350
    %v2352 = vpop.f32.mrf.mxu0
    %2353 = vmatprep.mubr.f32.mxu0 0.0
    %2354 = vmatmul.mubr.f32.gmra.mxu0 %v2218
    %v2355 = vpop.f32.mrf.mxu0
    %v2356 = vadd.f32 %v2179, %v2355
    %v2357 = vpop.f32.mrf.mxu0
    %2358 = vmatprep.mubr.f32.mxu0 0.0
    %2359 = vmatmul.mubr.f32.gmra.mxu0 %v2221
    %v2360 = vpop.f32.mrf.mxu0
    %v2361 = vadd.f32 %v2179, %v2360
    %v2362 = vpop.f32.mrf.mxu0
    %2363 = vmatprep.mubr.f32.mxu0 0.0
    %2364 = vmatmul.mubr.f32.gmra.mxu0 %v2224
    %v2365 = vpop.f32.mrf.mxu0
    %v2366 = vadd.f32 %v2179, %v2365
    %v2367 = vpop.f32.mrf.mxu0
    %2368 = vmatprep.mubr.f32.mxu0 0.0
    %2369 = vmatmul.mubr.f32.gmra.mxu0 %v2227
    %v2370 = vpop.f32.mrf.mxu0
    %v2371 = vadd.f32 %v2179, %v2370
    %v2372 = vpop.f32.mrf.mxu0
    %2373 = vdwg.mxu0
    %v2374 = vmul.f32 %v2296, 0.5
    %v2375 = vmul.f32 %v2301, 0.5
    %v2376 = vmul.f32 %v2306, 0.5
    %v2377 = vmul.f32 %v2311, 0.5
    %v2378 = vmul.f32 %v2316, 0.5
    %v2379 = vmul.f32 %v2321, 0.5
    %v2380 = vmul.f32 %v2326, 0.5
    %v2381 = vmul.f32 %v2331, 0.5
    %v2382 = vmul.f32 %v2336, 0.5
    %v2383 = vmul.f32 %v2341, 0.5
    %v2384 = vmul.f32 %v2346, 0.5
    %v2385 = vmul.f32 %v2351, 0.5
    %v2386 = vmul.f32 %v2356, 0.5
    %v2387 = vmul.f32 %v2361, 0.5
    %v2388 = vmul.f32 %v2366, 0.5
    %v2389 = vmul.f32 %v2371, 0.5
    %v2390 = vmul.f32 %v2296, 0.70710677
    %v2391 = vmul.f32 %v2301, 0.70710677
    %v2392 = vmul.f32 %v2306, 0.70710677
    %v2393 = vmul.f32 %v2311, 0.70710677
    %v2394 = vmul.f32 %v2316, 0.70710677
    %v2395 = vmul.f32 %v2321, 0.70710677
    %v2396 = vmul.f32 %v2326, 0.70710677
    %v2397 = vmul.f32 %v2331, 0.70710677
    %v2398 = vmul.f32 %v2336, 0.70710677
    %v2399 = vmul.f32 %v2341, 0.70710677
    %v2400 = vmul.f32 %v2346, 0.70710677
    %v2401 = vmul.f32 %v2351, 0.70710677
    %v2402 = vmul.f32 %v2356, 0.70710677
    %v2403 = vmul.f32 %v2361, 0.70710677
    %v2404 = vmul.f32 %v2366, 0.70710677
    %v2405 = vmul.f32 %v2371, 0.70710677
    %v2406 = verf.f32.pop %v2390
    %v2407 = verf.f32.pop %v2391
    %v2408 = verf.f32.pop %v2392
    %v2409 = verf.f32.pop %v2393
    %v2410 = verf.f32.pop %v2394
    %v2411 = verf.f32.pop %v2395
    %v2412 = verf.f32.pop %v2396
    %v2413 = verf.f32.pop %v2397
    %v2414 = verf.f32.pop %v2398
    %v2415 = verf.f32.pop %v2399
    %v2416 = verf.f32.pop %v2400
    %v2417 = verf.f32.pop %v2401
    %v2418 = verf.f32.pop %v2402
    %v2419 = verf.f32.pop %v2403
    %v2420 = verf.f32.pop %v2404
    %v2421 = verf.f32.pop %v2405
    %v2422 = vadd.f32 %v2406, 1.0
    %v2423 = vadd.f32 %v2407, 1.0
    %v2424 = vadd.f32 %v2408, 1.0
    %v2425 = vadd.f32 %v2409, 1.0
    %v2426 = vadd.f32 %v2410, 1.0
    %v2427 = vadd.f32 %v2411, 1.0
    %v2428 = vadd.f32 %v2412, 1.0
    %v2429 = vadd.f32 %v2413, 1.0
    %v2430 = vadd.f32 %v2414, 1.0
    %v2431 = vadd.f32 %v2415, 1.0
    %v2432 = vadd.f32 %v2416, 1.0
    %v2433 = vadd.f32 %v2417, 1.0
    %v2434 = vadd.f32 %v2418, 1.0
    %v2435 = vadd.f32 %v2419, 1.0
    %v2436 = vadd.f32 %v2420, 1.0
    %v2437 = vadd.f32 %v2421, 1.0
    %v2438 = vmul.f32 %v2374, %v2422
    %v2439 = vmul.f32 %v2375, %v2423
    %v2440 = vmul.f32 %v2376, %v2424
    %v2441 = vmul.f32 %v2377, %v2425
    %v2442 = vmul.f32 %v2378, %v2426
    %v2443 = vmul.f32 %v2379, %v2427
    %v2444 = vmul.f32 %v2380, %v2428
    %v2445 = vmul.f32 %v2381, %v2429
    %v2446 = vmul.f32 %v2382, %v2430
    %v2447 = vmul.f32 %v2383, %v2431
    %v2448 = vmul.f32 %v2384, %v2432
    %v2449 = vmul.f32 %v2385, %v2433
    %v2450 = vmul.f32 %v2386, %v2434
    %v2451 = vmul.f32 %v2387, %v2435
    %v2452 = vmul.f32 %v2388, %v2436
    %v2453 = vmul.f32 %v2389, %v2437
    %v2454 = vld [vmem:[#allocation10] sm:$0xff]
    %v2455 = vld [vmem:[#allocation10 + $0x8] sm:$0xff]
    %v2456 = vld [vmem:[#allocation10 + $0x10] sm:$0xff]
    %v2457 = vld [vmem:[#allocation10 + $0x18] sm:$0xff]
    %v2458 = vld [vmem:[%s14] sm:$0x1]
    %v2460 = vlaneseq
    %v2461 = vshrl.u32 %v2460, 7
    %v2462 = vsub.s32 0, %v2461
    %v2463 = vrot.slane %v2458, %v2462
    %v2466 = vsel %vm138, %v2438, 0
    %v2469 = vsel %vm138, %v2439, 0
    %v2472 = vsel %vm138, %v2440, 0
    %v2475 = vsel %vm138, %v2441, 0
    %v2478 = vsel %vm138, %v2442, 0
    %v2481 = vsel %vm138, %v2443, 0
    %v2484 = vsel %vm138, %v2444, 0
    %v2487 = vsel %vm138, %v2445, 0
    %v2490 = vsel %vm138, %v2446, 0
    %v2493 = vsel %vm138, %v2447, 0
    %v2496 = vsel %vm138, %v2448, 0
    %v2499 = vsel %vm138, %v2449, 0
    %v2502 = vsel %vm138, %v2450, 0
    %v2505 = vsel %vm138, %v2451, 0
    %v2508 = vsel %vm138, %v2452, 0
    %v2511 = vsel %vm138, %v2453, 0
    %2513 = vmatprep.subr.mxu0 0.0
    %2514 = vmatpush1.msra.mxu0 0.0
    %2515 = vmatprep.subr.mxu0 0.0
    %2516 = vmatpush1.msra.mxu0 0.0
    %2517 = vmatprep.subr.mxu0 0.0
    %2518 = vmatpush1.msra.mxu0 0.0
    %2519 = vmatprep.subr.mxu0 0.0
    %2520 = vmatpush1.msra.mxu0 0.0
    %2521 = vmatprep.subr.mxu0 0.0
    %2522 = vmatpush1.msra.mxu0 0.0
    %2523 = vmatprep.subr.mxu0 0.0
    %2524 = vmatpush1.msra.mxu0 0.0
    %2525 = vmatprep.subr.mxu0 0.0
    %2526 = vmatpush1.msra.mxu0 0.0
    %2527 = vmatprep.subr.mxu0 0.0
    %2528 = vmatpush1.msra.mxu0 0.0
    %2529 = vmatprep.subr.mxu0 0.0
    %2530 = vmatpush1.msra.mxu0 0.0
    %2531 = vmatprep.subr.mxu0 0.0
    %2532 = vmatpush1.msra.mxu0 0.0
    %2533 = vmatprep.subr.mxu0 0.0
    %2534 = vmatpush1.msra.mxu0 0.0
    %2535 = vmatprep.subr.mxu0 0.0
    %2536 = vmatpush1.msra.mxu0 0.0
    %2537 = vmatprep.subr.mxu0 0.0
    %2538 = vmatpush1.msra.mxu0 %v2457
    %2539 = vmatprep.subr.mxu0 0.0
    %2540 = vmatpush1.msra.mxu0 %v2456
    %2541 = vmatprep.subr.mxu0 0.0
    %2542 = vmatpush1.msra.mxu0 %v2455
    %2543 = vmatprep.subr.mxu0 0.0
    %2544 = vmatpush1.msra.mxu0 %v2454
    %2545 = vmatprep.subr.mxu0 0.0
    %2546 = vmatpush2.msra.mxu0 0.0
    %2547 = vmatprep.subr.mxu0 0.0
    %2548 = vmatpush2.msra.mxu0 0.0
    %2549 = vmatprep.subr.mxu0 0.0
    %2550 = vmatpush2.msra.mxu0 0.0
    %2551 = vmatprep.subr.mxu0 0.0
    %2552 = vmatpush2.msra.mxu0 0.0
    %2553 = vmatprep.subr.mxu0 0.0
    %2554 = vmatpush2.msra.mxu0 0.0
    %2555 = vmatprep.subr.mxu0 0.0
    %2556 = vmatpush2.msra.mxu0 0.0
    %2557 = vmatprep.subr.mxu0 0.0
    %2558 = vmatpush2.msra.mxu0 0.0
    %2559 = vmatprep.subr.mxu0 0.0
    %2560 = vmatpush2.msra.mxu0 0.0
    %2561 = vmatprep.subr.mxu0 0.0
    %2562 = vmatpush2.msra.mxu0 0.0
    %2563 = vmatprep.subr.mxu0 0.0
    %2564 = vmatpush2.msra.mxu0 0.0
    %2565 = vmatprep.subr.mxu0 0.0
    %2566 = vmatpush2.msra.mxu0 0.0
    %2567 = vmatprep.subr.mxu0 0.0
    %2568 = vmatpush2.msra.mxu0 0.0
    %2569 = vmatprep.subr.mxu0 0.0
    %2570 = vmatpush2.msra.mxu0 0.0
    %2571 = vmatprep.subr.mxu0 0.0
    %2572 = vmatpush2.msra.mxu0 0.0
    %2573 = vmatprep.subr.mxu0 0.0
    %2574 = vmatpush2.msra.mxu0 0.0
    %2575 = vmatprep.subr.mxu0 0.0
    %2576 = vmatpush2.msra.mxu0 0.0
    %2577 = vmatprep.mubr.f32.mxu0 0.0
    %2578 = vmatmul.mubr.f32.gmra.mxu0 %v2466
    %v2579 = vpop.f32.mrf.mxu0
    %v2580 = vadd.f32 %v2463, %v2579
    %v2581 = vpop.f32.mrf.mxu0
    %2582 = vmatprep.mubr.f32.mxu0 0.0
    %2583 = vmatmul.mubr.f32.gmra.mxu0 %v2469
    %v2584 = vpop.f32.mrf.mxu0
    %v2585 = vadd.f32 %v2463, %v2584
    %v2586 = vpop.f32.mrf.mxu0
    %2587 = vmatprep.mubr.f32.mxu0 0.0
    %2588 = vmatmul.mubr.f32.gmra.mxu0 %v2472
    %v2589 = vpop.f32.mrf.mxu0
    %v2590 = vadd.f32 %v2463, %v2589
    %v2591 = vpop.f32.mrf.mxu0
    %2592 = vmatprep.mubr.f32.mxu0 0.0
    %2593 = vmatmul.mubr.f32.gmra.mxu0 %v2475
    %v2594 = vpop.f32.mrf.mxu0
    %v2595 = vadd.f32 %v2463, %v2594
    %v2596 = vpop.f32.mrf.mxu0
    %2597 = vmatprep.mubr.f32.mxu0 0.0
    %2598 = vmatmul.mubr.f32.gmra.mxu0 %v2478
    %v2599 = vpop.f32.mrf.mxu0
    %v2600 = vadd.f32 %v2463, %v2599
    %v2601 = vpop.f32.mrf.mxu0
    %2602 = vmatprep.mubr.f32.mxu0 0.0
    %2603 = vmatmul.mubr.f32.gmra.mxu0 %v2481
    %v2604 = vpop.f32.mrf.mxu0
    %v2605 = vadd.f32 %v2463, %v2604
    %v2606 = vpop.f32.mrf.mxu0
    %2607 = vmatprep.mubr.f32.mxu0 0.0
    %2608 = vmatmul.mubr.f32.gmra.mxu0 %v2484
    %v2609 = vpop.f32.mrf.mxu0
    %v2610 = vadd.f32 %v2463, %v2609
    %v2611 = vpop.f32.mrf.mxu0
    %2612 = vmatprep.mubr.f32.mxu0 0.0
    %2613 = vmatmul.mubr.f32.gmra.mxu0 %v2487
    %v2614 = vpop.f32.mrf.mxu0
    %v2615 = vadd.f32 %v2463, %v2614
    %v2616 = vpop.f32.mrf.mxu0
    %2617 = vmatprep.mubr.f32.mxu0 0.0
    %2618 = vmatmul.mubr.f32.gmra.mxu0 %v2490
    %v2619 = vpop.f32.mrf.mxu0
    %v2620 = vadd.f32 %v2463, %v2619
    %v2621 = vpop.f32.mrf.mxu0
    %2622 = vmatprep.mubr.f32.mxu0 0.0
    %2623 = vmatmul.mubr.f32.gmra.mxu0 %v2493
    %v2624 = vpop.f32.mrf.mxu0
    %v2625 = vadd.f32 %v2463, %v2624
    %v2626 = vpop.f32.mrf.mxu0
    %2627 = vmatprep.mubr.f32.mxu0 0.0
    %2628 = vmatmul.mubr.f32.gmra.mxu0 %v2496
    %v2629 = vpop.f32.mrf.mxu0
    %v2630 = vadd.f32 %v2463, %v2629
    %v2631 = vpop.f32.mrf.mxu0
    %2632 = vmatprep.mubr.f32.mxu0 0.0
    %2633 = vmatmul.mubr.f32.gmra.mxu0 %v2499
    %v2634 = vpop.f32.mrf.mxu0
    %v2635 = vadd.f32 %v2463, %v2634
    %v2636 = vpop.f32.mrf.mxu0
    %2637 = vmatprep.mubr.f32.mxu0 0.0
    %2638 = vmatmul.mubr.f32.gmra.mxu0 %v2502
    %v2639 = vpop.f32.mrf.mxu0
    %v2640 = vadd.f32 %v2463, %v2639
    %v2641 = vpop.f32.mrf.mxu0
    %2642 = vmatprep.mubr.f32.mxu0 0.0
    %2643 = vmatmul.mubr.f32.gmra.mxu0 %v2505
    %v2644 = vpop.f32.mrf.mxu0
    %v2645 = vadd.f32 %v2463, %v2644
    %v2646 = vpop.f32.mrf.mxu0
    %2647 = vmatprep.mubr.f32.mxu0 0.0
    %2648 = vmatmul.mubr.f32.gmra.mxu0 %v2508
    %v2649 = vpop.f32.mrf.mxu0
    %v2650 = vadd.f32 %v2463, %v2649
    %v2651 = vpop.f32.mrf.mxu0
    %2652 = vmatprep.mubr.f32.mxu0 0.0
    %2653 = vmatmul.mubr.f32.gmra.mxu0 %v2511
    %v2654 = vpop.f32.mrf.mxu0
    %v2655 = vadd.f32 %v2463, %v2654
    %v2656 = vpop.f32.mrf.mxu0
    %2657 = vdwg.mxu0
    %2660 = vrot.lane.b32.xlu0 %v2590, 32
    %v2661 = vpop.permute.xlu0 %2660
    %2662 = vrot.lane.b32.xlu0 %v2595, 32
    %v2663 = vpop.permute.xlu0 %2662
    %2668 = vrot.lane.b32.xlu0 %v2600, 64
    %v2669 = vpop.permute.xlu0 %2668
    %2670 = vrot.lane.b32.xlu0 %v2605, 64
    %v2671 = vpop.permute.xlu0 %2670
    %2676 = vrot.lane.b32.xlu0 %v2610, 96
    %v2677 = vpop.permute.xlu0 %2676
    %2678 = vrot.lane.b32.xlu0 %v2615, 96
    %v2679 = vpop.permute.xlu0 %2678
    %2684 = vrot.lane.b32.xlu0 %v2630, 32
    %v2685 = vpop.permute.xlu0 %2684
    %2686 = vrot.lane.b32.xlu0 %v2635, 32
    %v2687 = vpop.permute.xlu0 %2686
    %2692 = vrot.lane.b32.xlu0 %v2640, 64
    %v2693 = vpop.permute.xlu0 %2692
    %2694 = vrot.lane.b32.xlu0 %v2645, 64
    %v2695 = vpop.permute.xlu0 %2694
    %2700 = vrot.lane.b32.xlu0 %v2650, 96
    %v2701 = vpop.permute.xlu0 %2700
    %2702 = vrot.lane.b32.xlu0 %v2655, 96
    %v2703 = vpop.permute.xlu0 %2702
    %v2706 = vsel %vm138, %v2580, %v2661
    %v2707 = vsel %vm138, %v2585, %v2663
    %vm2708 = vcmask 523264
    %v2709 = vsel %vm2708, %v2706, %v2669
    %v2710 = vsel %vm2708, %v2707, %v2671
    %vm2711 = vcmask 785408
    %v2712 = vsel %vm2711, %v2709, %v2677
    %v2713 = vsel %vm2711, %v2710, %v2679
    %v2714 = vsel %vm138, %v2620, %v2685
    %v2715 = vsel %vm138, %v2625, %v2687
    %v2716 = vsel %vm2708, %v2714, %v2693
    %v2717 = vsel %vm2708, %v2715, %v2695
    %v2718 = vsel %vm2711, %v2716, %v2701
    %v2719 = vsel %vm2711, %v2717, %v2703
    %2720 = vst [vmem:[%s15] sm:$0xff] %v2712
    %2721 = vst [vmem:[%s15 + $0x8] sm:$0xff] %v2718
    %2722 = vst [vmem:[%s15 + $0x10] sm:$0xff] %v2713
    %2723 = vst [vmem:[%s15 + $0x18] sm:$0xff] %v2719
    // Predicated region
    $region86: #{decoder_block_with_expansion.1} parent=1 // pred_check
      _
    $region87: #{decoder_block_with_expansion.1} parent=1 // pred_check_branch
      %2725 = sbr.rel (0) target = $region89
    $region88: #{decoder_block_with_expansion.1} parent=1 // pred_region
      _
    $region89: #{decoder_block_with_expansion.1} parent=1 // pred_fallthru
      _
    // Predicated region
    $region90: #{decoder_block_with_expansion.1} parent=1 // pred_check
      _
    $region91: #{decoder_block_with_expansion.1} parent=1 // pred_check_branch
      %2727 = sbr.rel (0) target = $region93
    $region92: #{decoder_block_with_expansion.1} parent=1 // pred_region
      _
    $region93: #{decoder_block_with_expansion.1} parent=1 // pred_fallthru
      _
    // Predicated region
    $region94: #{decoder_block_with_expansion.1} parent=1 // pred_check
      _
    $region95: #{decoder_block_with_expansion.1} parent=1 // pred_check_branch
      %2729 = sbr.rel (0) target = $region97
    $region96: #{decoder_block_with_expansion.1} parent=1 // pred_region
      _
    $region97: #{decoder_block_with_expansion.1} parent=1 // pred_fallthru
      _
    // Predicated region
    $region98: #{decoder_block_with_expansion.1} parent=1 // pred_check
      _
    $region99: #{decoder_block_with_expansion.1} parent=1 // pred_check_branch
      %2731 = sbr.rel (0) target = $region101
    $region100: #{decoder_block_with_expansion.1} parent=1 // pred_region
      _
    $region101: #{decoder_block_with_expansion.1} parent=1 // pred_fallthru
      _
    %2732 = vsyncpa [#allocation3], 1
    %2733 = vsyncpa [#allocation5], 1
    %2734 = vsyncpa [#allocation8], 1
    %2735 = vsyncpa [#allocation11], 1

</llo_original>
